<compile_context>
chip_gen: v5e
topology: v5e:2x2
jax: 0.10.0
libtpu: 0.0.40
codegen_flags: <defaults>
</compile_context>

<pallas_src>
import functools

import jax
import jax.numpy as jnp
from jax.experimental import pallas as pl
from jax.experimental.pallas import tpu as pltpu

LEAKY_SLOPE = 0.1
BN_EPS = 1e-5          # PyTorch BatchNorm2d default
LANES = 128
ROW_ALIGN = 8          # per-image frame stride alignment (f32 sublane tile)


def _round_up(v, m):
    return (v + m - 1) // m * m


# ----------------------------------------------------------------------------
# Fused whole-network kernel
# ----------------------------------------------------------------------------
def _tcr_fused_kernel(p1_ref, w1_ref, w2t_ref, w3t_ref, pp_ref, msk_ref, o_ref,
                      a1_ref, a2_ref, *,
                      m_rows, tail_rows, w1s, cnt1, cnt2, cnt3):
    """Whole tcrNet forward on VMEM-resident data.

    Frame layout: activations are (rows, 128) tiles; within one image, row
    q encodes spatial position (i, j) = (q // w1s, q % w1s), lanes are
    zero-padded channels, and images are stacked with a fixed aligned stride.
    A 3x3 tap (di, dj) is then a single row shift (di*w1s + dj) of the WHOLE
    batched frame, so each conv layer is one matmul for the whole batch.
    """

    def lrelu(v):
        return jnp.where(v > 0, v, LEAKY_SLOPE * v)

    def bn_act(z, gamma, beta, count):
        # Training-mode BN, single pass (sum / sum-of-squares).  Invalid /
        # padded rows of `z` are exactly zero and `count` is the number of
        # valid rows, so the statistics are exact.
        s = jnp.sum(z, axis=0, keepdims=True)
        ss = jnp.sum(z * z, axis=0, keepdims=True)
        inv_n = 1.0 / float(count)
        mean = s * inv_n
        var = ss * inv_n - mean * mean
        scale = gamma * jax.lax.rsqrt(var + BN_EPS)      # gamma folded into scale
        shift = beta - mean * scale
        return lrelu(z * scale + shift)

    def conv3x3(src_ref, wt_ref):
        # 3x3 VALID conv for the whole batch as ONE matmul: the 9 taps are
        # row-shifted windows of the batched frame, lane-concatenated so the
        # contraction runs over 9*128 inputs.
        taps = [src_ref[pl.ds(di * w1s + dj, m_rows), :].astype(jnp.bfloat16)
                for di in range(3) for dj in range(3)]
        lhs = jnp.concatenate(taps, axis=1)                  # (M, 9*128) bf16
        return jnp.dot(lhs, wt_ref[...], preferred_element_type=jnp.float32)

    # Zero the a2 tail rows [M, R) once so the batched layer-3 tap windows read
    # finite data (those rows only feed masked/invalid output rows).
    a2_ref[pl.ds(m_rows, tail_rows), :] = jnp.zeros((tail_rows, LANES), jnp.float32)

    # ---- layer 1: 20x40 conv as im2col matmul (+ BN + LeakyReLU) -------------
    # Padded patch rows are all-zero and there is no pre-BN bias, so they
    # contribute nothing to the (unmasked) batch statistics.
    y1 = jnp.dot(p1_ref[...], w1_ref[...], preferred_element_type=jnp.float32)
    y1 = bn_act(y1, pp_ref[0:1, :], pp_ref[1:2, :], cnt1)
    a1_ref[...] = y1                                          # all R rows written

    # ---- layer 2: 3x3 conv (+ BN + LeakyReLU), one matmul for the batch ------
    z2 = conv3x3(a1_ref, w2t_ref) * msk_ref[:, 0:1]
    y2 = bn_act(z2, pp_ref[2:3, :], pp_ref[3:4, :], cnt2)
    a2_ref[pl.ds(0, m_rows), :] = y2

    # ---- layer 3: 3x3 conv (+ BN + LeakyReLU) --------------------------------
    z3 = conv3x3(a2_ref, w3t_ref) * msk_ref[:, 1:2]
    y3 = bn_act(z3, pp_ref[4:5, :], pp_ref[5:6, :], cnt3)

    # ---- layer 4: 1x1 conv, Cout=1 -> VPU epilogue, single-lane column store --
    w4 = pp_ref[6:7, :]                  # (1, 128); zero beyond the real channels
    b4 = pp_ref[7:8, 0:1]                # (1, 1)
    o_ref[...] = jnp.sum(y3 * w4, axis=1, keepdims=True) + b4   # (M, 1)


# ----------------------------------------------------------------------------
# Host-side glue (all tiny, all under jit)
# ----------------------------------------------------------------------------
def _im2col_l1(x_nchw, kh, kw):
    """Gather-free im2col: (n, h1*w1, c*kh*kw), rows ordered (i, j) per image."""
    n, c, h, w = x_nchw.shape
    ho, wo = h - kh + 1, w - kw + 1
    rows = jnp.stack([x_nchw[:, :, a:a + ho, :] for a in range(kh)], axis=2)   # (n,c,kh,ho,w)
    cols = jnp.stack([rows[..., b:b + wo] for b in range(kw)], axis=3)         # (n,c,kh,kw,ho,wo)
    p = jnp.transpose(cols, (0, 4, 5, 1, 2, 3))                                # (n,ho,wo,c,kh,kw)
    return p.reshape(n, ho * wo, c * kh * kw), ho, wo


def _tap_stack(w):
    """(Cout,Cin,3,3) -> (9*128, 128) bf16, matching the kernel's lane-concatenated taps."""
    co, ci, kh, kw = w.shape
    t = jnp.transpose(w, (2, 3, 1, 0)).reshape(kh * kw, ci, co)          # (9, ci, co)
    t = jnp.pad(t, ((0, 0), (0, LANES - ci), (0, LANES - co)))
    return t.reshape(kh * kw * LANES, LANES).astype(jnp.bfloat16)


def _pack_vec_params(p, c1, c2, c3):
    """Rows: g1, be1, g2, be2, g3, be3, w4, b4 (zero padded to 128 lanes).

    Gammas are zero-padded so padded channels normalize to exactly 0."""
    def row(v, c):
        return jnp.pad(v.reshape(-1).astype(jnp.float32), (0, LANES - c))[None, :]
    return jnp.concatenate([
        row(p['g1'], c1), row(p['be1'], c1),
        row(p['g2'], c2), row(p['be2'], c2),
        row(p['g3'], c3), row(p['be3'], c3),
        row(p['w4'], c3),
        row(p['b4'], 1),
    ], axis=0)                                                            # (8, 128)


def _full_spec(shape):
    zeros = (0,) * len(shape)
    return pl.BlockSpec(shape, lambda i, _z=zeros: _z)


def tcr_net_forward(x, p):
    n, c_in, h, w = x.shape
    co1, ci1, kh1, kw1 = p['w1'].shape
    co2, co3 = p['w2'].shape[0], p['w3'].shape[0]
    assert c_in == ci1
    assert p['w2'].shape[2:] == (3, 3) and p['w3'].shape[2:] == (3, 3)
    assert max(co1, co2, co3) <= LANES

    pimg, h1, w1s = _im2col_l1(x, kh1, kw1)                # (n, h1*w1, 800)
    s1 = h1 * w1s
    h2, w2v = h1 - 2, w1s - 2
    h3, w3v = h2 - 2, w2v - 2
    assert h3 >= 1 and w3v >= 1, "input too small for tcrNet's receptive field"

    S = _round_up(s1, ROW_ALIGN)                           # aligned per-image frame stride
    M = n * S                                              # batched frame rows
    SH = 2 * w1s + 2                                       # max 3x3 tap row shift
    R = _round_up(M + SH, 16)                              # scratch rows (tap windows stay in-bounds)

    K1 = ci1 * kh1 * kw1
    K1p = _round_up(K1, LANES)

    # im2col patches: per-image blocks padded to S rows, whole thing padded to R rows.
    patches = jnp.pad(pimg, ((0, 0), (0, S - s1), (0, K1p - K1)))
    patches = patches.reshape(M, K1p)
    patches = jnp.pad(patches, ((0, R - M), (0, 0))).astype(jnp.bfloat16)

    w1m = jnp.pad(p['w1'].reshape(co1, K1).T,
                  ((0, K1p - K1), (0, LANES - co1))).astype(jnp.bfloat16)
    w2t = _tap_stack(p['w2'])
    w3t = _tap_stack(p['w3'])
    pp = _pack_vec_params(p, co1, co2, co3)

    # Host-built valid-row masks for layers 2/3 (column 0 / column 1), tiled per image.
    q = jnp.arange(S)
    i_idx, j_idx = q // w1s, q % w1s
    m2 = ((i_idx < h2) & (j_idx < w2v)).astype(jnp.float32)
    m3 = ((i_idx < h3) & (j_idx < w3v)).astype(jnp.float32)
    msk = jnp.tile(jnp.stack([m2, m3], axis=1), (n, 1))    # (M, 2)

    kernel = functools.partial(
        _tcr_fused_kernel,
        m_rows=M, tail_rows=R - M, w1s=w1s,
        cnt1=n * s1, cnt2=n * h2 * w2v, cnt3=n * h3 * w3v)

    flops = 2 * R * K1p * LANES + 2 * (2 * M * 9 * LANES * LANES) + 16 * M * LANES
    bytes_accessed = (patches.size * 2 + w1m.size * 2 + w2t.size * 2 +
                      w3t.size * 2 + pp.size * 4 + msk.size * 4 + M * 4)

    out = pl.pallas_call(
        kernel,
        out_shape=jax.ShapeDtypeStruct((M, 1), jnp.float32),
        grid=(1,),
        in_specs=[_full_spec(patches.shape),
                  _full_spec(w1m.shape),
                  _full_spec(w2t.shape),
                  _full_spec(w3t.shape),
                  _full_spec(pp.shape),
                  _full_spec(msk.shape)],
        out_specs=_full_spec((M, 1)),
        scratch_shapes=[pltpu.VMEM((R, LANES), jnp.float32),   # layer-1 frame
                        pltpu.VMEM((R, LANES), jnp.float32)],  # layer-2 frame
        compiler_params=pltpu.CompilerParams(
            dimension_semantics=("arbitrary",)),
        cost_estimate=pl.CostEstimate(
            flops=int(flops),
            transcendentals=3 * LANES,
            bytes_accessed=int(bytes_accessed)),
    )(patches, w1m, w2t, w3t, pp, msk)

    # (M, 1) column -> NCHW (n, 1, h3, w3); trivial reshape / crop.
    frame = out[:, 0].reshape(n, S)
    y = frame[:, :h3 * w1s].reshape(n, h3, w1s)[:, :, :w3v]
    return y[:, None, :, :]


# ----------------------------------------------------------------------------
# Deterministic parameter init (shapes from tcrNet.__init__)
# ----------------------------------------------------------------------------
def init_params(key):
    conv_shapes = {
        1: (70, 1, 20, 40),
        2: (50, 70, 3, 3),
        3: (30, 50, 3, 3),
        4: (1, 30, 1, 1),
    }
    keys = jax.random.split(key, 16)
    p = {}
    ki = 0
    for li, (co, ci, kh, kw) in conv_shapes.items():
        fan_in = ci * kh * kw
        p[f'w{li}'] = (jax.random.normal(keys[ki], (co, ci, kh, kw), jnp.float32)
                       * (fan_in ** -0.5))
        p[f'b{li}'] = jax.random.normal(keys[ki + 1], (co,), jnp.float32) * 0.01
        ki += 2
    for li in (1, 2, 3):
        co = conv_shapes[li][0]
        p[f'g{li}'] = 1.0 + 0.1 * jax.random.normal(keys[ki], (co,), jnp.float32)
        p[f'be{li}'] = 0.1 * jax.random.normal(keys[ki + 1], (co,), jnp.float32)
        ki += 2
    return p


# ----------------------------------------------------------------------------
# Pure-JAX reference (same semantics, incl. the redundant pre-BN conv biases)
# ----------------------------------------------------------------------------
def reference_forward(x, p):
    def conv(y, wgt, b):
        y = jax.lax.conv_general_dilated(
            y, wgt, window_strides=(1, 1), padding='VALID',
            dimension_numbers=('NCHW', 'OIHW', 'NCHW'))
        return y + b[None, :, None, None]

    def bn(y, g, be):
        mean = jnp.mean(y, axis=(0, 2, 3), keepdims=True)
        var = jnp.mean((y - mean) ** 2, axis=(0, 2, 3), keepdims=True)
        yhat = (y - mean) * jax.lax.rsqrt(var + BN_EPS)
        return yhat * g[None, :, None, None] + be[None, :, None, None]

    lrelu = lambda y: jnp.where(y > 0, y, LEAKY_SLOPE * y)

    y = lrelu(bn(conv(x, p['w1'], p['b1']), p['g1'], p['be1']))
    y = lrelu(bn(conv(y, p['w2'], p['b2']), p['g2'], p['be2']))
    y = lrelu(bn(conv(y, p['w3'], p['b3']), p['g3'], p['be3']))
    return conv(y, p['w4'], p['b4'])


if __name__ == "__main__":
    key = jax.random.PRNGKey(0)
    k_x, k_p = jax.random.split(key)

    # input: N=2, C=1, H=26, W=46 (small, but large enough for the 20x40 + two
    # 3x3 VALID convs).  Output: (2, 1, 3, 3)
    x = jax.random.normal(k_x, (2, 1, 26, 46), jnp.float32)
    params = init_params(k_p)

    out = jax.jit(tcr_net_forward)(x, params)
    out = jax.block_until_ready(out)

    ref = jax.jit(reference_forward)(x, params)
    ref = jax.block_until_ready(ref)

    assert out.shape == (2, 1, 3, 3), out.shape
    # Tolerance reflects single-pass bf16 MXU matmuls (f32 accumulation) in the
    # kernel vs. the XLA f32 conv reference; observed error is ~1e-3-level.
    max_err = float(jnp.max(jnp.abs(out - ref)))
    assert jnp.allclose(out, ref, atol=2e-2, rtol=2e-2), max_err

    print("KERNEL_OK")
</pallas_src>

<mosaic_0001>
module attributes {stable_mosaic.version = 11 : i64} {
  func.func @_tcr_fused_kernel(%arg0: i32, %arg1: memref<128x896xbf16, #tpu.memory_space<vmem>>, %arg2: memref<896x128xbf16, #tpu.memory_space<vmem>>, %arg3: memref<1152x128xbf16, #tpu.memory_space<vmem>>, %arg4: memref<1152x128xbf16, #tpu.memory_space<vmem>>, %arg5: memref<8x128xf32, #tpu.memory_space<vmem>>, %arg6: memref<112x2xf32, #tpu.memory_space<vmem>>, %arg7: memref<112x1xf32, #tpu.memory_space<vmem>>, %arg8: memref<128x128xf32, #tpu.memory_space<vmem>>, %arg9: memref<128x128xf32, #tpu.memory_space<vmem>>) attributes {dimension_semantics = [#tpu.dimension_semantics<arbitrary>], iteration_bounds = array<i64: 1>, scalar_prefetch = 0 : i64, scratch_operands = 2 : i64, tpu.core_type = #tpu.core_type<tc>, window_params = [{pipeline_mode = #tpu.pipeline_mode<synchronous>, transform_indices = @transform_0, window_bounds = array<i64: 128, 896>}, {pipeline_mode = #tpu.pipeline_mode<synchronous>, transform_indices = @transform_1, window_bounds = array<i64: 896, 128>}, {pipeline_mode = #tpu.pipeline_mode<synchronous>, transform_indices = @transform_2, window_bounds = array<i64: 1152, 128>}, {pipeline_mode = #tpu.pipeline_mode<synchronous>, transform_indices = @transform_3, window_bounds = array<i64: 1152, 128>}, {pipeline_mode = #tpu.pipeline_mode<synchronous>, transform_indices = @transform_4, window_bounds = array<i64: 8, 128>}, {pipeline_mode = #tpu.pipeline_mode<synchronous>, transform_indices = @transform_5, window_bounds = array<i64: 112, 2>}, {pipeline_mode = #tpu.pipeline_mode<synchronous>, transform_indices = @transform_6, window_bounds = array<i64: 112, 1>}]} {
    %cst = arith.constant 0.000000e+00 : f32
    %0 = vector.broadcast %cst : f32 to vector<16x128xf32>
    %c112 = arith.constant 112 : index
    %c0 = arith.constant 0 : index
    %1 = vector.load %arg9[%c112, %c0] : memref<128x128xf32, #tpu.memory_space<vmem>>, vector<16x128xf32>
    tpu.vector_store %arg9[%c112, %c0], %0 {strides = array<i32>} : memref<128x128xf32, #tpu.memory_space<vmem>>, vector<16x128xf32>,
    %c0_0 = arith.constant 0 : index
    %c0_1 = arith.constant 0 : index
    %2 = vector.load %arg1[%c0_0, %c0_1] : memref<128x896xbf16, #tpu.memory_space<vmem>>, vector<128x896xbf16>
    %c0_2 = arith.constant 0 : index
    %c0_3 = arith.constant 0 : index
    %3 = vector.load %arg2[%c0_2, %c0_3] : memref<896x128xbf16, #tpu.memory_space<vmem>>, vector<896x128xbf16>
    %cst_4 = arith.constant dense<0.000000e+00> : vector<128x128xf32>
    %4 = tpu.matmul %2, %3, %cst_4 {dimension_numbers = #tpu.dot_dimension_numbers<[1], [0], [0], [1], [0, 0, 1, 1], [], []>} : vector<128x896xbf16>, vector<896x128xbf16>, vector<128x128xf32> -> vector<128x128xf32>
    %c0_5 = arith.constant 0 : index
    %c0_6 = arith.constant 0 : index
    %5 = vector.load %arg5[%c0_5, %c0_6] : memref<8x128xf32, #tpu.memory_space<vmem>>, vector<1x128xf32>
    %c1 = arith.constant 1 : index
    %c0_7 = arith.constant 0 : index
    %6 = vector.load %arg5[%c1, %c0_7] : memref<8x128xf32, #tpu.memory_space<vmem>>, vector<1x128xf32>
    %cst_8 = arith.constant dense<0.000000e+00> : vector<128xf32>
    %7 = vector.multi_reduction <add>, %4, %cst_8 [0] : vector<128x128xf32> to vector<128xf32>
    %8 = vector.shape_cast %7 : vector<128xf32> to vector<1x128xf32>
    %9 = arith.mulf %4, %4 : vector<128x128xf32>
    %cst_9 = arith.constant dense<0.000000e+00> : vector<128xf32>
    %10 = vector.multi_reduction <add>, %9, %cst_9 [0] : vector<128x128xf32> to vector<128xf32>
    %11 = vector.shape_cast %10 : vector<128xf32> to vector<1x128xf32>
    %cst_10 = arith.constant 0.0102040814 : f32
    %12 = vector.broadcast %cst_10 : f32 to vector<1x128xf32>
    %13 = arith.mulf %8, %12 : vector<1x128xf32>
    %cst_11 = arith.constant 0.0102040814 : f32
    %14 = vector.broadcast %cst_11 : f32 to vector<1x128xf32>
    %15 = arith.mulf %11, %14 : vector<1x128xf32>
    %16 = arith.mulf %13, %13 : vector<1x128xf32>
    %17 = arith.subf %15, %16 : vector<1x128xf32>
    %cst_12 = arith.constant 9.99999974E-6 : f32
    %18 = vector.broadcast %cst_12 : f32 to vector<1x128xf32>
    %19 = arith.addf %17, %18 : vector<1x128xf32>
    %20 = math.rsqrt %19 : vector<1x128xf32>
    %21 = arith.mulf %5, %20 : vector<1x128xf32>
    %22 = arith.mulf %13, %21 : vector<1x128xf32>
    %23 = arith.subf %6, %22 : vector<1x128xf32>
    %24 = vector.broadcast %21 : vector<1x128xf32> to vector<128x128xf32>
    %25 = arith.mulf %4, %24 : vector<128x128xf32>
    %26 = vector.broadcast %23 : vector<1x128xf32> to vector<128x128xf32>
    %27 = arith.addf %25, %26 : vector<128x128xf32>
    %cst_13 = arith.constant 0.000000e+00 : f32
    %28 = vector.broadcast %cst_13 : f32 to vector<128x128xf32>
    %29 = arith.cmpf ogt, %27, %28 : vector<128x128xf32>
    %cst_14 = arith.constant 1.000000e-01 : f32
    %30 = vector.broadcast %cst_14 : f32 to vector<128x128xf32>
    %31 = arith.mulf %30, %27 : vector<128x128xf32>
    %32 = arith.select %29, %27, %31 : vector<128x128xi1>, vector<128x128xf32>
    %c0_15 = arith.constant 0 : index
    %c0_16 = arith.constant 0 : index
    %33 = vector.load %arg8[%c0_15, %c0_16] : memref<128x128xf32, #tpu.memory_space<vmem>>, vector<128x128xf32>
    tpu.vector_store %arg8[%c0_15, %c0_16], %32 {strides = array<i32>} : memref<128x128xf32, #tpu.memory_space<vmem>>, vector<128x128xf32>,
    %c0_17 = arith.constant 0 : index
    %c0_18 = arith.constant 0 : index
    %34 = vector.load %arg8[%c0_17, %c0_18] : memref<128x128xf32, #tpu.memory_space<vmem>>, vector<112x128xf32>
    %35 = arith.truncf %34 : vector<112x128xf32> to vector<112x128xbf16>
    %c1_19 = arith.constant 1 : index
    %c0_20 = arith.constant 0 : index
    %36 = vector.load %arg8[%c1_19, %c0_20] : memref<128x128xf32, #tpu.memory_space<vmem>>, vector<112x128xf32>
    %37 = arith.truncf %36 : vector<112x128xf32> to vector<112x128xbf16>
    %c2 = arith.constant 2 : index
    %c0_21 = arith.constant 0 : index
    %38 = vector.load %arg8[%c2, %c0_21] : memref<128x128xf32, #tpu.memory_space<vmem>>, vector<112x128xf32>
    %39 = arith.truncf %38 : vector<112x128xf32> to vector<112x128xbf16>
    %c7 = arith.constant 7 : index
    %c0_22 = arith.constant 0 : index
    %40 = vector.load %arg8[%c7, %c0_22] : memref<128x128xf32, #tpu.memory_space<vmem>>, vector<112x128xf32>
    %41 = arith.truncf %40 : vector<112x128xf32> to vector<112x128xbf16>
    %c8 = arith.constant 8 : index
    %c0_23 = arith.constant 0 : index
    %42 = vector.load %arg8[%c8, %c0_23] : memref<128x128xf32, #tpu.memory_space<vmem>>, vector<112x128xf32>
    %43 = arith.truncf %42 : vector<112x128xf32> to vector<112x128xbf16>
    %c9 = arith.constant 9 : index
    %c0_24 = arith.constant 0 : index
    %44 = vector.load %arg8[%c9, %c0_24] : memref<128x128xf32, #tpu.memory_space<vmem>>, vector<112x128xf32>
    %45 = arith.truncf %44 : vector<112x128xf32> to vector<112x128xbf16>
    %c14 = arith.constant 14 : index
    %c0_25 = arith.constant 0 : index
    %46 = vector.load %arg8[%c14, %c0_25] : memref<128x128xf32, #tpu.memory_space<vmem>>, vector<112x128xf32>
    %47 = arith.truncf %46 : vector<112x128xf32> to vector<112x128xbf16>
    %c15 = arith.constant 15 : index
    %c0_26 = arith.constant 0 : index
    %48 = vector.load %arg8[%c15, %c0_26] : memref<128x128xf32, #tpu.memory_space<vmem>>, vector<112x128xf32>
    %49 = arith.truncf %48 : vector<112x128xf32> to vector<112x128xbf16>
    %c16 = arith.constant 16 : index
    %c0_27 = arith.constant 0 : index
    %50 = vector.load %arg8[%c16, %c0_27] : memref<128x128xf32, #tpu.memory_space<vmem>>, vector<112x128xf32>
    %51 = arith.truncf %50 : vector<112x128xf32> to vector<112x128xbf16>
    %52 = tpu.concatenate %35, %37, %39, %41, %43, %45, %47, %49, %51 in 1 : vector<112x128xbf16>, vector<112x128xbf16>, vector<112x128xbf16>, vector<112x128xbf16>, vector<112x128xbf16>, vector<112x128xbf16>, vector<112x128xbf16>, vector<112x128xbf16>, vector<112x128xbf16> -> vector<112x1152xbf16>
    %c0_28 = arith.constant 0 : index
    %c0_29 = arith.constant 0 : index
    %53 = vector.load %arg3[%c0_28, %c0_29] : memref<1152x128xbf16, #tpu.memory_space<vmem>>, vector<1152x128xbf16>
    %cst_30 = arith.constant dense<0.000000e+00> : vector<112x128xf32>
    %54 = tpu.matmul %52, %53, %cst_30 {dimension_numbers = #tpu.dot_dimension_numbers<[1], [0], [0], [1], [0, 0, 1, 1], [], []>} : vector<112x1152xbf16>, vector<1152x128xbf16>, vector<112x128xf32> -> vector<112x128xf32>
    %c0_31 = arith.constant 0 : index
    %c0_32 = arith.constant 0 : index
    %55 = vector.load %arg6[%c0_31, %c0_32] : memref<112x2xf32, #tpu.memory_space<vmem>>, vector<112x1xf32>
    %56 = vector.broadcast %55 : vector<112x1xf32> to vector<112x128xf32>
    %57 = arith.mulf %54, %56 : vector<112x128xf32>
    %c2_33 = arith.constant 2 : index
    %c0_34 = arith.constant 0 : index
    %58 = vector.load %arg5[%c2_33, %c0_34] : memref<8x128xf32, #tpu.memory_space<vmem>>, vector<1x128xf32>
    %c3 = arith.constant 3 : index
    %c0_35 = arith.constant 0 : index
    %59 = vector.load %arg5[%c3, %c0_35] : memref<8x128xf32, #tpu.memory_space<vmem>>, vector<1x128xf32>
    %cst_36 = arith.constant dense<0.000000e+00> : vector<128xf32>
    %60 = vector.multi_reduction <add>, %57, %cst_36 [0] : vector<112x128xf32> to vector<128xf32>
    %61 = vector.shape_cast %60 : vector<128xf32> to vector<1x128xf32>
    %62 = arith.mulf %57, %57 : vector<112x128xf32>
    %cst_37 = arith.constant dense<0.000000e+00> : vector<128xf32>
    %63 = vector.multi_reduction <add>, %62, %cst_37 [0] : vector<112x128xf32> to vector<128xf32>
    %64 = vector.shape_cast %63 : vector<128xf32> to vector<1x128xf32>
    %cst_38 = arith.constant 2.000000e-02 : f32
    %65 = vector.broadcast %cst_38 : f32 to vector<1x128xf32>
    %66 = arith.mulf %61, %65 : vector<1x128xf32>
    %cst_39 = arith.constant 2.000000e-02 : f32
    %67 = vector.broadcast %cst_39 : f32 to vector<1x128xf32>
    %68 = arith.mulf %64, %67 : vector<1x128xf32>
    %69 = arith.mulf %66, %66 : vector<1x128xf32>
    %70 = arith.subf %68, %69 : vector<1x128xf32>
    %cst_40 = arith.constant 9.99999974E-6 : f32
    %71 = vector.broadcast %cst_40 : f32 to vector<1x128xf32>
    %72 = arith.addf %70, %71 : vector<1x128xf32>
    %73 = math.rsqrt %72 : vector<1x128xf32>
    %74 = arith.mulf %58, %73 : vector<1x128xf32>
    %75 = arith.mulf %66, %74 : vector<1x128xf32>
    %76 = arith.subf %59, %75 : vector<1x128xf32>
    %77 = vector.broadcast %74 : vector<1x128xf32> to vector<112x128xf32>
    %78 = arith.mulf %57, %77 : vector<112x128xf32>
    %79 = vector.broadcast %76 : vector<1x128xf32> to vector<112x128xf32>
    %80 = arith.addf %78, %79 : vector<112x128xf32>
    %cst_41 = arith.constant 0.000000e+00 : f32
    %81 = vector.broadcast %cst_41 : f32 to vector<112x128xf32>
    %82 = arith.cmpf ogt, %80, %81 : vector<112x128xf32>
    %cst_42 = arith.constant 1.000000e-01 : f32
    %83 = vector.broadcast %cst_42 : f32 to vector<112x128xf32>
    %84 = arith.mulf %83, %80 : vector<112x128xf32>
    %85 = arith.select %82, %80, %84 : vector<112x128xi1>, vector<112x128xf32>
    %c0_43 = arith.constant 0 : index
    %c0_44 = arith.constant 0 : index
    %86 = vector.load %arg9[%c0_43, %c0_44] : memref<128x128xf32, #tpu.memory_space<vmem>>, vector<112x128xf32>
    tpu.vector_store %arg9[%c0_43, %c0_44], %85 {strides = array<i32>} : memref<128x128xf32, #tpu.memory_space<vmem>>, vector<112x128xf32>,
    %c0_45 = arith.constant 0 : index
    %c0_46 = arith.constant 0 : index
    %87 = vector.load %arg9[%c0_45, %c0_46] : memref<128x128xf32, #tpu.memory_space<vmem>>, vector<112x128xf32>
    %88 = arith.truncf %87 : vector<112x128xf32> to vector<112x128xbf16>
    %c1_47 = arith.constant 1 : index
    %c0_48 = arith.constant 0 : index
    %89 = vector.load %arg9[%c1_47, %c0_48] : memref<128x128xf32, #tpu.memory_space<vmem>>, vector<112x128xf32>
    %90 = arith.truncf %89 : vector<112x128xf32> to vector<112x128xbf16>
    %c2_49 = arith.constant 2 : index
    %c0_50 = arith.constant 0 : index
    %91 = vector.load %arg9[%c2_49, %c0_50] : memref<128x128xf32, #tpu.memory_space<vmem>>, vector<112x128xf32>
    %92 = arith.truncf %91 : vector<112x128xf32> to vector<112x128xbf16>
    %c7_51 = arith.constant 7 : index
    %c0_52 = arith.constant 0 : index
    %93 = vector.load %arg9[%c7_51, %c0_52] : memref<128x128xf32, #tpu.memory_space<vmem>>, vector<112x128xf32>
    %94 = arith.truncf %93 : vector<112x128xf32> to vector<112x128xbf16>
    %c8_53 = arith.constant 8 : index
    %c0_54 = arith.constant 0 : index
    %95 = vector.load %arg9[%c8_53, %c0_54] : memref<128x128xf32, #tpu.memory_space<vmem>>, vector<112x128xf32>
    %96 = arith.truncf %95 : vector<112x128xf32> to vector<112x128xbf16>
    %c9_55 = arith.constant 9 : index
    %c0_56 = arith.constant 0 : index
    %97 = vector.load %arg9[%c9_55, %c0_56] : memref<128x128xf32, #tpu.memory_space<vmem>>, vector<112x128xf32>
    %98 = arith.truncf %97 : vector<112x128xf32> to vector<112x128xbf16>
    %c14_57 = arith.constant 14 : index
    %c0_58 = arith.constant 0 : index
    %99 = vector.load %arg9[%c14_57, %c0_58] : memref<128x128xf32, #tpu.memory_space<vmem>>, vector<112x128xf32>
    %100 = arith.truncf %99 : vector<112x128xf32> to vector<112x128xbf16>
    %c15_59 = arith.constant 15 : index
    %c0_60 = arith.constant 0 : index
    %101 = vector.load %arg9[%c15_59, %c0_60] : memref<128x128xf32, #tpu.memory_space<vmem>>, vector<112x128xf32>
    %102 = arith.truncf %101 : vector<112x128xf32> to vector<112x128xbf16>
    %c16_61 = arith.constant 16 : index
    %c0_62 = arith.constant 0 : index
    %103 = vector.load %arg9[%c16_61, %c0_62] : memref<128x128xf32, #tpu.memory_space<vmem>>, vector<112x128xf32>
    %104 = arith.truncf %103 : vector<112x128xf32> to vector<112x128xbf16>
    %105 = tpu.concatenate %88, %90, %92, %94, %96, %98, %100, %102, %104 in 1 : vector<112x128xbf16>, vector<112x128xbf16>, vector<112x128xbf16>, vector<112x128xbf16>, vector<112x128xbf16>, vector<112x128xbf16>, vector<112x128xbf16>, vector<112x128xbf16>, vector<112x128xbf16> -> vector<112x1152xbf16>
    %c0_63 = arith.constant 0 : index
    %c0_64 = arith.constant 0 : index
    %106 = vector.load %arg4[%c0_63, %c0_64] : memref<1152x128xbf16, #tpu.memory_space<vmem>>, vector<1152x128xbf16>
    %cst_65 = arith.constant dense<0.000000e+00> : vector<112x128xf32>
    %107 = tpu.matmul %105, %106, %cst_65 {dimension_numbers = #tpu.dot_dimension_numbers<[1], [0], [0], [1], [0, 0, 1, 1], [], []>} : vector<112x1152xbf16>, vector<1152x128xbf16>, vector<112x128xf32> -> vector<112x128xf32>
    %c0_66 = arith.constant 0 : index
    %c1_67 = arith.constant 1 : index
    %108 = vector.load %arg6[%c0_66, %c1_67] : memref<112x2xf32, #tpu.memory_space<vmem>>, vector<112x1xf32>
    %109 = vector.broadcast %108 : vector<112x1xf32> to vector<112x128xf32>
    %110 = arith.mulf %107, %109 : vector<112x128xf32>
    %c4 = arith.constant 4 : index
    %c0_68 = arith.constant 0 : index
    %111 = vector.load %arg5[%c4, %c0_68] : memref<8x128xf32, #tpu.memory_space<vmem>>, vector<1x128xf32>
    %c5 = arith.constant 5 : index
    %c0_69 = arith.constant 0 : index
    %112 = vector.load %arg5[%c5, %c0_69] : memref<8x128xf32, #tpu.memory_space<vmem>>, vector<1x128xf32>
    %cst_70 = arith.constant dense<0.000000e+00> : vector<128xf32>
    %113 = vector.multi_reduction <add>, %110, %cst_70 [0] : vector<112x128xf32> to vector<128xf32>
    %114 = vector.shape_cast %113 : vector<128xf32> to vector<1x128xf32>
    %115 = arith.mulf %110, %110 : vector<112x128xf32>
    %cst_71 = arith.constant dense<0.000000e+00> : vector<128xf32>
    %116 = vector.multi_reduction <add>, %115, %cst_71 [0] : vector<112x128xf32> to vector<128xf32>
    %117 = vector.shape_cast %116 : vector<128xf32> to vector<1x128xf32>
    %cst_72 = arith.constant 0.055555556 : f32
    %118 = vector.broadcast %cst_72 : f32 to vector<1x128xf32>
    %119 = arith.mulf %114, %118 : vector<1x128xf32>
    %cst_73 = arith.constant 0.055555556 : f32
    %120 = vector.broadcast %cst_73 : f32 to vector<1x128xf32>
    %121 = arith.mulf %117, %120 : vector<1x128xf32>
    %122 = arith.mulf %119, %119 : vector<1x128xf32>
    %123 = arith.subf %121, %122 : vector<1x128xf32>
    %cst_74 = arith.constant 9.99999974E-6 : f32
    %124 = vector.broadcast %cst_74 : f32 to vector<1x128xf32>
    %125 = arith.addf %123, %124 : vector<1x128xf32>
    %126 = math.rsqrt %125 : vector<1x128xf32>
    %127 = arith.mulf %111, %126 : vector<1x128xf32>
    %128 = arith.mulf %119, %127 : vector<1x128xf32>
    %129 = arith.subf %112, %128 : vector<1x128xf32>
    %130 = vector.broadcast %127 : vector<1x128xf32> to vector<112x128xf32>
    %131 = arith.mulf %110, %130 : vector<112x128xf32>
    %132 = vector.broadcast %129 : vector<1x128xf32> to vector<112x128xf32>
    %133 = arith.addf %131, %132 : vector<112x128xf32>
    %cst_75 = arith.constant 0.000000e+00 : f32
    %134 = vector.broadcast %cst_75 : f32 to vector<112x128xf32>
    %135 = arith.cmpf ogt, %133, %134 : vector<112x128xf32>
    %cst_76 = arith.constant 1.000000e-01 : f32
    %136 = vector.broadcast %cst_76 : f32 to vector<112x128xf32>
    %137 = arith.mulf %136, %133 : vector<112x128xf32>
    %138 = arith.select %135, %133, %137 : vector<112x128xi1>, vector<112x128xf32>
    %c6 = arith.constant 6 : index
    %c0_77 = arith.constant 0 : index
    %139 = vector.load %arg5[%c6, %c0_77] : memref<8x128xf32, #tpu.memory_space<vmem>>, vector<1x128xf32>
    %c7_78 = arith.constant 7 : index
    %c0_79 = arith.constant 0 : index
    %140 = vector.load %arg5[%c7_78, %c0_79] : memref<8x128xf32, #tpu.memory_space<vmem>>, vector<1x1xf32>
    %141 = vector.broadcast %139 : vector<1x128xf32> to vector<112x128xf32>
    %142 = arith.mulf %138, %141 : vector<112x128xf32>
    %cst_80 = arith.constant dense<0.000000e+00> : vector<112xf32>
    %143 = vector.multi_reduction <add>, %142, %cst_80 [1] : vector<112x128xf32> to vector<112xf32>
    %144 = vector.shape_cast %143 : vector<112xf32> to vector<112x1xf32>
    %145 = vector.broadcast %140 : vector<1x1xf32> to vector<112x1xf32>
    %146 = arith.addf %144, %145 : vector<112x1xf32>
    %c0_81 = arith.constant 0 : index
    %c0_82 = arith.constant 0 : index
    %147 = vector.load %arg7[%c0_81, %c0_82] : memref<112x1xf32, #tpu.memory_space<vmem>>, vector<112x1xf32>
    tpu.vector_store %arg7[%c0_81, %c0_82], %146 {strides = array<i32>} : memref<112x1xf32, #tpu.memory_space<vmem>>, vector<112x1xf32>,
    return
  }
  func.func @transform_0(%arg0: i32) -> (i32, i32) {
    %c0_i32 = arith.constant 0 : i32
    %c0_i32_0 = arith.constant 0 : i32
    %c0_i32_1 = arith.constant 0 : i32
    return %c0_i32, %c0_i32_0 : i32, i32
  }
  func.func @transform_1(%arg0: i32) -> (i32, i32) {
    %c0_i32 = arith.constant 0 : i32
    %c0_i32_0 = arith.constant 0 : i32
    %c0_i32_1 = arith.constant 0 : i32
    return %c0_i32, %c0_i32_0 : i32, i32
  }
  func.func @transform_2(%arg0: i32) -> (i32, i32) {
    %c0_i32 = arith.constant 0 : i32
    %c0_i32_0 = arith.constant 0 : i32
    %c0_i32_1 = arith.constant 0 : i32
    return %c0_i32, %c0_i32_0 : i32, i32
  }
  func.func @transform_3(%arg0: i32) -> (i32, i32) {
    %c0_i32 = arith.constant 0 : i32
    %c0_i32_0 = arith.constant 0 : i32
    %c0_i32_1 = arith.constant 0 : i32
    return %c0_i32, %c0_i32_0 : i32, i32
  }
  func.func @transform_4(%arg0: i32) -> (i32, i32) {
    %c0_i32 = arith.constant 0 : i32
    %c0_i32_0 = arith.constant 0 : i32
    %c0_i32_1 = arith.constant 0 : i32
    return %c0_i32, %c0_i32_0 : i32, i32
  }
  func.func @transform_5(%arg0: i32) -> (i32, i32) {
    %c0_i32 = arith.constant 0 : i32
    %c0_i32_0 = arith.constant 0 : i32
    %c0_i32_1 = arith.constant 0 : i32
    return %c0_i32, %c0_i32_0 : i32, i32
  }
  func.func @transform_6(%arg0: i32) -> (i32, i32) {
    %c0_i32 = arith.constant 0 : i32
    %c0_i32_0 = arith.constant 0 : i32
    %c0_i32_1 = arith.constant 0 : i32
    return %c0_i32, %c0_i32_0 : i32, i32
  }
}

</mosaic_0001>

<llo_original>
// kernel: squeeze.1
$region0: #{squeeze.1}
  %s0 = inlined_call_operand.vmem [shape: f32[112], index: 0, kind: input, shape index: {}]
  %s1 = inlined_call_operand.vmem [shape: f32[2,56], index: 1, kind: output, shape index: {}]
  $region1: #{squeeze.1} parent=0
    #allocation0 [shape = 'u8[4096]{0}', space=vmem, size = 0x1000, scoped, tag = 'scoped mem for output reshape']
    #allocation1 [shape = 'u8[4096]{0}', space=vmem, size = 0x1000, scoped, tag = 'scoped mem for input reshape']
    %s3 = ssub.s32 2, 1
    %v4 = vld [vmem:[%s0] sm:%s3]
    %5 = vst [vmem:[#allocation1] sm:%s3] %v4
    %v6 = vld [vmem:[#allocation1] sm:$0x1]
    %vm7 = vcmask 457728
    %8 = vst.msk [vmem:[#allocation0] sm:$0x1] %vm7, %v6
    %v9 = vld [vmem:[#allocation1] sm:$0x1]
    %10 = vrot.lane.b32.xlu0 %v9, 72
    %v11 = vpop.permute.xlu0 %10
    %vm12 = vcmask 457728
    %s13 = scalar_lea.vmem [#allocation0], 1
    %14 = vst.msk [vmem:[%s13] sm:$0x1] %vm12, %v11
    %s16 = ssub.s32 4, 1
    %v17 = vld [vmem:[#allocation0] sm:%s16]
    %s19 = ssub.s32 4, 1
    %20 = vst [vmem:[%s1] sm:%s19] %v17

// kernel: tcr_net_forward.1
$region0: #{tcr_net_forward.1}
  #allocation0 [shape = 'u32[]', space=smem, size = 0x4, offset = 0x4, fixed_abs, tag = 'smem constant byte address 0x4 - core index']
  #allocation1 [shape = 'u32[72,128]{1,0:T(1,128)}', space=vmem, size = 0x9000, scoped, tag = 'internal scratch']
  #allocation2 [shape = 'f32[128,128]{1,0:T(8,128)}', space=vmem, size = 0x10000, scoped, tag = 'scratch operand']
  #allocation3 [shape = 'f32[128,128]{1,0:T(8,128)}', space=vmem, size = 0x10000, scoped, tag = 'scratch operand']
  %s0 = inlined_call_operand.vmem [shape: bf16[128,896], index: 0, kind: input, shape index: {}]
  %s1 = inlined_call_operand.vmem [shape: bf16[896,128], index: 1, kind: input, shape index: {}]
  %s2 = inlined_call_operand.vmem [shape: bf16[1152,128], index: 2, kind: input, shape index: {}]
  %s3 = inlined_call_operand.vmem [shape: bf16[1152,128], index: 3, kind: input, shape index: {}]
  %s4 = inlined_call_operand.vmem [shape: f32[8,128], index: 4, kind: input, shape index: {}]
  %s5 = inlined_call_operand.vmem [shape: f32[112,2], index: 5, kind: input, shape index: {}]
  %s6 = inlined_call_operand.vmem [shape: f32[112,1], index: 6, kind: output, shape index: {}]
  %s7 = sld [smem:[#allocation0]]
  $region34: #{tcr_net_forward.1} parent=0
    _
  %s9 = ssub.s32 1, %s7
  %s10 = scalar_select 0, %s9, %s7
  // Predicated region
  $region2: #{tcr_net_forward.1} parent=0 // pred_check
    _
  $region3: #{tcr_net_forward.1} parent=0 // pred_check_branch
    %12 = sbr.rel (0) target = $region5
  $region4: #{tcr_net_forward.1} parent=0 // pred_region
    _
  $region5: #{tcr_net_forward.1} parent=0 // pred_fallthru
    _
  // Predicated region
  $region6: #{tcr_net_forward.1} parent=0 // pred_check
    _
  $region7: #{tcr_net_forward.1} parent=0 // pred_check_branch
    %14 = sbr.rel (0) target = $region9
  $region8: #{tcr_net_forward.1} parent=0 // pred_region
    _
  $region9: #{tcr_net_forward.1} parent=0 // pred_fallthru
    _
  // Predicated region
  $region10: #{tcr_net_forward.1} parent=0 // pred_check
    _
  $region11: #{tcr_net_forward.1} parent=0 // pred_check_branch
    %16 = sbr.rel (0) target = $region13
  $region12: #{tcr_net_forward.1} parent=0 // pred_region
    _
  $region13: #{tcr_net_forward.1} parent=0 // pred_fallthru
    _
  // Predicated region
  $region14: #{tcr_net_forward.1} parent=0 // pred_check
    _
  $region15: #{tcr_net_forward.1} parent=0 // pred_check_branch
    %18 = sbr.rel (0) target = $region17
  $region16: #{tcr_net_forward.1} parent=0 // pred_region
    _
  $region17: #{tcr_net_forward.1} parent=0 // pred_fallthru
    _
  // Predicated region
  $region18: #{tcr_net_forward.1} parent=0 // pred_check
    _
  $region19: #{tcr_net_forward.1} parent=0 // pred_check_branch
    %20 = sbr.rel (0) target = $region21
  $region20: #{tcr_net_forward.1} parent=0 // pred_region
    _
  $region21: #{tcr_net_forward.1} parent=0 // pred_fallthru
    _
  // Predicated region
  $region22: #{tcr_net_forward.1} parent=0 // pred_check
    _
  $region23: #{tcr_net_forward.1} parent=0 // pred_check_branch
    %22 = sbr.rel (0) target = $region25
  $region24: #{tcr_net_forward.1} parent=0 // pred_region
    _
  $region25: #{tcr_net_forward.1} parent=0 // pred_fallthru
    _
  %23 = vst [vmem:[#allocation3 + $0x70] sm:$0xff] 0.0
  %24 = vst [vmem:[#allocation3 + $0x78] sm:$0xff] 0.0
  %v25 = vld [vmem:[%s0] sm:$0xff]
  %v26 = vld [vmem:[%s0 + $0x8] sm:$0xff]
  %v27 = vld [vmem:[%s0 + $0x10] sm:$0xff]
  %v28 = vld [vmem:[%s0 + $0x18] sm:$0xf]
  %v29 = vld [vmem:[%s0 + $0x1c] sm:$0xff]
  %v30 = vld [vmem:[%s0 + $0x24] sm:$0xff]
  %v31 = vld [vmem:[%s0 + $0x2c] sm:$0xff]
  %v32 = vld [vmem:[%s0 + $0x34] sm:$0xf]
  %v33 = vld [vmem:[%s0 + $0x38] sm:$0xff]
  %v34 = vld [vmem:[%s0 + $0x40] sm:$0xff]
  %v35 = vld [vmem:[%s0 + $0x48] sm:$0xff]
  %v36 = vld [vmem:[%s0 + $0x50] sm:$0xf]
  %v37 = vld [vmem:[%s0 + $0x54] sm:$0xff]
  %v38 = vld [vmem:[%s0 + $0x5c] sm:$0xff]
  %v39 = vld [vmem:[%s0 + $0x64] sm:$0xff]
  %v40 = vld [vmem:[%s0 + $0x6c] sm:$0xf]
  %v41 = vld [vmem:[%s0 + $0x70] sm:$0xff]
  %v42 = vld [vmem:[%s0 + $0x78] sm:$0xff]
  %v43 = vld [vmem:[%s0 + $0x80] sm:$0xff]
  %v44 = vld [vmem:[%s0 + $0x88] sm:$0xf]
  %v45 = vld [vmem:[%s0 + $0x8c] sm:$0xff]
  %v46 = vld [vmem:[%s0 + $0x94] sm:$0xff]
  %v47 = vld [vmem:[%s0 + $0x9c] sm:$0xff]
  %v48 = vld [vmem:[%s0 + $0xa4] sm:$0xf]
  %v49 = vld [vmem:[%s0 + $0xa8] sm:$0xff]
  %v50 = vld [vmem:[%s0 + $0xb0] sm:$0xff]
  %v51 = vld [vmem:[%s0 + $0xb8] sm:$0xff]
  %v52 = vld [vmem:[%s0 + $0xc0] sm:$0xf]
  %v53 = vld [vmem:[%s0 + $0xc4] sm:$0xff]
  %v54 = vld [vmem:[%s0 + $0xcc] sm:$0xff]
  %v55 = vld [vmem:[%s0 + $0xd4] sm:$0xff]
  %v56 = vld [vmem:[%s0 + $0xdc] sm:$0xf]
  %v57 = vld [vmem:[%s0 + $0xe0] sm:$0xff]
  %v58 = vld [vmem:[%s0 + $0xe8] sm:$0xff]
  %v59 = vld [vmem:[%s0 + $0xf0] sm:$0xff]
  %v60 = vld [vmem:[%s0 + $0xf8] sm:$0xf]
  %v61 = vld [vmem:[%s0 + $0xfc] sm:$0xff]
  %v62 = vld [vmem:[%s0 + $0x104] sm:$0xff]
  %v63 = vld [vmem:[%s0 + $0x10c] sm:$0xff]
  %v64 = vld [vmem:[%s0 + $0x114] sm:$0xf]
  %v65 = vld [vmem:[%s0 + $0x118] sm:$0xff]
  %v66 = vld [vmem:[%s0 + $0x120] sm:$0xff]
  %v67 = vld [vmem:[%s0 + $0x128] sm:$0xff]
  %v68 = vld [vmem:[%s0 + $0x130] sm:$0xf]
  %v69 = vld [vmem:[%s0 + $0x134] sm:$0xff]
  %v70 = vld [vmem:[%s0 + $0x13c] sm:$0xff]
  %v71 = vld [vmem:[%s0 + $0x144] sm:$0xff]
  %v72 = vld [vmem:[%s0 + $0x14c] sm:$0xf]
  %v73 = vld [vmem:[%s0 + $0x150] sm:$0xff]
  %v74 = vld [vmem:[%s0 + $0x158] sm:$0xff]
  %v75 = vld [vmem:[%s0 + $0x160] sm:$0xff]
  %v76 = vld [vmem:[%s0 + $0x168] sm:$0xf]
  %v77 = vld [vmem:[%s0 + $0x16c] sm:$0xff]
  %v78 = vld [vmem:[%s0 + $0x174] sm:$0xff]
  %v79 = vld [vmem:[%s0 + $0x17c] sm:$0xff]
  %v80 = vld [vmem:[%s0 + $0x184] sm:$0xf]
  %v81 = vld [vmem:[%s0 + $0x188] sm:$0xff]
  %v82 = vld [vmem:[%s0 + $0x190] sm:$0xff]
  %v83 = vld [vmem:[%s0 + $0x198] sm:$0xff]
  %v84 = vld [vmem:[%s0 + $0x1a0] sm:$0xf]
  %v85 = vld [vmem:[%s0 + $0x1a4] sm:$0xff]
  %v86 = vld [vmem:[%s0 + $0x1ac] sm:$0xff]
  %v87 = vld [vmem:[%s0 + $0x1b4] sm:$0xff]
  %v88 = vld [vmem:[%s0 + $0x1bc] sm:$0xf]
  %v89 = vld [vmem:[%s1] sm:$0xf]
  %v90 = vld [vmem:[%s1 + $0x4] sm:$0xf]
  %v91 = vld [vmem:[%s1 + $0x8] sm:$0xf]
  %v92 = vld [vmem:[%s1 + $0xc] sm:$0xf]
  %v93 = vld [vmem:[%s1 + $0x10] sm:$0xf]
  %v94 = vld [vmem:[%s1 + $0x14] sm:$0xf]
  %v95 = vld [vmem:[%s1 + $0x18] sm:$0xf]
  %v96 = vld [vmem:[%s1 + $0x1c] sm:$0xf]
  %v97 = vld [vmem:[%s1 + $0x20] sm:$0xf]
  %v98 = vld [vmem:[%s1 + $0x24] sm:$0xf]
  %v99 = vld [vmem:[%s1 + $0x28] sm:$0xf]
  %v100 = vld [vmem:[%s1 + $0x2c] sm:$0xf]
  %v101 = vld [vmem:[%s1 + $0x30] sm:$0xf]
  %v102 = vld [vmem:[%s1 + $0x34] sm:$0xf]
  %v103 = vld [vmem:[%s1 + $0x38] sm:$0xf]
  %v104 = vld [vmem:[%s1 + $0x3c] sm:$0xf]
  %v105 = vld [vmem:[%s1 + $0x40] sm:$0xf]
  %v106 = vld [vmem:[%s1 + $0x44] sm:$0xf]
  %v107 = vld [vmem:[%s1 + $0x48] sm:$0xf]
  %v108 = vld [vmem:[%s1 + $0x4c] sm:$0xf]
  %v109 = vld [vmem:[%s1 + $0x50] sm:$0xf]
  %v110 = vld [vmem:[%s1 + $0x54] sm:$0xf]
  %v111 = vld [vmem:[%s1 + $0x58] sm:$0xf]
  %v112 = vld [vmem:[%s1 + $0x5c] sm:$0xf]
  %v113 = vld [vmem:[%s1 + $0x60] sm:$0xf]
  %v114 = vld [vmem:[%s1 + $0x64] sm:$0xf]
  %v115 = vld [vmem:[%s1 + $0x68] sm:$0xf]
  %v116 = vld [vmem:[%s1 + $0x6c] sm:$0xf]
  %v117 = vld [vmem:[%s1 + $0x70] sm:$0xf]
  %v118 = vld [vmem:[%s1 + $0x74] sm:$0xf]
  %v119 = vld [vmem:[%s1 + $0x78] sm:$0xf]
  %v120 = vld [vmem:[%s1 + $0x7c] sm:$0xf]
  %v121 = vld [vmem:[%s1 + $0x80] sm:$0xf]
  %v122 = vld [vmem:[%s1 + $0x84] sm:$0xf]
  %v123 = vld [vmem:[%s1 + $0x88] sm:$0xf]
  %v124 = vld [vmem:[%s1 + $0x8c] sm:$0xf]
  %v125 = vld [vmem:[%s1 + $0x90] sm:$0xf]
  %v126 = vld [vmem:[%s1 + $0x94] sm:$0xf]
  %v127 = vld [vmem:[%s1 + $0x98] sm:$0xf]
  %v128 = vld [vmem:[%s1 + $0x9c] sm:$0xf]
  %v129 = vld [vmem:[%s1 + $0xa0] sm:$0xf]
  %v130 = vld [vmem:[%s1 + $0xa4] sm:$0xf]
  %v131 = vld [vmem:[%s1 + $0xa8] sm:$0xf]
  %v132 = vld [vmem:[%s1 + $0xac] sm:$0xf]
  %v133 = vld [vmem:[%s1 + $0xb0] sm:$0xf]
  %v134 = vld [vmem:[%s1 + $0xb4] sm:$0xf]
  %v135 = vld [vmem:[%s1 + $0xb8] sm:$0xf]
  %v136 = vld [vmem:[%s1 + $0xbc] sm:$0xf]
  %v137 = vld [vmem:[%s1 + $0xc0] sm:$0xf]
  %v138 = vld [vmem:[%s1 + $0xc4] sm:$0xf]
  %v139 = vld [vmem:[%s1 + $0xc8] sm:$0xf]
  %v140 = vld [vmem:[%s1 + $0xcc] sm:$0xf]
  %v141 = vld [vmem:[%s1 + $0xd0] sm:$0xf]
  %v142 = vld [vmem:[%s1 + $0xd4] sm:$0xf]
  %v143 = vld [vmem:[%s1 + $0xd8] sm:$0xf]
  %v144 = vld [vmem:[%s1 + $0xdc] sm:$0xf]
  %v145 = vld [vmem:[%s1 + $0xe0] sm:$0xf]
  %v146 = vld [vmem:[%s1 + $0xe4] sm:$0xf]
  %v147 = vld [vmem:[%s1 + $0xe8] sm:$0xf]
  %v148 = vld [vmem:[%s1 + $0xec] sm:$0xf]
  %v149 = vld [vmem:[%s1 + $0xf0] sm:$0xf]
  %v150 = vld [vmem:[%s1 + $0xf4] sm:$0xf]
  %v151 = vld [vmem:[%s1 + $0xf8] sm:$0xf]
  %v152 = vld [vmem:[%s1 + $0xfc] sm:$0xf]
  %v153 = vld [vmem:[%s1 + $0x100] sm:$0xf]
  %v154 = vld [vmem:[%s1 + $0x104] sm:$0xf]
  %v155 = vld [vmem:[%s1 + $0x108] sm:$0xf]
  %v156 = vld [vmem:[%s1 + $0x10c] sm:$0xf]
  %v157 = vld [vmem:[%s1 + $0x110] sm:$0xf]
  %v158 = vld [vmem:[%s1 + $0x114] sm:$0xf]
  %v159 = vld [vmem:[%s1 + $0x118] sm:$0xf]
  %v160 = vld [vmem:[%s1 + $0x11c] sm:$0xf]
  %v161 = vld [vmem:[%s1 + $0x120] sm:$0xf]
  %v162 = vld [vmem:[%s1 + $0x124] sm:$0xf]
  %v163 = vld [vmem:[%s1 + $0x128] sm:$0xf]
  %v164 = vld [vmem:[%s1 + $0x12c] sm:$0xf]
  %v165 = vld [vmem:[%s1 + $0x130] sm:$0xf]
  %v166 = vld [vmem:[%s1 + $0x134] sm:$0xf]
  %v167 = vld [vmem:[%s1 + $0x138] sm:$0xf]
  %v168 = vld [vmem:[%s1 + $0x13c] sm:$0xf]
  %v169 = vld [vmem:[%s1 + $0x140] sm:$0xf]
  %v170 = vld [vmem:[%s1 + $0x144] sm:$0xf]
  %v171 = vld [vmem:[%s1 + $0x148] sm:$0xf]
  %v172 = vld [vmem:[%s1 + $0x14c] sm:$0xf]
  %v173 = vld [vmem:[%s1 + $0x150] sm:$0xf]
  %v174 = vld [vmem:[%s1 + $0x154] sm:$0xf]
  %v175 = vld [vmem:[%s1 + $0x158] sm:$0xf]
  %v176 = vld [vmem:[%s1 + $0x15c] sm:$0xf]
  %v177 = vld [vmem:[%s1 + $0x160] sm:$0xf]
  %v178 = vld [vmem:[%s1 + $0x164] sm:$0xf]
  %v179 = vld [vmem:[%s1 + $0x168] sm:$0xf]
  %v180 = vld [vmem:[%s1 + $0x16c] sm:$0xf]
  %v181 = vld [vmem:[%s1 + $0x170] sm:$0xf]
  %v182 = vld [vmem:[%s1 + $0x174] sm:$0xf]
  %v183 = vld [vmem:[%s1 + $0x178] sm:$0xf]
  %v184 = vld [vmem:[%s1 + $0x17c] sm:$0xf]
  %v185 = vld [vmem:[%s1 + $0x180] sm:$0xf]
  %v186 = vld [vmem:[%s1 + $0x184] sm:$0xf]
  %v187 = vld [vmem:[%s1 + $0x188] sm:$0xf]
  %v188 = vld [vmem:[%s1 + $0x18c] sm:$0xf]
  %v189 = vld [vmem:[%s1 + $0x190] sm:$0xf]
  %v190 = vld [vmem:[%s1 + $0x194] sm:$0xf]
  %v191 = vld [vmem:[%s1 + $0x198] sm:$0xf]
  %v192 = vld [vmem:[%s1 + $0x19c] sm:$0xf]
  %v193 = vld [vmem:[%s1 + $0x1a0] sm:$0xf]
  %v194 = vld [vmem:[%s1 + $0x1a4] sm:$0xf]
  %v195 = vld [vmem:[%s1 + $0x1a8] sm:$0xf]
  %v196 = vld [vmem:[%s1 + $0x1ac] sm:$0xf]
  %v197 = vld [vmem:[%s1 + $0x1b0] sm:$0xf]
  %v198 = vld [vmem:[%s1 + $0x1b4] sm:$0xf]
  %v199 = vld [vmem:[%s1 + $0x1b8] sm:$0xf]
  %v200 = vld [vmem:[%s1 + $0x1bc] sm:$0xf]
  %v265 = vunpack.c.l.b16 %v25
  %v266 = vunpack.c.h.b16 %v25
  %v267 = vunpack.c.l.b16 %v26
  %v268 = vunpack.c.h.b16 %v26
  %v269 = vunpack.c.l.b16 %v27
  %v270 = vunpack.c.h.b16 %v27
  %v271 = vunpack.c.l.b16 %v28
  %v272 = vunpack.c.l.b16 %v29
  %v273 = vunpack.c.h.b16 %v29
  %v274 = vunpack.c.l.b16 %v30
  %v275 = vunpack.c.h.b16 %v30
  %v276 = vunpack.c.l.b16 %v31
  %v277 = vunpack.c.h.b16 %v31
  %v278 = vunpack.c.l.b16 %v32
  %v279 = vunpack.c.l.b16 %v33
  %v280 = vunpack.c.h.b16 %v33
  %v281 = vunpack.c.l.b16 %v34
  %v282 = vunpack.c.h.b16 %v34
  %v283 = vunpack.c.l.b16 %v35
  %v284 = vunpack.c.h.b16 %v35
  %v285 = vunpack.c.l.b16 %v36
  %v286 = vunpack.c.l.b16 %v37
  %v287 = vunpack.c.h.b16 %v37
  %v288 = vunpack.c.l.b16 %v38
  %v289 = vunpack.c.h.b16 %v38
  %v290 = vunpack.c.l.b16 %v39
  %v291 = vunpack.c.h.b16 %v39
  %v292 = vunpack.c.l.b16 %v40
  %v293 = vunpack.c.l.b16 %v41
  %v294 = vunpack.c.h.b16 %v41
  %v295 = vunpack.c.l.b16 %v42
  %v296 = vunpack.c.h.b16 %v42
  %v297 = vunpack.c.l.b16 %v43
  %v298 = vunpack.c.h.b16 %v43
  %v299 = vunpack.c.l.b16 %v44
  %v300 = vunpack.c.l.b16 %v45
  %v301 = vunpack.c.h.b16 %v45
  %v302 = vunpack.c.l.b16 %v46
  %v303 = vunpack.c.h.b16 %v46
  %v304 = vunpack.c.l.b16 %v47
  %v305 = vunpack.c.h.b16 %v47
  %v306 = vunpack.c.l.b16 %v48
  %v307 = vunpack.c.l.b16 %v49
  %v308 = vunpack.c.h.b16 %v49
  %v309 = vunpack.c.l.b16 %v50
  %v310 = vunpack.c.h.b16 %v50
  %v311 = vunpack.c.l.b16 %v51
  %v312 = vunpack.c.h.b16 %v51
  %v313 = vunpack.c.l.b16 %v52
  %v314 = vunpack.c.l.b16 %v53
  %v315 = vunpack.c.h.b16 %v53
  %v316 = vunpack.c.l.b16 %v54
  %v317 = vunpack.c.h.b16 %v54
  %v318 = vunpack.c.l.b16 %v55
  %v319 = vunpack.c.h.b16 %v55
  %v320 = vunpack.c.l.b16 %v56
  %v321 = vunpack.c.l.b16 %v57
  %v322 = vunpack.c.h.b16 %v57
  %v323 = vunpack.c.l.b16 %v58
  %v324 = vunpack.c.h.b16 %v58
  %v325 = vunpack.c.l.b16 %v59
  %v326 = vunpack.c.h.b16 %v59
  %v327 = vunpack.c.l.b16 %v60
  %v328 = vunpack.c.l.b16 %v61
  %v329 = vunpack.c.h.b16 %v61
  %v330 = vunpack.c.l.b16 %v62
  %v331 = vunpack.c.h.b16 %v62
  %v332 = vunpack.c.l.b16 %v63
  %v333 = vunpack.c.h.b16 %v63
  %v334 = vunpack.c.l.b16 %v64
  %v335 = vunpack.c.l.b16 %v65
  %v336 = vunpack.c.h.b16 %v65
  %v337 = vunpack.c.l.b16 %v66
  %v338 = vunpack.c.h.b16 %v66
  %v339 = vunpack.c.l.b16 %v67
  %v340 = vunpack.c.h.b16 %v67
  %v341 = vunpack.c.l.b16 %v68
  %v342 = vunpack.c.l.b16 %v69
  %v343 = vunpack.c.h.b16 %v69
  %v344 = vunpack.c.l.b16 %v70
  %v345 = vunpack.c.h.b16 %v70
  %v346 = vunpack.c.l.b16 %v71
  %v347 = vunpack.c.h.b16 %v71
  %v348 = vunpack.c.l.b16 %v72
  %v349 = vunpack.c.l.b16 %v73
  %v350 = vunpack.c.h.b16 %v73
  %v351 = vunpack.c.l.b16 %v74
  %v352 = vunpack.c.h.b16 %v74
  %v353 = vunpack.c.l.b16 %v75
  %v354 = vunpack.c.h.b16 %v75
  %v355 = vunpack.c.l.b16 %v76
  %v356 = vunpack.c.l.b16 %v77
  %v357 = vunpack.c.h.b16 %v77
  %v358 = vunpack.c.l.b16 %v78
  %v359 = vunpack.c.h.b16 %v78
  %v360 = vunpack.c.l.b16 %v79
  %v361 = vunpack.c.h.b16 %v79
  %v362 = vunpack.c.l.b16 %v80
  %v363 = vunpack.c.l.b16 %v81
  %v364 = vunpack.c.h.b16 %v81
  %v365 = vunpack.c.l.b16 %v82
  %v366 = vunpack.c.h.b16 %v82
  %v367 = vunpack.c.l.b16 %v83
  %v368 = vunpack.c.h.b16 %v83
  %v369 = vunpack.c.l.b16 %v84
  %v370 = vunpack.c.l.b16 %v85
  %v371 = vunpack.c.h.b16 %v85
  %v372 = vunpack.c.l.b16 %v86
  %v373 = vunpack.c.h.b16 %v86
  %v374 = vunpack.c.l.b16 %v87
  %v375 = vunpack.c.h.b16 %v87
  %v376 = vunpack.c.l.b16 %v88
  %v377 = vpack.c.b16 %v272, %v265
  %v378 = vpack.c.b16 %v273, %v266
  %v379 = vpack.c.b16 %v274, %v267
  %v380 = vpack.c.b16 %v275, %v268
  %v381 = vpack.c.b16 %v276, %v269
  %v382 = vpack.c.b16 %v277, %v270
  %v383 = vpack.c.b16 %v278, %v271
  %v384 = vpack.c.b16 %v286, %v279
  %v385 = vpack.c.b16 %v287, %v280
  %v386 = vpack.c.b16 %v288, %v281
  %v387 = vpack.c.b16 %v289, %v282
  %v388 = vpack.c.b16 %v290, %v283
  %v389 = vpack.c.b16 %v291, %v284
  %v390 = vpack.c.b16 %v292, %v285
  %v391 = vpack.c.b16 %v300, %v293
  %v392 = vpack.c.b16 %v301, %v294
  %v393 = vpack.c.b16 %v302, %v295
  %v394 = vpack.c.b16 %v303, %v296
  %v395 = vpack.c.b16 %v304, %v297
  %v396 = vpack.c.b16 %v305, %v298
  %v397 = vpack.c.b16 %v306, %v299
  %v398 = vpack.c.b16 %v314, %v307
  %v399 = vpack.c.b16 %v315, %v308
  %v400 = vpack.c.b16 %v316, %v309
  %v401 = vpack.c.b16 %v317, %v310
  %v402 = vpack.c.b16 %v318, %v311
  %v403 = vpack.c.b16 %v319, %v312
  %v404 = vpack.c.b16 %v320, %v313
  %v405 = vpack.c.b16 %v328, %v321
  %v406 = vpack.c.b16 %v329, %v322
  %v407 = vpack.c.b16 %v330, %v323
  %v408 = vpack.c.b16 %v331, %v324
  %v409 = vpack.c.b16 %v332, %v325
  %v410 = vpack.c.b16 %v333, %v326
  %v411 = vpack.c.b16 %v334, %v327
  %v412 = vpack.c.b16 %v342, %v335
  %v413 = vpack.c.b16 %v343, %v336
  %v414 = vpack.c.b16 %v344, %v337
  %v415 = vpack.c.b16 %v345, %v338
  %v416 = vpack.c.b16 %v346, %v339
  %v417 = vpack.c.b16 %v347, %v340
  %v418 = vpack.c.b16 %v348, %v341
  %v419 = vpack.c.b16 %v356, %v349
  %v420 = vpack.c.b16 %v357, %v350
  %v421 = vpack.c.b16 %v358, %v351
  %v422 = vpack.c.b16 %v359, %v352
  %v423 = vpack.c.b16 %v360, %v353
  %v424 = vpack.c.b16 %v361, %v354
  %v425 = vpack.c.b16 %v362, %v355
  %v426 = vpack.c.b16 %v370, %v363
  %v427 = vpack.c.b16 %v371, %v364
  %v428 = vpack.c.b16 %v372, %v365
  %v429 = vpack.c.b16 %v373, %v366
  %v430 = vpack.c.b16 %v374, %v367
  %v431 = vpack.c.b16 %v375, %v368
  %v432 = vpack.c.b16 %v376, %v369
  %v601 = vunpack.c.l.b16 %v89
  %v602 = vunpack.c.l.b16 %v90
  %v603 = vunpack.c.l.b16 %v91
  %v604 = vunpack.c.l.b16 %v92
  %v605 = vunpack.c.l.b16 %v93
  %v606 = vunpack.c.l.b16 %v94
  %v607 = vunpack.c.l.b16 %v95
  %v608 = vunpack.c.l.b16 %v96
  %v609 = vunpack.c.l.b16 %v97
  %v610 = vunpack.c.l.b16 %v98
  %v611 = vunpack.c.l.b16 %v99
  %v612 = vunpack.c.l.b16 %v100
  %v613 = vunpack.c.l.b16 %v101
  %v614 = vunpack.c.l.b16 %v102
  %v615 = vunpack.c.l.b16 %v103
  %v616 = vunpack.c.l.b16 %v104
  %v617 = vunpack.c.l.b16 %v105
  %v618 = vunpack.c.l.b16 %v106
  %v619 = vunpack.c.l.b16 %v107
  %v620 = vunpack.c.l.b16 %v108
  %v621 = vunpack.c.l.b16 %v109
  %v622 = vunpack.c.l.b16 %v110
  %v623 = vunpack.c.l.b16 %v111
  %v624 = vunpack.c.l.b16 %v112
  %v625 = vunpack.c.l.b16 %v113
  %v626 = vunpack.c.l.b16 %v114
  %v627 = vunpack.c.l.b16 %v115
  %v628 = vunpack.c.l.b16 %v116
  %v629 = vunpack.c.l.b16 %v117
  %v630 = vunpack.c.l.b16 %v118
  %v631 = vunpack.c.l.b16 %v119
  %v632 = vunpack.c.l.b16 %v120
  %v633 = vunpack.c.l.b16 %v121
  %v634 = vunpack.c.l.b16 %v122
  %v635 = vunpack.c.l.b16 %v123
  %v636 = vunpack.c.l.b16 %v124
  %v637 = vunpack.c.l.b16 %v125
  %v638 = vunpack.c.l.b16 %v126
  %v639 = vunpack.c.l.b16 %v127
  %v640 = vunpack.c.l.b16 %v128
  %v641 = vunpack.c.l.b16 %v129
  %v642 = vunpack.c.l.b16 %v130
  %v643 = vunpack.c.l.b16 %v131
  %v644 = vunpack.c.l.b16 %v132
  %v645 = vunpack.c.l.b16 %v133
  %v646 = vunpack.c.l.b16 %v134
  %v647 = vunpack.c.l.b16 %v135
  %v648 = vunpack.c.l.b16 %v136
  %v649 = vunpack.c.l.b16 %v137
  %v650 = vunpack.c.l.b16 %v138
  %v651 = vunpack.c.l.b16 %v139
  %v652 = vunpack.c.l.b16 %v140
  %v653 = vunpack.c.l.b16 %v141
  %v654 = vunpack.c.l.b16 %v142
  %v655 = vunpack.c.l.b16 %v143
  %v656 = vunpack.c.l.b16 %v144
  %v657 = vunpack.c.l.b16 %v145
  %v658 = vunpack.c.l.b16 %v146
  %v659 = vunpack.c.l.b16 %v147
  %v660 = vunpack.c.l.b16 %v148
  %v661 = vunpack.c.l.b16 %v149
  %v662 = vunpack.c.l.b16 %v150
  %v663 = vunpack.c.l.b16 %v151
  %v664 = vunpack.c.l.b16 %v152
  %v665 = vunpack.c.l.b16 %v153
  %v666 = vunpack.c.l.b16 %v154
  %v667 = vunpack.c.l.b16 %v155
  %v668 = vunpack.c.l.b16 %v156
  %v669 = vunpack.c.l.b16 %v157
  %v670 = vunpack.c.l.b16 %v158
  %v671 = vunpack.c.l.b16 %v159
  %v672 = vunpack.c.l.b16 %v160
  %v673 = vunpack.c.l.b16 %v161
  %v674 = vunpack.c.l.b16 %v162
  %v675 = vunpack.c.l.b16 %v163
  %v676 = vunpack.c.l.b16 %v164
  %v677 = vunpack.c.l.b16 %v165
  %v678 = vunpack.c.l.b16 %v166
  %v679 = vunpack.c.l.b16 %v167
  %v680 = vunpack.c.l.b16 %v168
  %v681 = vunpack.c.l.b16 %v169
  %v682 = vunpack.c.l.b16 %v170
  %v683 = vunpack.c.l.b16 %v171
  %v684 = vunpack.c.l.b16 %v172
  %v685 = vunpack.c.l.b16 %v173
  %v686 = vunpack.c.l.b16 %v174
  %v687 = vunpack.c.l.b16 %v175
  %v688 = vunpack.c.l.b16 %v176
  %v689 = vunpack.c.l.b16 %v177
  %v690 = vunpack.c.l.b16 %v178
  %v691 = vunpack.c.l.b16 %v179
  %v692 = vunpack.c.l.b16 %v180
  %v693 = vunpack.c.l.b16 %v181
  %v694 = vunpack.c.l.b16 %v182
  %v695 = vunpack.c.l.b16 %v183
  %v696 = vunpack.c.l.b16 %v184
  %v697 = vunpack.c.l.b16 %v185
  %v698 = vunpack.c.l.b16 %v186
  %v699 = vunpack.c.l.b16 %v187
  %v700 = vunpack.c.l.b16 %v188
  %v701 = vunpack.c.l.b16 %v189
  %v702 = vunpack.c.l.b16 %v190
  %v703 = vunpack.c.l.b16 %v191
  %v704 = vunpack.c.l.b16 %v192
  %v705 = vunpack.c.l.b16 %v193
  %v706 = vunpack.c.l.b16 %v194
  %v707 = vunpack.c.l.b16 %v195
  %v708 = vunpack.c.l.b16 %v196
  %v709 = vunpack.c.l.b16 %v197
  %v710 = vunpack.c.l.b16 %v198
  %v711 = vunpack.c.l.b16 %v199
  %v712 = vunpack.c.l.b16 %v200
  %v713 = vpack.c.b16 %v602, %v601
  %v714 = vpack.c.b16 %v604, %v603
  %v715 = vpack.c.b16 %v606, %v605
  %v716 = vpack.c.b16 %v608, %v607
  %v717 = vpack.c.b16 %v610, %v609
  %v718 = vpack.c.b16 %v612, %v611
  %v719 = vpack.c.b16 %v614, %v613
  %v720 = vpack.c.b16 %v616, %v615
  %v721 = vpack.c.b16 %v618, %v617
  %v722 = vpack.c.b16 %v620, %v619
  %v723 = vpack.c.b16 %v622, %v621
  %v724 = vpack.c.b16 %v624, %v623
  %v725 = vpack.c.b16 %v626, %v625
  %v726 = vpack.c.b16 %v628, %v627
  %v727 = vpack.c.b16 %v630, %v629
  %v728 = vpack.c.b16 %v632, %v631
  %v729 = vpack.c.b16 %v634, %v633
  %v730 = vpack.c.b16 %v636, %v635
  %v731 = vpack.c.b16 %v638, %v637
  %v732 = vpack.c.b16 %v640, %v639
  %v733 = vpack.c.b16 %v642, %v641
  %v734 = vpack.c.b16 %v644, %v643
  %v735 = vpack.c.b16 %v646, %v645
  %v736 = vpack.c.b16 %v648, %v647
  %v737 = vpack.c.b16 %v650, %v649
  %v738 = vpack.c.b16 %v652, %v651
  %v739 = vpack.c.b16 %v654, %v653
  %v740 = vpack.c.b16 %v656, %v655
  %v741 = vpack.c.b16 %v658, %v657
  %v742 = vpack.c.b16 %v660, %v659
  %v743 = vpack.c.b16 %v662, %v661
  %v744 = vpack.c.b16 %v664, %v663
  %v745 = vpack.c.b16 %v666, %v665
  %v746 = vpack.c.b16 %v668, %v667
  %v747 = vpack.c.b16 %v670, %v669
  %v748 = vpack.c.b16 %v672, %v671
  %v749 = vpack.c.b16 %v674, %v673
  %v750 = vpack.c.b16 %v676, %v675
  %v751 = vpack.c.b16 %v678, %v677
  %v752 = vpack.c.b16 %v680, %v679
  %v753 = vpack.c.b16 %v682, %v681
  %v754 = vpack.c.b16 %v684, %v683
  %v755 = vpack.c.b16 %v686, %v685
  %v756 = vpack.c.b16 %v688, %v687
  %v757 = vpack.c.b16 %v690, %v689
  %v758 = vpack.c.b16 %v692, %v691
  %v759 = vpack.c.b16 %v694, %v693
  %v760 = vpack.c.b16 %v696, %v695
  %v761 = vpack.c.b16 %v698, %v697
  %v762 = vpack.c.b16 %v700, %v699
  %v763 = vpack.c.b16 %v702, %v701
  %v764 = vpack.c.b16 %v704, %v703
  %v765 = vpack.c.b16 %v706, %v705
  %v766 = vpack.c.b16 %v708, %v707
  %v767 = vpack.c.b16 %v710, %v709
  %v768 = vpack.c.b16 %v712, %v711
  %825 = vmatpush.bf16.msra.mxu0 %v720
  %826 = vmatpush.bf16.msra.mxu0 %v719
  %827 = vmatpush.bf16.msra.mxu0 %v718
  %828 = vmatpush.bf16.msra.mxu0 %v717
  %829 = vmatpush.bf16.msra.mxu0 %v716
  %830 = vmatpush.bf16.msra.mxu0 %v715
  %831 = vmatpush.bf16.msra.mxu0 %v714
  %832 = vmatpush.bf16.msra.mxu0 %v713
  %833 = vmatmul.bf16.gmra.mxu0 %v377
  %v834 = vpop.f32.mrf.mxu0
  %v835 = vadd.f32 0.0, %v834
  %v836 = vpop.f32.mrf.mxu0
  %v837 = vadd.f32 0.0, %v836
  %838 = vmatmul.bf16.gmra.mxu0 %v384
  %v839 = vpop.f32.mrf.mxu0
  %v840 = vadd.f32 0.0, %v839
  %v841 = vpop.f32.mrf.mxu0
  %v842 = vadd.f32 0.0, %v841
  %843 = vmatmul.bf16.gmra.mxu0 %v391
  %v844 = vpop.f32.mrf.mxu0
  %v845 = vadd.f32 0.0, %v844
  %v846 = vpop.f32.mrf.mxu0
  %v847 = vadd.f32 0.0, %v846
  %848 = vmatmul.bf16.gmra.mxu0 %v398
  %v849 = vpop.f32.mrf.mxu0
  %v850 = vadd.f32 0.0, %v849
  %v851 = vpop.f32.mrf.mxu0
  %v852 = vadd.f32 0.0, %v851
  %853 = vmatmul.bf16.gmra.mxu0 %v405
  %v854 = vpop.f32.mrf.mxu0
  %v855 = vadd.f32 0.0, %v854
  %v856 = vpop.f32.mrf.mxu0
  %v857 = vadd.f32 0.0, %v856
  %858 = vmatmul.bf16.gmra.mxu0 %v412
  %v859 = vpop.f32.mrf.mxu0
  %v860 = vadd.f32 0.0, %v859
  %v861 = vpop.f32.mrf.mxu0
  %v862 = vadd.f32 0.0, %v861
  %863 = vmatmul.bf16.gmra.mxu0 %v419
  %v864 = vpop.f32.mrf.mxu0
  %v865 = vadd.f32 0.0, %v864
  %v866 = vpop.f32.mrf.mxu0
  %v867 = vadd.f32 0.0, %v866
  %868 = vmatmul.bf16.gmra.mxu0 %v426
  %v869 = vpop.f32.mrf.mxu0
  %v870 = vadd.f32 0.0, %v869
  %v871 = vpop.f32.mrf.mxu0
  %v872 = vadd.f32 0.0, %v871
  %873 = vdwg.mxu0
  %874 = vmatpush.bf16.msra.mxu0 %v728
  %875 = vmatpush.bf16.msra.mxu0 %v727
  %876 = vmatpush.bf16.msra.mxu0 %v726
  %877 = vmatpush.bf16.msra.mxu0 %v725
  %878 = vmatpush.bf16.msra.mxu0 %v724
  %879 = vmatpush.bf16.msra.mxu0 %v723
  %880 = vmatpush.bf16.msra.mxu0 %v722
  %881 = vmatpush.bf16.msra.mxu0 %v721
  %882 = vmatmul.bf16.gmra.mxu0 %v378
  %v883 = vpop.f32.mrf.mxu0
  %v884 = vadd.f32 %v835, %v883
  %v885 = vpop.f32.mrf.mxu0
  %v886 = vadd.f32 %v837, %v885
  %887 = vmatmul.bf16.gmra.mxu0 %v385
  %v888 = vpop.f32.mrf.mxu0
  %v889 = vadd.f32 %v840, %v888
  %v890 = vpop.f32.mrf.mxu0
  %v891 = vadd.f32 %v842, %v890
  %892 = vmatmul.bf16.gmra.mxu0 %v392
  %v893 = vpop.f32.mrf.mxu0
  %v894 = vadd.f32 %v845, %v893
  %v895 = vpop.f32.mrf.mxu0
  %v896 = vadd.f32 %v847, %v895
  %897 = vmatmul.bf16.gmra.mxu0 %v399
  %v898 = vpop.f32.mrf.mxu0
  %v899 = vadd.f32 %v850, %v898
  %v900 = vpop.f32.mrf.mxu0
  %v901 = vadd.f32 %v852, %v900
  %902 = vmatmul.bf16.gmra.mxu0 %v406
  %v903 = vpop.f32.mrf.mxu0
  %v904 = vadd.f32 %v855, %v903
  %v905 = vpop.f32.mrf.mxu0
  %v906 = vadd.f32 %v857, %v905
  %907 = vmatmul.bf16.gmra.mxu0 %v413
  %v908 = vpop.f32.mrf.mxu0
  %v909 = vadd.f32 %v860, %v908
  %v910 = vpop.f32.mrf.mxu0
  %v911 = vadd.f32 %v862, %v910
  %912 = vmatmul.bf16.gmra.mxu0 %v420
  %v913 = vpop.f32.mrf.mxu0
  %v914 = vadd.f32 %v865, %v913
  %v915 = vpop.f32.mrf.mxu0
  %v916 = vadd.f32 %v867, %v915
  %917 = vmatmul.bf16.gmra.mxu0 %v427
  %v918 = vpop.f32.mrf.mxu0
  %v919 = vadd.f32 %v870, %v918
  %v920 = vpop.f32.mrf.mxu0
  %v921 = vadd.f32 %v872, %v920
  %922 = vdwg.mxu0
  %923 = vmatpush.bf16.msra.mxu0 %v736
  %924 = vmatpush.bf16.msra.mxu0 %v735
  %925 = vmatpush.bf16.msra.mxu0 %v734
  %926 = vmatpush.bf16.msra.mxu0 %v733
  %927 = vmatpush.bf16.msra.mxu0 %v732
  %928 = vmatpush.bf16.msra.mxu0 %v731
  %929 = vmatpush.bf16.msra.mxu0 %v730
  %930 = vmatpush.bf16.msra.mxu0 %v729
  %931 = vmatmul.bf16.gmra.mxu0 %v379
  %v932 = vpop.f32.mrf.mxu0
  %v933 = vadd.f32 %v884, %v932
  %v934 = vpop.f32.mrf.mxu0
  %v935 = vadd.f32 %v886, %v934
  %936 = vmatmul.bf16.gmra.mxu0 %v386
  %v937 = vpop.f32.mrf.mxu0
  %v938 = vadd.f32 %v889, %v937
  %v939 = vpop.f32.mrf.mxu0
  %v940 = vadd.f32 %v891, %v939
  %941 = vmatmul.bf16.gmra.mxu0 %v393
  %v942 = vpop.f32.mrf.mxu0
  %v943 = vadd.f32 %v894, %v942
  %v944 = vpop.f32.mrf.mxu0
  %v945 = vadd.f32 %v896, %v944
  %946 = vmatmul.bf16.gmra.mxu0 %v400
  %v947 = vpop.f32.mrf.mxu0
  %v948 = vadd.f32 %v899, %v947
  %v949 = vpop.f32.mrf.mxu0
  %v950 = vadd.f32 %v901, %v949
  %951 = vmatmul.bf16.gmra.mxu0 %v407
  %v952 = vpop.f32.mrf.mxu0
  %v953 = vadd.f32 %v904, %v952
  %v954 = vpop.f32.mrf.mxu0
  %v955 = vadd.f32 %v906, %v954
  %956 = vmatmul.bf16.gmra.mxu0 %v414
  %v957 = vpop.f32.mrf.mxu0
  %v958 = vadd.f32 %v909, %v957
  %v959 = vpop.f32.mrf.mxu0
  %v960 = vadd.f32 %v911, %v959
  %961 = vmatmul.bf16.gmra.mxu0 %v421
  %v962 = vpop.f32.mrf.mxu0
  %v963 = vadd.f32 %v914, %v962
  %v964 = vpop.f32.mrf.mxu0
  %v965 = vadd.f32 %v916, %v964
  %966 = vmatmul.bf16.gmra.mxu0 %v428
  %v967 = vpop.f32.mrf.mxu0
  %v968 = vadd.f32 %v919, %v967
  %v969 = vpop.f32.mrf.mxu0
  %v970 = vadd.f32 %v921, %v969
  %971 = vdwg.mxu0
  %972 = vmatpush.bf16.msra.mxu0 %v744
  %973 = vmatpush.bf16.msra.mxu0 %v743
  %974 = vmatpush.bf16.msra.mxu0 %v742
  %975 = vmatpush.bf16.msra.mxu0 %v741
  %976 = vmatpush.bf16.msra.mxu0 %v740
  %977 = vmatpush.bf16.msra.mxu0 %v739
  %978 = vmatpush.bf16.msra.mxu0 %v738
  %979 = vmatpush.bf16.msra.mxu0 %v737
  %980 = vmatmul.bf16.gmra.mxu0 %v380
  %v981 = vpop.f32.mrf.mxu0
  %v982 = vadd.f32 %v933, %v981
  %v983 = vpop.f32.mrf.mxu0
  %v984 = vadd.f32 %v935, %v983
  %985 = vmatmul.bf16.gmra.mxu0 %v387
  %v986 = vpop.f32.mrf.mxu0
  %v987 = vadd.f32 %v938, %v986
  %v988 = vpop.f32.mrf.mxu0
  %v989 = vadd.f32 %v940, %v988
  %990 = vmatmul.bf16.gmra.mxu0 %v394
  %v991 = vpop.f32.mrf.mxu0
  %v992 = vadd.f32 %v943, %v991
  %v993 = vpop.f32.mrf.mxu0
  %v994 = vadd.f32 %v945, %v993
  %995 = vmatmul.bf16.gmra.mxu0 %v401
  %v996 = vpop.f32.mrf.mxu0
  %v997 = vadd.f32 %v948, %v996
  %v998 = vpop.f32.mrf.mxu0
  %v999 = vadd.f32 %v950, %v998
  %1000 = vmatmul.bf16.gmra.mxu0 %v408
  %v1001 = vpop.f32.mrf.mxu0
  %v1002 = vadd.f32 %v953, %v1001
  %v1003 = vpop.f32.mrf.mxu0
  %v1004 = vadd.f32 %v955, %v1003
  %1005 = vmatmul.bf16.gmra.mxu0 %v415
  %v1006 = vpop.f32.mrf.mxu0
  %v1007 = vadd.f32 %v958, %v1006
  %v1008 = vpop.f32.mrf.mxu0
  %v1009 = vadd.f32 %v960, %v1008
  %1010 = vmatmul.bf16.gmra.mxu0 %v422
  %v1011 = vpop.f32.mrf.mxu0
  %v1012 = vadd.f32 %v963, %v1011
  %v1013 = vpop.f32.mrf.mxu0
  %v1014 = vadd.f32 %v965, %v1013
  %1015 = vmatmul.bf16.gmra.mxu0 %v429
  %v1016 = vpop.f32.mrf.mxu0
  %v1017 = vadd.f32 %v968, %v1016
  %v1018 = vpop.f32.mrf.mxu0
  %v1019 = vadd.f32 %v970, %v1018
  %1020 = vdwg.mxu0
  %1021 = vmatpush.bf16.msra.mxu0 %v752
  %1022 = vmatpush.bf16.msra.mxu0 %v751
  %1023 = vmatpush.bf16.msra.mxu0 %v750
  %1024 = vmatpush.bf16.msra.mxu0 %v749
  %1025 = vmatpush.bf16.msra.mxu0 %v748
  %1026 = vmatpush.bf16.msra.mxu0 %v747
  %1027 = vmatpush.bf16.msra.mxu0 %v746
  %1028 = vmatpush.bf16.msra.mxu0 %v745
  %1029 = vmatmul.bf16.gmra.mxu0 %v381
  %v1030 = vpop.f32.mrf.mxu0
  %v1031 = vadd.f32 %v982, %v1030
  %v1032 = vpop.f32.mrf.mxu0
  %v1033 = vadd.f32 %v984, %v1032
  %1034 = vmatmul.bf16.gmra.mxu0 %v388
  %v1035 = vpop.f32.mrf.mxu0
  %v1036 = vadd.f32 %v987, %v1035
  %v1037 = vpop.f32.mrf.mxu0
  %v1038 = vadd.f32 %v989, %v1037
  %1039 = vmatmul.bf16.gmra.mxu0 %v395
  %v1040 = vpop.f32.mrf.mxu0
  %v1041 = vadd.f32 %v992, %v1040
  %v1042 = vpop.f32.mrf.mxu0
  %v1043 = vadd.f32 %v994, %v1042
  %1044 = vmatmul.bf16.gmra.mxu0 %v402
  %v1045 = vpop.f32.mrf.mxu0
  %v1046 = vadd.f32 %v997, %v1045
  %v1047 = vpop.f32.mrf.mxu0
  %v1048 = vadd.f32 %v999, %v1047
  %1049 = vmatmul.bf16.gmra.mxu0 %v409
  %v1050 = vpop.f32.mrf.mxu0
  %v1051 = vadd.f32 %v1002, %v1050
  %v1052 = vpop.f32.mrf.mxu0
  %v1053 = vadd.f32 %v1004, %v1052
  %1054 = vmatmul.bf16.gmra.mxu0 %v416
  %v1055 = vpop.f32.mrf.mxu0
  %v1056 = vadd.f32 %v1007, %v1055
  %v1057 = vpop.f32.mrf.mxu0
  %v1058 = vadd.f32 %v1009, %v1057
  %1059 = vmatmul.bf16.gmra.mxu0 %v423
  %v1060 = vpop.f32.mrf.mxu0
  %v1061 = vadd.f32 %v1012, %v1060
  %v1062 = vpop.f32.mrf.mxu0
  %v1063 = vadd.f32 %v1014, %v1062
  %1064 = vmatmul.bf16.gmra.mxu0 %v430
  %v1065 = vpop.f32.mrf.mxu0
  %v1066 = vadd.f32 %v1017, %v1065
  %v1067 = vpop.f32.mrf.mxu0
  %v1068 = vadd.f32 %v1019, %v1067
  %1069 = vdwg.mxu0
  %1070 = vmatpush.bf16.msra.mxu0 %v760
  %1071 = vmatpush.bf16.msra.mxu0 %v759
  %1072 = vmatpush.bf16.msra.mxu0 %v758
  %1073 = vmatpush.bf16.msra.mxu0 %v757
  %1074 = vmatpush.bf16.msra.mxu0 %v756
  %1075 = vmatpush.bf16.msra.mxu0 %v755
  %1076 = vmatpush.bf16.msra.mxu0 %v754
  %1077 = vmatpush.bf16.msra.mxu0 %v753
  %1078 = vmatmul.bf16.gmra.mxu0 %v382
  %v1079 = vpop.f32.mrf.mxu0
  %v1080 = vadd.f32 %v1031, %v1079
  %v1081 = vpop.f32.mrf.mxu0
  %v1082 = vadd.f32 %v1033, %v1081
  %1083 = vmatmul.bf16.gmra.mxu0 %v389
  %v1084 = vpop.f32.mrf.mxu0
  %v1085 = vadd.f32 %v1036, %v1084
  %v1086 = vpop.f32.mrf.mxu0
  %v1087 = vadd.f32 %v1038, %v1086
  %1088 = vmatmul.bf16.gmra.mxu0 %v396
  %v1089 = vpop.f32.mrf.mxu0
  %v1090 = vadd.f32 %v1041, %v1089
  %v1091 = vpop.f32.mrf.mxu0
  %v1092 = vadd.f32 %v1043, %v1091
  %1093 = vmatmul.bf16.gmra.mxu0 %v403
  %v1094 = vpop.f32.mrf.mxu0
  %v1095 = vadd.f32 %v1046, %v1094
  %v1096 = vpop.f32.mrf.mxu0
  %v1097 = vadd.f32 %v1048, %v1096
  %1098 = vmatmul.bf16.gmra.mxu0 %v410
  %v1099 = vpop.f32.mrf.mxu0
  %v1100 = vadd.f32 %v1051, %v1099
  %v1101 = vpop.f32.mrf.mxu0
  %v1102 = vadd.f32 %v1053, %v1101
  %1103 = vmatmul.bf16.gmra.mxu0 %v417
  %v1104 = vpop.f32.mrf.mxu0
  %v1105 = vadd.f32 %v1056, %v1104
  %v1106 = vpop.f32.mrf.mxu0
  %v1107 = vadd.f32 %v1058, %v1106
  %1108 = vmatmul.bf16.gmra.mxu0 %v424
  %v1109 = vpop.f32.mrf.mxu0
  %v1110 = vadd.f32 %v1061, %v1109
  %v1111 = vpop.f32.mrf.mxu0
  %v1112 = vadd.f32 %v1063, %v1111
  %1113 = vmatmul.bf16.gmra.mxu0 %v431
  %v1114 = vpop.f32.mrf.mxu0
  %v1115 = vadd.f32 %v1066, %v1114
  %v1116 = vpop.f32.mrf.mxu0
  %v1117 = vadd.f32 %v1068, %v1116
  %1118 = vdwg.mxu0
  %1119 = vmatpush.bf16.msra.mxu0 %v768
  %1120 = vmatpush.bf16.msra.mxu0 %v767
  %1121 = vmatpush.bf16.msra.mxu0 %v766
  %1122 = vmatpush.bf16.msra.mxu0 %v765
  %1123 = vmatpush.bf16.msra.mxu0 %v764
  %1124 = vmatpush.bf16.msra.mxu0 %v763
  %1125 = vmatpush.bf16.msra.mxu0 %v762
  %1126 = vmatpush.bf16.msra.mxu0 %v761
  %1127 = vmatmul.bf16.gmra.mxu0 %v383
  %v1128 = vpop.f32.mrf.mxu0
  %v1129 = vadd.f32 %v1080, %v1128
  %v1130 = vpop.f32.mrf.mxu0
  %v1131 = vadd.f32 %v1082, %v1130
  %1132 = vmatmul.bf16.gmra.mxu0 %v390
  %v1133 = vpop.f32.mrf.mxu0
  %v1134 = vadd.f32 %v1085, %v1133
  %v1135 = vpop.f32.mrf.mxu0
  %v1136 = vadd.f32 %v1087, %v1135
  %1137 = vmatmul.bf16.gmra.mxu0 %v397
  %v1138 = vpop.f32.mrf.mxu0
  %v1139 = vadd.f32 %v1090, %v1138
  %v1140 = vpop.f32.mrf.mxu0
  %v1141 = vadd.f32 %v1092, %v1140
  %1142 = vmatmul.bf16.gmra.mxu0 %v404
  %v1143 = vpop.f32.mrf.mxu0
  %v1144 = vadd.f32 %v1095, %v1143
  %v1145 = vpop.f32.mrf.mxu0
  %v1146 = vadd.f32 %v1097, %v1145
  %1147 = vmatmul.bf16.gmra.mxu0 %v411
  %v1148 = vpop.f32.mrf.mxu0
  %v1149 = vadd.f32 %v1100, %v1148
  %v1150 = vpop.f32.mrf.mxu0
  %v1151 = vadd.f32 %v1102, %v1150
  %1152 = vmatmul.bf16.gmra.mxu0 %v418
  %v1153 = vpop.f32.mrf.mxu0
  %v1154 = vadd.f32 %v1105, %v1153
  %v1155 = vpop.f32.mrf.mxu0
  %v1156 = vadd.f32 %v1107, %v1155
  %1157 = vmatmul.bf16.gmra.mxu0 %v425
  %v1158 = vpop.f32.mrf.mxu0
  %v1159 = vadd.f32 %v1110, %v1158
  %v1160 = vpop.f32.mrf.mxu0
  %v1161 = vadd.f32 %v1112, %v1160
  %1162 = vmatmul.bf16.gmra.mxu0 %v432
  %v1163 = vpop.f32.mrf.mxu0
  %v1164 = vadd.f32 %v1115, %v1163
  %v1165 = vpop.f32.mrf.mxu0
  %v1166 = vadd.f32 %v1117, %v1165
  %1167 = vdwg.mxu0
  %v1168 = vld [vmem:[%s4] sm:$0x1]
  %v1169 = vld [vmem:[%s4 + $0x1] sm:$0x1]
  %v1170 = vadd.f32 %v1129, %v1131
  %v1171 = vadd.f32 %v1170, %v1134
  %v1172 = vadd.f32 %v1171, %v1136
  %v1173 = vadd.f32 %v1172, %v1139
  %v1174 = vadd.f32 %v1173, %v1141
  %v1175 = vadd.f32 %v1174, %v1144
  %v1176 = vadd.f32 %v1175, %v1146
  %v1177 = vadd.f32 %v1176, %v1149
  %v1178 = vadd.f32 %v1177, %v1151
  %v1179 = vadd.f32 %v1178, %v1154
  %v1180 = vadd.f32 %v1179, %v1156
  %v1181 = vadd.f32 %v1180, %v1159
  %v1182 = vadd.f32 %v1181, %v1161
  %v1183 = vadd.f32 %v1182, %v1164
  %v1184 = vadd.f32 %v1183, %v1166
  %v1185 = vrot.slane %v1184, 4
  %v1186 = vadd.f32 %v1184, %v1185
  %v1187 = vrot.slane %v1186, 2
  %v1188 = vadd.f32 %v1186, %v1187
  %v1189 = vrot.slane %v1188, 1
  %v1190 = vadd.f32 %v1188, %v1189
  %v1191 = vmul.f32 %v1129, %v1129
  %v1192 = vmul.f32 %v1131, %v1131
  %v1193 = vmul.f32 %v1134, %v1134
  %v1194 = vmul.f32 %v1136, %v1136
  %v1195 = vmul.f32 %v1139, %v1139
  %v1196 = vmul.f32 %v1141, %v1141
  %v1197 = vmul.f32 %v1144, %v1144
  %v1198 = vmul.f32 %v1146, %v1146
  %v1199 = vmul.f32 %v1149, %v1149
  %v1200 = vmul.f32 %v1151, %v1151
  %v1201 = vmul.f32 %v1154, %v1154
  %v1202 = vmul.f32 %v1156, %v1156
  %v1203 = vmul.f32 %v1159, %v1159
  %v1204 = vmul.f32 %v1161, %v1161
  %v1205 = vmul.f32 %v1164, %v1164
  %v1206 = vmul.f32 %v1166, %v1166
  %v1207 = vadd.f32 %v1191, %v1192
  %v1208 = vadd.f32 %v1207, %v1193
  %v1209 = vadd.f32 %v1208, %v1194
  %v1210 = vadd.f32 %v1209, %v1195
  %v1211 = vadd.f32 %v1210, %v1196
  %v1212 = vadd.f32 %v1211, %v1197
  %v1213 = vadd.f32 %v1212, %v1198
  %v1214 = vadd.f32 %v1213, %v1199
  %v1215 = vadd.f32 %v1214, %v1200
  %v1216 = vadd.f32 %v1215, %v1201
  %v1217 = vadd.f32 %v1216, %v1202
  %v1218 = vadd.f32 %v1217, %v1203
  %v1219 = vadd.f32 %v1218, %v1204
  %v1220 = vadd.f32 %v1219, %v1205
  %v1221 = vadd.f32 %v1220, %v1206
  %v1222 = vrot.slane %v1221, 4
  %v1223 = vadd.f32 %v1221, %v1222
  %v1224 = vrot.slane %v1223, 2
  %v1225 = vadd.f32 %v1223, %v1224
  %v1226 = vrot.slane %v1225, 1
  %v1227 = vadd.f32 %v1225, %v1226
  %v1228 = vmul.f32 %v1190, 0.010204081
  %v1229 = vmul.f32 %v1227, 0.010204081
  %v1230 = vmul.f32 %v1228, %v1228
  %v1231 = vsub.f32 %v1229, %v1230
  %v1232 = vadd.f32 %v1231, 1e-05
  %v1233 = vrsqrt.pop %v1232
  %v1234 = vmul.f32 %v1233, %v1232
  %v1235 = vmul.f32 %v1234, %v1233
  %v1236 = vmul.f32 0.5, %v1235
  %v1237 = vsub.f32 1.5, %v1236
  %v1238 = vmul.f32 %v1233, %v1237
  %vm1239 = vweird.f32 %v1232
  %vm1240 = vweird.f32 %v1233
  %vm1241 = vmor %vm1239, %vm1240
  %v1242 = vsel %vm1241, %v1233, %v1238
  %v1243 = vmul.f32 %v1168, %v1242
  %v1244 = vmul.f32 %v1228, %v1243
  %v1245 = vsub.f32 %v1169, %v1244
  %v1246 = vperm.slane %v1243, 0
  %v1247 = vmul.f32 %v1129, %v1246
  %v1248 = vmul.f32 %v1131, %v1246
  %v1249 = vmul.f32 %v1134, %v1246
  %v1250 = vmul.f32 %v1136, %v1246
  %v1251 = vmul.f32 %v1139, %v1246
  %v1252 = vmul.f32 %v1141, %v1246
  %v1253 = vmul.f32 %v1144, %v1246
  %v1254 = vmul.f32 %v1146, %v1246
  %v1255 = vmul.f32 %v1149, %v1246
  %v1256 = vmul.f32 %v1151, %v1246
  %v1257 = vmul.f32 %v1154, %v1246
  %v1258 = vmul.f32 %v1156, %v1246
  %v1259 = vmul.f32 %v1159, %v1246
  %v1260 = vmul.f32 %v1161, %v1246
  %v1261 = vmul.f32 %v1164, %v1246
  %v1262 = vmul.f32 %v1166, %v1246
  %v1263 = vperm.slane %v1245, 0
  %v1264 = vadd.f32 %v1247, %v1263
  %v1265 = vadd.f32 %v1248, %v1263
  %v1266 = vadd.f32 %v1249, %v1263
  %v1267 = vadd.f32 %v1250, %v1263
  %v1268 = vadd.f32 %v1251, %v1263
  %v1269 = vadd.f32 %v1252, %v1263
  %v1270 = vadd.f32 %v1253, %v1263
  %v1271 = vadd.f32 %v1254, %v1263
  %v1272 = vadd.f32 %v1255, %v1263
  %v1273 = vadd.f32 %v1256, %v1263
  %v1274 = vadd.f32 %v1257, %v1263
  %v1275 = vadd.f32 %v1258, %v1263
  %v1276 = vadd.f32 %v1259, %v1263
  %v1277 = vadd.f32 %v1260, %v1263
  %v1278 = vadd.f32 %v1261, %v1263
  %v1279 = vadd.f32 %v1262, %v1263
  %vm1280 = vcmp.gt.f32.partialorder %v1264, 0.0
  %vm1281 = vcmp.gt.f32.partialorder %v1265, 0.0
  %vm1282 = vcmp.gt.f32.partialorder %v1266, 0.0
  %vm1283 = vcmp.gt.f32.partialorder %v1267, 0.0
  %vm1284 = vcmp.gt.f32.partialorder %v1268, 0.0
  %vm1285 = vcmp.gt.f32.partialorder %v1269, 0.0
  %vm1286 = vcmp.gt.f32.partialorder %v1270, 0.0
  %vm1287 = vcmp.gt.f32.partialorder %v1271, 0.0
  %vm1288 = vcmp.gt.f32.partialorder %v1272, 0.0
  %vm1289 = vcmp.gt.f32.partialorder %v1273, 0.0
  %vm1290 = vcmp.gt.f32.partialorder %v1274, 0.0
  %vm1291 = vcmp.gt.f32.partialorder %v1275, 0.0
  %vm1292 = vcmp.gt.f32.partialorder %v1276, 0.0
  %vm1293 = vcmp.gt.f32.partialorder %v1277, 0.0
  %vm1294 = vcmp.gt.f32.partialorder %v1278, 0.0
  %vm1295 = vcmp.gt.f32.partialorder %v1279, 0.0
  %v1296 = vmul.f32 %v1264, 0.1
  %v1297 = vmul.f32 %v1265, 0.1
  %v1298 = vmul.f32 %v1266, 0.1
  %v1299 = vmul.f32 %v1267, 0.1
  %v1300 = vmul.f32 %v1268, 0.1
  %v1301 = vmul.f32 %v1269, 0.1
  %v1302 = vmul.f32 %v1270, 0.1
  %v1303 = vmul.f32 %v1271, 0.1
  %v1304 = vmul.f32 %v1272, 0.1
  %v1305 = vmul.f32 %v1273, 0.1
  %v1306 = vmul.f32 %v1274, 0.1
  %v1307 = vmul.f32 %v1275, 0.1
  %v1308 = vmul.f32 %v1276, 0.1
  %v1309 = vmul.f32 %v1277, 0.1
  %v1310 = vmul.f32 %v1278, 0.1
  %v1311 = vmul.f32 %v1279, 0.1
  %v1312 = vsel %vm1280, %v1264, %v1296
  %v1313 = vsel %vm1281, %v1265, %v1297
  %v1314 = vsel %vm1282, %v1266, %v1298
  %v1315 = vsel %vm1283, %v1267, %v1299
  %v1316 = vsel %vm1284, %v1268, %v1300
  %v1317 = vsel %vm1285, %v1269, %v1301
  %v1318 = vsel %vm1286, %v1270, %v1302
  %v1319 = vsel %vm1287, %v1271, %v1303
  %v1320 = vsel %vm1288, %v1272, %v1304
  %v1321 = vsel %vm1289, %v1273, %v1305
  %v1322 = vsel %vm1290, %v1274, %v1306
  %v1323 = vsel %vm1291, %v1275, %v1307
  %v1324 = vsel %vm1292, %v1276, %v1308
  %v1325 = vsel %vm1293, %v1277, %v1309
  %v1326 = vsel %vm1294, %v1278, %v1310
  %v1327 = vsel %vm1295, %v1279, %v1311
  %1328 = vst [vmem:[#allocation2] sm:$0xff] %v1312
  %1329 = vst [vmem:[#allocation2 + $0x8] sm:$0xff] %v1313
  %1330 = vst [vmem:[#allocation2 + $0x10] sm:$0xff] %v1314
  %1331 = vst [vmem:[#allocation2 + $0x18] sm:$0xff] %v1315
  %1332 = vst [vmem:[#allocation2 + $0x20] sm:$0xff] %v1316
  %1333 = vst [vmem:[#allocation2 + $0x28] sm:$0xff] %v1317
  %1334 = vst [vmem:[#allocation2 + $0x30] sm:$0xff] %v1318
  %1335 = vst [vmem:[#allocation2 + $0x38] sm:$0xff] %v1319
  %1336 = vst [vmem:[#allocation2 + $0x40] sm:$0xff] %v1320
  %1337 = vst [vmem:[#allocation2 + $0x48] sm:$0xff] %v1321
  %1338 = vst [vmem:[#allocation2 + $0x50] sm:$0xff] %v1322
  %1339 = vst [vmem:[#allocation2 + $0x58] sm:$0xff] %v1323
  %1340 = vst [vmem:[#allocation2 + $0x60] sm:$0xff] %v1324
  %1341 = vst [vmem:[#allocation2 + $0x68] sm:$0xff] %v1325
  %1342 = vst [vmem:[#allocation2 + $0x70] sm:$0xff] %v1326
  %1343 = vst [vmem:[#allocation2 + $0x78] sm:$0xff] %v1327
  %v1344 = vld [vmem:[#allocation2] sm:$0xff]
  %v1345 = vld [vmem:[#allocation2 + $0x8] sm:$0xff]
  %v1346 = vld [vmem:[#allocation2 + $0x10] sm:$0xff]
  %v1347 = vld [vmem:[#allocation2 + $0x18] sm:$0xff]
  %v1348 = vld [vmem:[#allocation2 + $0x20] sm:$0xff]
  %v1349 = vld [vmem:[#allocation2 + $0x28] sm:$0xff]
  %v1350 = vld [vmem:[#allocation2 + $0x30] sm:$0xff]
  %v1351 = vld [vmem:[#allocation2 + $0x38] sm:$0xff]
  %v1352 = vld [vmem:[#allocation2 + $0x40] sm:$0xff]
  %v1353 = vld [vmem:[#allocation2 + $0x48] sm:$0xff]
  %v1354 = vld [vmem:[#allocation2 + $0x50] sm:$0xff]
  %v1355 = vld [vmem:[#allocation2 + $0x58] sm:$0xff]
  %v1356 = vld [vmem:[#allocation2 + $0x60] sm:$0xff]
  %v1357 = vld [vmem:[#allocation2 + $0x68] sm:$0xff]
  %v1358 = vpack.c.bf16 %v1344, %v1344
  %v1359 = vpack.c.bf16 %v1345, %v1345
  %v1360 = vpack.c.bf16 %v1346, %v1346
  %v1361 = vpack.c.bf16 %v1347, %v1347
  %v1362 = vpack.c.bf16 %v1348, %v1348
  %v1363 = vpack.c.bf16 %v1349, %v1349
  %v1364 = vpack.c.bf16 %v1350, %v1350
  %v1365 = vpack.c.bf16 %v1351, %v1351
  %v1366 = vpack.c.bf16 %v1352, %v1352
  %v1367 = vpack.c.bf16 %v1353, %v1353
  %v1368 = vpack.c.bf16 %v1354, %v1354
  %v1369 = vpack.c.bf16 %v1355, %v1355
  %v1370 = vpack.c.bf16 %v1356, %v1356
  %v1371 = vpack.c.bf16 %v1357, %v1357
  %v1372 = vld [vmem:[#allocation2 + $0x1] sm:$0xff]
  %v1373 = vld [vmem:[#allocation2 + $0x9] sm:$0xff]
  %v1374 = vld [vmem:[#allocation2 + $0x11] sm:$0xff]
  %v1375 = vld [vmem:[#allocation2 + $0x19] sm:$0xff]
  %v1376 = vld [vmem:[#allocation2 + $0x21] sm:$0xff]
  %v1377 = vld [vmem:[#allocation2 + $0x29] sm:$0xff]
  %v1378 = vld [vmem:[#allocation2 + $0x31] sm:$0xff]
  %v1379 = vld [vmem:[#allocation2 + $0x39] sm:$0xff]
  %v1380 = vld [vmem:[#allocation2 + $0x41] sm:$0xff]
  %v1381 = vld [vmem:[#allocation2 + $0x49] sm:$0xff]
  %v1382 = vld [vmem:[#allocation2 + $0x51] sm:$0xff]
  %v1383 = vld [vmem:[#allocation2 + $0x59] sm:$0xff]
  %v1384 = vld [vmem:[#allocation2 + $0x61] sm:$0xff]
  %v1385 = vld [vmem:[#allocation2 + $0x69] sm:$0xff]
  %v1386 = vpack.c.bf16 %v1372, %v1372
  %v1387 = vpack.c.bf16 %v1373, %v1373
  %v1388 = vpack.c.bf16 %v1374, %v1374
  %v1389 = vpack.c.bf16 %v1375, %v1375
  %v1390 = vpack.c.bf16 %v1376, %v1376
  %v1391 = vpack.c.bf16 %v1377, %v1377
  %v1392 = vpack.c.bf16 %v1378, %v1378
  %v1393 = vpack.c.bf16 %v1379, %v1379
  %v1394 = vpack.c.bf16 %v1380, %v1380
  %v1395 = vpack.c.bf16 %v1381, %v1381
  %v1396 = vpack.c.bf16 %v1382, %v1382
  %v1397 = vpack.c.bf16 %v1383, %v1383
  %v1398 = vpack.c.bf16 %v1384, %v1384
  %v1399 = vpack.c.bf16 %v1385, %v1385
  %v1400 = vld [vmem:[#allocation2 + $0x2] sm:$0xff]
  %v1401 = vld [vmem:[#allocation2 + $0xa] sm:$0xff]
  %v1402 = vld [vmem:[#allocation2 + $0x12] sm:$0xff]
  %v1403 = vld [vmem:[#allocation2 + $0x1a] sm:$0xff]
  %v1404 = vld [vmem:[#allocation2 + $0x22] sm:$0xff]
  %v1405 = vld [vmem:[#allocation2 + $0x2a] sm:$0xff]
  %v1406 = vld [vmem:[#allocation2 + $0x32] sm:$0xff]
  %v1407 = vld [vmem:[#allocation2 + $0x3a] sm:$0xff]
  %v1408 = vld [vmem:[#allocation2 + $0x42] sm:$0xff]
  %v1409 = vld [vmem:[#allocation2 + $0x4a] sm:$0xff]
  %v1410 = vld [vmem:[#allocation2 + $0x52] sm:$0xff]
  %v1411 = vld [vmem:[#allocation2 + $0x5a] sm:$0xff]
  %v1412 = vld [vmem:[#allocation2 + $0x62] sm:$0xff]
  %v1413 = vld [vmem:[#allocation2 + $0x6a] sm:$0xff]
  %v1414 = vpack.c.bf16 %v1400, %v1400
  %v1415 = vpack.c.bf16 %v1401, %v1401
  %v1416 = vpack.c.bf16 %v1402, %v1402
  %v1417 = vpack.c.bf16 %v1403, %v1403
  %v1418 = vpack.c.bf16 %v1404, %v1404
  %v1419 = vpack.c.bf16 %v1405, %v1405
  %v1420 = vpack.c.bf16 %v1406, %v1406
  %v1421 = vpack.c.bf16 %v1407, %v1407
  %v1422 = vpack.c.bf16 %v1408, %v1408
  %v1423 = vpack.c.bf16 %v1409, %v1409
  %v1424 = vpack.c.bf16 %v1410, %v1410
  %v1425 = vpack.c.bf16 %v1411, %v1411
  %v1426 = vpack.c.bf16 %v1412, %v1412
  %v1427 = vpack.c.bf16 %v1413, %v1413
  %v1428 = vld [vmem:[#allocation2 + $0x7] sm:$0xff]
  %v1429 = vld [vmem:[#allocation2 + $0xf] sm:$0xff]
  %v1430 = vld [vmem:[#allocation2 + $0x17] sm:$0xff]
  %v1431 = vld [vmem:[#allocation2 + $0x1f] sm:$0xff]
  %v1432 = vld [vmem:[#allocation2 + $0x27] sm:$0xff]
  %v1433 = vld [vmem:[#allocation2 + $0x2f] sm:$0xff]
  %v1434 = vld [vmem:[#allocation2 + $0x37] sm:$0xff]
  %v1435 = vld [vmem:[#allocation2 + $0x3f] sm:$0xff]
  %v1436 = vld [vmem:[#allocation2 + $0x47] sm:$0xff]
  %v1437 = vld [vmem:[#allocation2 + $0x4f] sm:$0xff]
  %v1438 = vld [vmem:[#allocation2 + $0x57] sm:$0xff]
  %v1439 = vld [vmem:[#allocation2 + $0x5f] sm:$0xff]
  %v1440 = vld [vmem:[#allocation2 + $0x67] sm:$0xff]
  %v1441 = vld [vmem:[#allocation2 + $0x6f] sm:$0xff]
  %v1442 = vpack.c.bf16 %v1428, %v1428
  %v1443 = vpack.c.bf16 %v1429, %v1429
  %v1444 = vpack.c.bf16 %v1430, %v1430
  %v1445 = vpack.c.bf16 %v1431, %v1431
  %v1446 = vpack.c.bf16 %v1432, %v1432
  %v1447 = vpack.c.bf16 %v1433, %v1433
  %v1448 = vpack.c.bf16 %v1434, %v1434
  %v1449 = vpack.c.bf16 %v1435, %v1435
  %v1450 = vpack.c.bf16 %v1436, %v1436
  %v1451 = vpack.c.bf16 %v1437, %v1437
  %v1452 = vpack.c.bf16 %v1438, %v1438
  %v1453 = vpack.c.bf16 %v1439, %v1439
  %v1454 = vpack.c.bf16 %v1440, %v1440
  %v1455 = vpack.c.bf16 %v1441, %v1441
  %v1456 = vld [vmem:[#allocation2 + $0x70] sm:$0xff]
  %v1457 = vpack.c.bf16 %v1456, %v1456
  %v1458 = vld [vmem:[#allocation2 + $0x71] sm:$0xff]
  %v1459 = vpack.c.bf16 %v1458, %v1458
  %v1460 = vld [vmem:[#allocation2 + $0xe] sm:$0xff]
  %v1461 = vld [vmem:[#allocation2 + $0x16] sm:$0xff]
  %v1462 = vld [vmem:[#allocation2 + $0x1e] sm:$0xff]
  %v1463 = vld [vmem:[#allocation2 + $0x26] sm:$0xff]
  %v1464 = vld [vmem:[#allocation2 + $0x2e] sm:$0xff]
  %v1465 = vld [vmem:[#allocation2 + $0x36] sm:$0xff]
  %v1466 = vld [vmem:[#allocation2 + $0x3e] sm:$0xff]
  %v1467 = vld [vmem:[#allocation2 + $0x46] sm:$0xff]
  %v1468 = vld [vmem:[#allocation2 + $0x4e] sm:$0xff]
  %v1469 = vld [vmem:[#allocation2 + $0x56] sm:$0xff]
  %v1470 = vld [vmem:[#allocation2 + $0x5e] sm:$0xff]
  %v1471 = vld [vmem:[#allocation2 + $0x66] sm:$0xff]
  %v1472 = vld [vmem:[#allocation2 + $0x6e] sm:$0xff]
  %v1473 = vld [vmem:[#allocation2 + $0x76] sm:$0xff]
  %v1474 = vpack.c.bf16 %v1460, %v1460
  %v1475 = vpack.c.bf16 %v1461, %v1461
  %v1476 = vpack.c.bf16 %v1462, %v1462
  %v1477 = vpack.c.bf16 %v1463, %v1463
  %v1478 = vpack.c.bf16 %v1464, %v1464
  %v1479 = vpack.c.bf16 %v1465, %v1465
  %v1480 = vpack.c.bf16 %v1466, %v1466
  %v1481 = vpack.c.bf16 %v1467, %v1467
  %v1482 = vpack.c.bf16 %v1468, %v1468
  %v1483 = vpack.c.bf16 %v1469, %v1469
  %v1484 = vpack.c.bf16 %v1470, %v1470
  %v1485 = vpack.c.bf16 %v1471, %v1471
  %v1486 = vpack.c.bf16 %v1472, %v1472
  %v1487 = vpack.c.bf16 %v1473, %v1473
  %v1488 = vld [vmem:[#allocation2 + $0x77] sm:$0xff]
  %v1489 = vpack.c.bf16 %v1488, %v1488
  %v1490 = vld [vmem:[#allocation2 + $0x10] sm:$0xff]
  %v1491 = vld [vmem:[#allocation2 + $0x18] sm:$0xff]
  %v1492 = vld [vmem:[#allocation2 + $0x20] sm:$0xff]
  %v1493 = vld [vmem:[#allocation2 + $0x28] sm:$0xff]
  %v1494 = vld [vmem:[#allocation2 + $0x30] sm:$0xff]
  %v1495 = vld [vmem:[#allocation2 + $0x38] sm:$0xff]
  %v1496 = vld [vmem:[#allocation2 + $0x40] sm:$0xff]
  %v1497 = vld [vmem:[#allocation2 + $0x48] sm:$0xff]
  %v1498 = vld [vmem:[#allocation2 + $0x50] sm:$0xff]
  %v1499 = vld [vmem:[#allocation2 + $0x58] sm:$0xff]
  %v1500 = vld [vmem:[#allocation2 + $0x60] sm:$0xff]
  %v1501 = vld [vmem:[#allocation2 + $0x68] sm:$0xff]
  %v1502 = vld [vmem:[#allocation2 + $0x70] sm:$0xff]
  %v1503 = vld [vmem:[#allocation2 + $0x78] sm:$0xff]
  %v1504 = vpack.c.bf16 %v1490, %v1490
  %v1505 = vpack.c.bf16 %v1491, %v1491
  %v1506 = vpack.c.bf16 %v1492, %v1492
  %v1507 = vpack.c.bf16 %v1493, %v1493
  %v1508 = vpack.c.bf16 %v1494, %v1494
  %v1509 = vpack.c.bf16 %v1495, %v1495
  %v1510 = vpack.c.bf16 %v1496, %v1496
  %v1511 = vpack.c.bf16 %v1497, %v1497
  %v1512 = vpack.c.bf16 %v1498, %v1498
  %v1513 = vpack.c.bf16 %v1499, %v1499
  %v1514 = vpack.c.bf16 %v1500, %v1500
  %v1515 = vpack.c.bf16 %v1501, %v1501
  %v1516 = vpack.c.bf16 %v1502, %v1502
  %v1517 = vpack.c.bf16 %v1503, %v1503
  %v1532 = vunpack.c.l.b16 %v1358
  %v1533 = vunpack.c.l.b16 %v1359
  %v1534 = vunpack.c.l.b16 %v1360
  %v1535 = vunpack.c.l.b16 %v1361
  %v1536 = vunpack.c.l.b16 %v1362
  %v1537 = vunpack.c.l.b16 %v1363
  %v1538 = vunpack.c.l.b16 %v1364
  %v1539 = vunpack.c.l.b16 %v1365
  %v1540 = vunpack.c.l.b16 %v1366
  %v1541 = vunpack.c.l.b16 %v1367
  %v1542 = vunpack.c.l.b16 %v1368
  %v1543 = vunpack.c.l.b16 %v1369
  %v1544 = vunpack.c.l.b16 %v1370
  %v1545 = vunpack.c.l.b16 %v1371
  %v1546 = vpack.c.b16 %v1533, %v1532
  %v1547 = vpack.c.b16 %v1535, %v1534
  %v1548 = vpack.c.b16 %v1537, %v1536
  %v1549 = vpack.c.b16 %v1539, %v1538
  %v1550 = vpack.c.b16 %v1541, %v1540
  %v1551 = vpack.c.b16 %v1543, %v1542
  %v1552 = vpack.c.b16 %v1545, %v1544
  %v1574 = vunpack.c.l.b16 %v1386
  %v1575 = vunpack.c.l.b16 %v1387
  %v1576 = vunpack.c.l.b16 %v1388
  %v1577 = vunpack.c.l.b16 %v1389
  %v1578 = vunpack.c.l.b16 %v1390
  %v1579 = vunpack.c.l.b16 %v1391
  %v1580 = vunpack.c.l.b16 %v1392
  %v1581 = vunpack.c.l.b16 %v1393
  %v1582 = vunpack.c.l.b16 %v1394
  %v1583 = vunpack.c.l.b16 %v1395
  %v1584 = vunpack.c.l.b16 %v1396
  %v1585 = vunpack.c.l.b16 %v1397
  %v1586 = vunpack.c.l.b16 %v1398
  %v1587 = vunpack.c.l.b16 %v1399
  %v1588 = vpack.c.b16 %v1575, %v1574
  %v1589 = vpack.c.b16 %v1577, %v1576
  %v1590 = vpack.c.b16 %v1579, %v1578
  %v1591 = vpack.c.b16 %v1581, %v1580
  %v1592 = vpack.c.b16 %v1583, %v1582
  %v1593 = vpack.c.b16 %v1585, %v1584
  %v1594 = vpack.c.b16 %v1587, %v1586
  %v1616 = vunpack.c.l.b16 %v1414
  %v1617 = vunpack.c.l.b16 %v1415
  %v1618 = vunpack.c.l.b16 %v1416
  %v1619 = vunpack.c.l.b16 %v1417
  %v1620 = vunpack.c.l.b16 %v1418
  %v1621 = vunpack.c.l.b16 %v1419
  %v1622 = vunpack.c.l.b16 %v1420
  %v1623 = vunpack.c.l.b16 %v1421
  %v1624 = vunpack.c.l.b16 %v1422
  %v1625 = vunpack.c.l.b16 %v1423
  %v1626 = vunpack.c.l.b16 %v1424
  %v1627 = vunpack.c.l.b16 %v1425
  %v1628 = vunpack.c.l.b16 %v1426
  %v1629 = vunpack.c.l.b16 %v1427
  %v1630 = vpack.c.b16 %v1617, %v1616
  %v1631 = vpack.c.b16 %v1619, %v1618
  %v1632 = vpack.c.b16 %v1621, %v1620
  %v1633 = vpack.c.b16 %v1623, %v1622
  %v1634 = vpack.c.b16 %v1625, %v1624
  %v1635 = vpack.c.b16 %v1627, %v1626
  %v1636 = vpack.c.b16 %v1629, %v1628
  %v1658 = vunpack.c.l.b16 %v1442
  %v1659 = vunpack.c.l.b16 %v1443
  %v1660 = vunpack.c.l.b16 %v1444
  %v1661 = vunpack.c.l.b16 %v1445
  %v1662 = vunpack.c.l.b16 %v1446
  %v1663 = vunpack.c.l.b16 %v1447
  %v1664 = vunpack.c.l.b16 %v1448
  %v1665 = vunpack.c.l.b16 %v1449
  %v1666 = vunpack.c.l.b16 %v1450
  %v1667 = vunpack.c.l.b16 %v1451
  %v1668 = vunpack.c.l.b16 %v1452
  %v1669 = vunpack.c.l.b16 %v1453
  %v1670 = vunpack.c.l.b16 %v1454
  %v1671 = vunpack.c.l.b16 %v1455
  %v1672 = vpack.c.b16 %v1659, %v1658
  %v1673 = vpack.c.b16 %v1661, %v1660
  %v1674 = vpack.c.b16 %v1663, %v1662
  %v1675 = vpack.c.b16 %v1665, %v1664
  %v1676 = vpack.c.b16 %v1667, %v1666
  %v1677 = vpack.c.b16 %v1669, %v1668
  %v1678 = vpack.c.b16 %v1671, %v1670
  %v1687 = vunpack.c.l.b16 %v1457
  %v1688 = vpack.c.b16 %v1534, %v1533
  %v1689 = vpack.c.b16 %v1536, %v1535
  %v1690 = vpack.c.b16 %v1538, %v1537
  %v1691 = vpack.c.b16 %v1540, %v1539
  %v1692 = vpack.c.b16 %v1542, %v1541
  %v1693 = vpack.c.b16 %v1544, %v1543
  %v1694 = vpack.c.b16 %v1687, %v1545
  %v1703 = vunpack.c.l.b16 %v1459
  %v1704 = vpack.c.b16 %v1576, %v1575
  %v1705 = vpack.c.b16 %v1578, %v1577
  %v1706 = vpack.c.b16 %v1580, %v1579
  %v1707 = vpack.c.b16 %v1582, %v1581
  %v1708 = vpack.c.b16 %v1584, %v1583
  %v1709 = vpack.c.b16 %v1586, %v1585
  %v1710 = vpack.c.b16 %v1703, %v1587
  %v1732 = vunpack.c.l.b16 %v1474
  %v1733 = vunpack.c.l.b16 %v1475
  %v1734 = vunpack.c.l.b16 %v1476
  %v1735 = vunpack.c.l.b16 %v1477
  %v1736 = vunpack.c.l.b16 %v1478
  %v1737 = vunpack.c.l.b16 %v1479
  %v1738 = vunpack.c.l.b16 %v1480
  %v1739 = vunpack.c.l.b16 %v1481
  %v1740 = vunpack.c.l.b16 %v1482
  %v1741 = vunpack.c.l.b16 %v1483
  %v1742 = vunpack.c.l.b16 %v1484
  %v1743 = vunpack.c.l.b16 %v1485
  %v1744 = vunpack.c.l.b16 %v1486
  %v1745 = vunpack.c.l.b16 %v1487
  %v1746 = vpack.c.b16 %v1733, %v1732
  %v1747 = vpack.c.b16 %v1735, %v1734
  %v1748 = vpack.c.b16 %v1737, %v1736
  %v1749 = vpack.c.b16 %v1739, %v1738
  %v1750 = vpack.c.b16 %v1741, %v1740
  %v1751 = vpack.c.b16 %v1743, %v1742
  %v1752 = vpack.c.b16 %v1745, %v1744
  %v1761 = vunpack.c.l.b16 %v1489
  %v1762 = vpack.c.b16 %v1660, %v1659
  %v1763 = vpack.c.b16 %v1662, %v1661
  %v1764 = vpack.c.b16 %v1664, %v1663
  %v1765 = vpack.c.b16 %v1666, %v1665
  %v1766 = vpack.c.b16 %v1668, %v1667
  %v1767 = vpack.c.b16 %v1670, %v1669
  %v1768 = vpack.c.b16 %v1761, %v1671
  %v1790 = vunpack.c.l.b16 %v1504
  %v1791 = vunpack.c.l.b16 %v1505
  %v1792 = vunpack.c.l.b16 %v1506
  %v1793 = vunpack.c.l.b16 %v1507
  %v1794 = vunpack.c.l.b16 %v1508
  %v1795 = vunpack.c.l.b16 %v1509
  %v1796 = vunpack.c.l.b16 %v1510
  %v1797 = vunpack.c.l.b16 %v1511
  %v1798 = vunpack.c.l.b16 %v1512
  %v1799 = vunpack.c.l.b16 %v1513
  %v1800 = vunpack.c.l.b16 %v1514
  %v1801 = vunpack.c.l.b16 %v1515
  %v1802 = vunpack.c.l.b16 %v1516
  %v1803 = vunpack.c.l.b16 %v1517
  %v1804 = vpack.c.b16 %v1791, %v1790
  %v1805 = vpack.c.b16 %v1793, %v1792
  %v1806 = vpack.c.b16 %v1795, %v1794
  %v1807 = vpack.c.b16 %v1797, %v1796
  %v1808 = vpack.c.b16 %v1799, %v1798
  %v1809 = vpack.c.b16 %v1801, %v1800
  %v1810 = vpack.c.b16 %v1803, %v1802
  %v1818 = vld [vmem:[%s2] sm:$0xf]
  %v1819 = vld [vmem:[%s2 + $0x4] sm:$0xf]
  %v1820 = vld [vmem:[%s2 + $0x8] sm:$0xf]
  %v1821 = vld [vmem:[%s2 + $0xc] sm:$0xf]
  %v1822 = vld [vmem:[%s2 + $0x10] sm:$0xf]
  %v1823 = vld [vmem:[%s2 + $0x14] sm:$0xf]
  %v1824 = vld [vmem:[%s2 + $0x18] sm:$0xf]
  %v1825 = vld [vmem:[%s2 + $0x1c] sm:$0xf]
  %v1826 = vld [vmem:[%s2 + $0x20] sm:$0xf]
  %v1827 = vld [vmem:[%s2 + $0x24] sm:$0xf]
  %v1828 = vld [vmem:[%s2 + $0x28] sm:$0xf]
  %v1829 = vld [vmem:[%s2 + $0x2c] sm:$0xf]
  %v1830 = vld [vmem:[%s2 + $0x30] sm:$0xf]
  %v1831 = vld [vmem:[%s2 + $0x34] sm:$0xf]
  %v1832 = vld [vmem:[%s2 + $0x38] sm:$0xf]
  %v1833 = vld [vmem:[%s2 + $0x3c] sm:$0xf]
  %v1834 = vld [vmem:[%s2 + $0x40] sm:$0xf]
  %v1835 = vld [vmem:[%s2 + $0x44] sm:$0xf]
  %v1836 = vld [vmem:[%s2 + $0x48] sm:$0xf]
  %v1837 = vld [vmem:[%s2 + $0x4c] sm:$0xf]
  %v1838 = vld [vmem:[%s2 + $0x50] sm:$0xf]
  %v1839 = vld [vmem:[%s2 + $0x54] sm:$0xf]
  %v1840 = vld [vmem:[%s2 + $0x58] sm:$0xf]
  %v1841 = vld [vmem:[%s2 + $0x5c] sm:$0xf]
  %v1842 = vld [vmem:[%s2 + $0x60] sm:$0xf]
  %v1843 = vld [vmem:[%s2 + $0x64] sm:$0xf]
  %v1844 = vld [vmem:[%s2 + $0x68] sm:$0xf]
  %v1845 = vld [vmem:[%s2 + $0x6c] sm:$0xf]
  %v1846 = vld [vmem:[%s2 + $0x70] sm:$0xf]
  %v1847 = vld [vmem:[%s2 + $0x74] sm:$0xf]
  %v1848 = vld [vmem:[%s2 + $0x78] sm:$0xf]
  %v1849 = vld [vmem:[%s2 + $0x7c] sm:$0xf]
  %v1850 = vld [vmem:[%s2 + $0x80] sm:$0xf]
  %v1851 = vld [vmem:[%s2 + $0x84] sm:$0xf]
  %v1852 = vld [vmem:[%s2 + $0x88] sm:$0xf]
  %v1853 = vld [vmem:[%s2 + $0x8c] sm:$0xf]
  %v1854 = vld [vmem:[%s2 + $0x90] sm:$0xf]
  %v1855 = vld [vmem:[%s2 + $0x94] sm:$0xf]
  %v1856 = vld [vmem:[%s2 + $0x98] sm:$0xf]
  %v1857 = vld [vmem:[%s2 + $0x9c] sm:$0xf]
  %v1858 = vld [vmem:[%s2 + $0xa0] sm:$0xf]
  %v1859 = vld [vmem:[%s2 + $0xa4] sm:$0xf]
  %v1860 = vld [vmem:[%s2 + $0xa8] sm:$0xf]
  %v1861 = vld [vmem:[%s2 + $0xac] sm:$0xf]
  %v1862 = vld [vmem:[%s2 + $0xb0] sm:$0xf]
  %v1863 = vld [vmem:[%s2 + $0xb4] sm:$0xf]
  %v1864 = vld [vmem:[%s2 + $0xb8] sm:$0xf]
  %v1865 = vld [vmem:[%s2 + $0xbc] sm:$0xf]
  %v1866 = vld [vmem:[%s2 + $0xc0] sm:$0xf]
  %v1867 = vld [vmem:[%s2 + $0xc4] sm:$0xf]
  %v1868 = vld [vmem:[%s2 + $0xc8] sm:$0xf]
  %v1869 = vld [vmem:[%s2 + $0xcc] sm:$0xf]
  %v1870 = vld [vmem:[%s2 + $0xd0] sm:$0xf]
  %v1871 = vld [vmem:[%s2 + $0xd4] sm:$0xf]
  %v1872 = vld [vmem:[%s2 + $0xd8] sm:$0xf]
  %v1873 = vld [vmem:[%s2 + $0xdc] sm:$0xf]
  %v1874 = vld [vmem:[%s2 + $0xe0] sm:$0xf]
  %v1875 = vld [vmem:[%s2 + $0xe4] sm:$0xf]
  %v1876 = vld [vmem:[%s2 + $0xe8] sm:$0xf]
  %v1877 = vld [vmem:[%s2 + $0xec] sm:$0xf]
  %v1878 = vld [vmem:[%s2 + $0xf0] sm:$0xf]
  %v1879 = vld [vmem:[%s2 + $0xf4] sm:$0xf]
  %v1880 = vld [vmem:[%s2 + $0xf8] sm:$0xf]
  %v1881 = vld [vmem:[%s2 + $0xfc] sm:$0xf]
  %v1882 = vld [vmem:[%s2 + $0x100] sm:$0xf]
  %v1883 = vld [vmem:[%s2 + $0x104] sm:$0xf]
  %v1884 = vld [vmem:[%s2 + $0x108] sm:$0xf]
  %v1885 = vld [vmem:[%s2 + $0x10c] sm:$0xf]
  %v1886 = vld [vmem:[%s2 + $0x110] sm:$0xf]
  %v1887 = vld [vmem:[%s2 + $0x114] sm:$0xf]
  %v1888 = vld [vmem:[%s2 + $0x118] sm:$0xf]
  %v1889 = vld [vmem:[%s2 + $0x11c] sm:$0xf]
  %v1890 = vld [vmem:[%s2 + $0x120] sm:$0xf]
  %v1891 = vld [vmem:[%s2 + $0x124] sm:$0xf]
  %v1892 = vld [vmem:[%s2 + $0x128] sm:$0xf]
  %v1893 = vld [vmem:[%s2 + $0x12c] sm:$0xf]
  %v1894 = vld [vmem:[%s2 + $0x130] sm:$0xf]
  %v1895 = vld [vmem:[%s2 + $0x134] sm:$0xf]
  %v1896 = vld [vmem:[%s2 + $0x138] sm:$0xf]
  %v1897 = vld [vmem:[%s2 + $0x13c] sm:$0xf]
  %v1898 = vld [vmem:[%s2 + $0x140] sm:$0xf]
  %v1899 = vld [vmem:[%s2 + $0x144] sm:$0xf]
  %v1900 = vld [vmem:[%s2 + $0x148] sm:$0xf]
  %v1901 = vld [vmem:[%s2 + $0x14c] sm:$0xf]
  %v1902 = vld [vmem:[%s2 + $0x150] sm:$0xf]
  %v1903 = vld [vmem:[%s2 + $0x154] sm:$0xf]
  %v1904 = vld [vmem:[%s2 + $0x158] sm:$0xf]
  %v1905 = vld [vmem:[%s2 + $0x15c] sm:$0xf]
  %v1906 = vld [vmem:[%s2 + $0x160] sm:$0xf]
  %v1907 = vld [vmem:[%s2 + $0x164] sm:$0xf]
  %v1908 = vld [vmem:[%s2 + $0x168] sm:$0xf]
  %v1909 = vld [vmem:[%s2 + $0x16c] sm:$0xf]
  %v1910 = vld [vmem:[%s2 + $0x170] sm:$0xf]
  %v1911 = vld [vmem:[%s2 + $0x174] sm:$0xf]
  %v1912 = vld [vmem:[%s2 + $0x178] sm:$0xf]
  %v1913 = vld [vmem:[%s2 + $0x17c] sm:$0xf]
  %v1914 = vld [vmem:[%s2 + $0x180] sm:$0xf]
  %v1915 = vld [vmem:[%s2 + $0x184] sm:$0xf]
  %v1916 = vld [vmem:[%s2 + $0x188] sm:$0xf]
  %v1917 = vld [vmem:[%s2 + $0x18c] sm:$0xf]
  %v1918 = vld [vmem:[%s2 + $0x190] sm:$0xf]
  %v1919 = vld [vmem:[%s2 + $0x194] sm:$0xf]
  %v1920 = vld [vmem:[%s2 + $0x198] sm:$0xf]
  %v1921 = vld [vmem:[%s2 + $0x19c] sm:$0xf]
  %v1922 = vld [vmem:[%s2 + $0x1a0] sm:$0xf]
  %v1923 = vld [vmem:[%s2 + $0x1a4] sm:$0xf]
  %v1924 = vld [vmem:[%s2 + $0x1a8] sm:$0xf]
  %v1925 = vld [vmem:[%s2 + $0x1ac] sm:$0xf]
  %v1926 = vld [vmem:[%s2 + $0x1b0] sm:$0xf]
  %v1927 = vld [vmem:[%s2 + $0x1b4] sm:$0xf]
  %v1928 = vld [vmem:[%s2 + $0x1b8] sm:$0xf]
  %v1929 = vld [vmem:[%s2 + $0x1bc] sm:$0xf]
  %v1930 = vld [vmem:[%s2 + $0x1c0] sm:$0xf]
  %v1931 = vld [vmem:[%s2 + $0x1c4] sm:$0xf]
  %v1932 = vld [vmem:[%s2 + $0x1c8] sm:$0xf]
  %v1933 = vld [vmem:[%s2 + $0x1cc] sm:$0xf]
  %v1934 = vld [vmem:[%s2 + $0x1d0] sm:$0xf]
  %v1935 = vld [vmem:[%s2 + $0x1d4] sm:$0xf]
  %v1936 = vld [vmem:[%s2 + $0x1d8] sm:$0xf]
  %v1937 = vld [vmem:[%s2 + $0x1dc] sm:$0xf]
  %v1938 = vld [vmem:[%s2 + $0x1e0] sm:$0xf]
  %v1939 = vld [vmem:[%s2 + $0x1e4] sm:$0xf]
  %v1940 = vld [vmem:[%s2 + $0x1e8] sm:$0xf]
  %v1941 = vld [vmem:[%s2 + $0x1ec] sm:$0xf]
  %v1942 = vld [vmem:[%s2 + $0x1f0] sm:$0xf]
  %v1943 = vld [vmem:[%s2 + $0x1f4] sm:$0xf]
  %v1944 = vld [vmem:[%s2 + $0x1f8] sm:$0xf]
  %v1945 = vld [vmem:[%s2 + $0x1fc] sm:$0xf]
  %v1946 = vld [vmem:[%s2 + $0x200] sm:$0xf]
  %v1947 = vld [vmem:[%s2 + $0x204] sm:$0xf]
  %v1948 = vld [vmem:[%s2 + $0x208] sm:$0xf]
  %v1949 = vld [vmem:[%s2 + $0x20c] sm:$0xf]
  %v1950 = vld [vmem:[%s2 + $0x210] sm:$0xf]
  %v1951 = vld [vmem:[%s2 + $0x214] sm:$0xf]
  %v1952 = vld [vmem:[%s2 + $0x218] sm:$0xf]
  %v1953 = vld [vmem:[%s2 + $0x21c] sm:$0xf]
  %v1954 = vld [vmem:[%s2 + $0x220] sm:$0xf]
  %v1955 = vld [vmem:[%s2 + $0x224] sm:$0xf]
  %v1956 = vld [vmem:[%s2 + $0x228] sm:$0xf]
  %v1957 = vld [vmem:[%s2 + $0x22c] sm:$0xf]
  %v1958 = vld [vmem:[%s2 + $0x230] sm:$0xf]
  %v1959 = vld [vmem:[%s2 + $0x234] sm:$0xf]
  %v1960 = vld [vmem:[%s2 + $0x238] sm:$0xf]
  %v1961 = vld [vmem:[%s2 + $0x23c] sm:$0xf]
  %v2106 = vunpack.c.l.b16 %v1818
  %v2107 = vunpack.c.l.b16 %v1819
  %v2108 = vunpack.c.l.b16 %v1820
  %v2109 = vunpack.c.l.b16 %v1821
  %v2110 = vunpack.c.l.b16 %v1822
  %v2111 = vunpack.c.l.b16 %v1823
  %v2112 = vunpack.c.l.b16 %v1824
  %v2113 = vunpack.c.l.b16 %v1825
  %v2114 = vunpack.c.l.b16 %v1826
  %v2115 = vunpack.c.l.b16 %v1827
  %v2116 = vunpack.c.l.b16 %v1828
  %v2117 = vunpack.c.l.b16 %v1829
  %v2118 = vunpack.c.l.b16 %v1830
  %v2119 = vunpack.c.l.b16 %v1831
  %v2120 = vunpack.c.l.b16 %v1832
  %v2121 = vunpack.c.l.b16 %v1833
  %v2122 = vunpack.c.l.b16 %v1834
  %v2123 = vunpack.c.l.b16 %v1835
  %v2124 = vunpack.c.l.b16 %v1836
  %v2125 = vunpack.c.l.b16 %v1837
  %v2126 = vunpack.c.l.b16 %v1838
  %v2127 = vunpack.c.l.b16 %v1839
  %v2128 = vunpack.c.l.b16 %v1840
  %v2129 = vunpack.c.l.b16 %v1841
  %v2130 = vunpack.c.l.b16 %v1842
  %v2131 = vunpack.c.l.b16 %v1843
  %v2132 = vunpack.c.l.b16 %v1844
  %v2133 = vunpack.c.l.b16 %v1845
  %v2134 = vunpack.c.l.b16 %v1846
  %v2135 = vunpack.c.l.b16 %v1847
  %v2136 = vunpack.c.l.b16 %v1848
  %v2137 = vunpack.c.l.b16 %v1849
  %v2138 = vunpack.c.l.b16 %v1850
  %v2139 = vunpack.c.l.b16 %v1851
  %v2140 = vunpack.c.l.b16 %v1852
  %v2141 = vunpack.c.l.b16 %v1853
  %v2142 = vunpack.c.l.b16 %v1854
  %v2143 = vunpack.c.l.b16 %v1855
  %v2144 = vunpack.c.l.b16 %v1856
  %v2145 = vunpack.c.l.b16 %v1857
  %v2146 = vunpack.c.l.b16 %v1858
  %v2147 = vunpack.c.l.b16 %v1859
  %v2148 = vunpack.c.l.b16 %v1860
  %v2149 = vunpack.c.l.b16 %v1861
  %v2150 = vunpack.c.l.b16 %v1862
  %v2151 = vunpack.c.l.b16 %v1863
  %v2152 = vunpack.c.l.b16 %v1864
  %v2153 = vunpack.c.l.b16 %v1865
  %v2154 = vunpack.c.l.b16 %v1866
  %v2155 = vunpack.c.l.b16 %v1867
  %v2156 = vunpack.c.l.b16 %v1868
  %v2157 = vunpack.c.l.b16 %v1869
  %v2158 = vunpack.c.l.b16 %v1870
  %v2159 = vunpack.c.l.b16 %v1871
  %v2160 = vunpack.c.l.b16 %v1872
  %v2161 = vunpack.c.l.b16 %v1873
  %v2162 = vunpack.c.l.b16 %v1874
  %v2163 = vunpack.c.l.b16 %v1875
  %v2164 = vunpack.c.l.b16 %v1876
  %v2165 = vunpack.c.l.b16 %v1877
  %v2166 = vunpack.c.l.b16 %v1878
  %v2167 = vunpack.c.l.b16 %v1879
  %v2168 = vunpack.c.l.b16 %v1880
  %v2169 = vunpack.c.l.b16 %v1881
  %v2170 = vunpack.c.l.b16 %v1882
  %v2171 = vunpack.c.l.b16 %v1883
  %v2172 = vunpack.c.l.b16 %v1884
  %v2173 = vunpack.c.l.b16 %v1885
  %v2174 = vunpack.c.l.b16 %v1886
  %v2175 = vunpack.c.l.b16 %v1887
  %v2176 = vunpack.c.l.b16 %v1888
  %v2177 = vunpack.c.l.b16 %v1889
  %v2178 = vunpack.c.l.b16 %v1890
  %v2179 = vunpack.c.l.b16 %v1891
  %v2180 = vunpack.c.l.b16 %v1892
  %v2181 = vunpack.c.l.b16 %v1893
  %v2182 = vunpack.c.l.b16 %v1894
  %v2183 = vunpack.c.l.b16 %v1895
  %v2184 = vunpack.c.l.b16 %v1896
  %v2185 = vunpack.c.l.b16 %v1897
  %v2186 = vunpack.c.l.b16 %v1898
  %v2187 = vunpack.c.l.b16 %v1899
  %v2188 = vunpack.c.l.b16 %v1900
  %v2189 = vunpack.c.l.b16 %v1901
  %v2190 = vunpack.c.l.b16 %v1902
  %v2191 = vunpack.c.l.b16 %v1903
  %v2192 = vunpack.c.l.b16 %v1904
  %v2193 = vunpack.c.l.b16 %v1905
  %v2194 = vunpack.c.l.b16 %v1906
  %v2195 = vunpack.c.l.b16 %v1907
  %v2196 = vunpack.c.l.b16 %v1908
  %v2197 = vunpack.c.l.b16 %v1909
  %v2198 = vunpack.c.l.b16 %v1910
  %v2199 = vunpack.c.l.b16 %v1911
  %v2200 = vunpack.c.l.b16 %v1912
  %v2201 = vunpack.c.l.b16 %v1913
  %v2202 = vunpack.c.l.b16 %v1914
  %v2203 = vunpack.c.l.b16 %v1915
  %v2204 = vunpack.c.l.b16 %v1916
  %v2205 = vunpack.c.l.b16 %v1917
  %v2206 = vunpack.c.l.b16 %v1918
  %v2207 = vunpack.c.l.b16 %v1919
  %v2208 = vunpack.c.l.b16 %v1920
  %v2209 = vunpack.c.l.b16 %v1921
  %v2210 = vunpack.c.l.b16 %v1922
  %v2211 = vunpack.c.l.b16 %v1923
  %v2212 = vunpack.c.l.b16 %v1924
  %v2213 = vunpack.c.l.b16 %v1925
  %v2214 = vunpack.c.l.b16 %v1926
  %v2215 = vunpack.c.l.b16 %v1927
  %v2216 = vunpack.c.l.b16 %v1928
  %v2217 = vunpack.c.l.b16 %v1929
  %v2218 = vunpack.c.l.b16 %v1930
  %v2219 = vunpack.c.l.b16 %v1931
  %v2220 = vunpack.c.l.b16 %v1932
  %v2221 = vunpack.c.l.b16 %v1933
  %v2222 = vunpack.c.l.b16 %v1934
  %v2223 = vunpack.c.l.b16 %v1935
  %v2224 = vunpack.c.l.b16 %v1936
  %v2225 = vunpack.c.l.b16 %v1937
  %v2226 = vunpack.c.l.b16 %v1938
  %v2227 = vunpack.c.l.b16 %v1939
  %v2228 = vunpack.c.l.b16 %v1940
  %v2229 = vunpack.c.l.b16 %v1941
  %v2230 = vunpack.c.l.b16 %v1942
  %v2231 = vunpack.c.l.b16 %v1943
  %v2232 = vunpack.c.l.b16 %v1944
  %v2233 = vunpack.c.l.b16 %v1945
  %v2234 = vunpack.c.l.b16 %v1946
  %v2235 = vunpack.c.l.b16 %v1947
  %v2236 = vunpack.c.l.b16 %v1948
  %v2237 = vunpack.c.l.b16 %v1949
  %v2238 = vunpack.c.l.b16 %v1950
  %v2239 = vunpack.c.l.b16 %v1951
  %v2240 = vunpack.c.l.b16 %v1952
  %v2241 = vunpack.c.l.b16 %v1953
  %v2242 = vunpack.c.l.b16 %v1954
  %v2243 = vunpack.c.l.b16 %v1955
  %v2244 = vunpack.c.l.b16 %v1956
  %v2245 = vunpack.c.l.b16 %v1957
  %v2246 = vunpack.c.l.b16 %v1958
  %v2247 = vunpack.c.l.b16 %v1959
  %v2248 = vunpack.c.l.b16 %v1960
  %v2249 = vunpack.c.l.b16 %v1961
  %v2250 = vpack.c.b16 %v2107, %v2106
  %v2251 = vpack.c.b16 %v2109, %v2108
  %v2252 = vpack.c.b16 %v2111, %v2110
  %v2253 = vpack.c.b16 %v2113, %v2112
  %v2254 = vpack.c.b16 %v2115, %v2114
  %v2255 = vpack.c.b16 %v2117, %v2116
  %v2256 = vpack.c.b16 %v2119, %v2118
  %v2257 = vpack.c.b16 %v2121, %v2120
  %v2258 = vpack.c.b16 %v2123, %v2122
  %v2259 = vpack.c.b16 %v2125, %v2124
  %v2260 = vpack.c.b16 %v2127, %v2126
  %v2261 = vpack.c.b16 %v2129, %v2128
  %v2262 = vpack.c.b16 %v2131, %v2130
  %v2263 = vpack.c.b16 %v2133, %v2132
  %v2264 = vpack.c.b16 %v2135, %v2134
  %v2265 = vpack.c.b16 %v2137, %v2136
  %v2266 = vpack.c.b16 %v2139, %v2138
  %v2267 = vpack.c.b16 %v2141, %v2140
  %v2268 = vpack.c.b16 %v2143, %v2142
  %v2269 = vpack.c.b16 %v2145, %v2144
  %v2270 = vpack.c.b16 %v2147, %v2146
  %v2271 = vpack.c.b16 %v2149, %v2148
  %v2272 = vpack.c.b16 %v2151, %v2150
  %v2273 = vpack.c.b16 %v2153, %v2152
  %v2274 = vpack.c.b16 %v2155, %v2154
  %v2275 = vpack.c.b16 %v2157, %v2156
  %v2276 = vpack.c.b16 %v2159, %v2158
  %v2277 = vpack.c.b16 %v2161, %v2160
  %v2278 = vpack.c.b16 %v2163, %v2162
  %v2279 = vpack.c.b16 %v2165, %v2164
  %v2280 = vpack.c.b16 %v2167, %v2166
  %v2281 = vpack.c.b16 %v2169, %v2168
  %v2282 = vpack.c.b16 %v2171, %v2170
  %v2283 = vpack.c.b16 %v2173, %v2172
  %v2284 = vpack.c.b16 %v2175, %v2174
  %v2285 = vpack.c.b16 %v2177, %v2176
  %v2286 = vpack.c.b16 %v2179, %v2178
  %v2287 = vpack.c.b16 %v2181, %v2180
  %v2288 = vpack.c.b16 %v2183, %v2182
  %v2289 = vpack.c.b16 %v2185, %v2184
  %v2290 = vpack.c.b16 %v2187, %v2186
  %v2291 = vpack.c.b16 %v2189, %v2188
  %v2292 = vpack.c.b16 %v2191, %v2190
  %v2293 = vpack.c.b16 %v2193, %v2192
  %v2294 = vpack.c.b16 %v2195, %v2194
  %v2295 = vpack.c.b16 %v2197, %v2196
  %v2296 = vpack.c.b16 %v2199, %v2198
  %v2297 = vpack.c.b16 %v2201, %v2200
  %v2298 = vpack.c.b16 %v2203, %v2202
  %v2299 = vpack.c.b16 %v2205, %v2204
  %v2300 = vpack.c.b16 %v2207, %v2206
  %v2301 = vpack.c.b16 %v2209, %v2208
  %v2302 = vpack.c.b16 %v2211, %v2210
  %v2303 = vpack.c.b16 %v2213, %v2212
  %v2304 = vpack.c.b16 %v2215, %v2214
  %v2305 = vpack.c.b16 %v2217, %v2216
  %v2306 = vpack.c.b16 %v2219, %v2218
  %v2307 = vpack.c.b16 %v2221, %v2220
  %v2308 = vpack.c.b16 %v2223, %v2222
  %v2309 = vpack.c.b16 %v2225, %v2224
  %v2310 = vpack.c.b16 %v2227, %v2226
  %v2311 = vpack.c.b16 %v2229, %v2228
  %v2312 = vpack.c.b16 %v2231, %v2230
  %v2313 = vpack.c.b16 %v2233, %v2232
  %v2314 = vpack.c.b16 %v2235, %v2234
  %v2315 = vpack.c.b16 %v2237, %v2236
  %v2316 = vpack.c.b16 %v2239, %v2238
  %v2317 = vpack.c.b16 %v2241, %v2240
  %v2318 = vpack.c.b16 %v2243, %v2242
  %v2319 = vpack.c.b16 %v2245, %v2244
  %v2320 = vpack.c.b16 %v2247, %v2246
  %v2321 = vpack.c.b16 %v2249, %v2248
  %2394 = vmatpush.bf16.msra.mxu0 %v2257
  %2395 = vmatpush.bf16.msra.mxu0 %v2256
  %2396 = vmatpush.bf16.msra.mxu0 %v2255
  %2397 = vmatpush.bf16.msra.mxu0 %v2254
  %2398 = vmatpush.bf16.msra.mxu0 %v2253
  %2399 = vmatpush.bf16.msra.mxu0 %v2252
  %2400 = vmatpush.bf16.msra.mxu0 %v2251
  %2401 = vmatpush.bf16.msra.mxu0 %v2250
  %2402 = vmatmul.bf16.gmra.mxu0 %v1546
  %v2403 = vpop.f32.mrf.mxu0
  %v2404 = vadd.f32 0.0, %v2403
  %v2405 = vpop.f32.mrf.mxu0
  %v2406 = vadd.f32 0.0, %v2405
  %2407 = vmatmul.bf16.gmra.mxu0 %v1547
  %v2408 = vpop.f32.mrf.mxu0
  %v2409 = vadd.f32 0.0, %v2408
  %v2410 = vpop.f32.mrf.mxu0
  %v2411 = vadd.f32 0.0, %v2410
  %2412 = vmatmul.bf16.gmra.mxu0 %v1548
  %v2413 = vpop.f32.mrf.mxu0
  %v2414 = vadd.f32 0.0, %v2413
  %v2415 = vpop.f32.mrf.mxu0
  %v2416 = vadd.f32 0.0, %v2415
  %2417 = vmatmul.bf16.gmra.mxu0 %v1549
  %v2418 = vpop.f32.mrf.mxu0
  %v2419 = vadd.f32 0.0, %v2418
  %v2420 = vpop.f32.mrf.mxu0
  %v2421 = vadd.f32 0.0, %v2420
  %2422 = vmatmul.bf16.gmra.mxu0 %v1550
  %v2423 = vpop.f32.mrf.mxu0
  %v2424 = vadd.f32 0.0, %v2423
  %v2425 = vpop.f32.mrf.mxu0
  %v2426 = vadd.f32 0.0, %v2425
  %2427 = vmatmul.bf16.gmra.mxu0 %v1551
  %v2428 = vpop.f32.mrf.mxu0
  %v2429 = vadd.f32 0.0, %v2428
  %v2430 = vpop.f32.mrf.mxu0
  %v2431 = vadd.f32 0.0, %v2430
  %2432 = vmatmul.bf16.gmra.mxu0 %v1552
  %v2433 = vpop.f32.mrf.mxu0
  %v2434 = vadd.f32 0.0, %v2433
  %v2435 = vpop.f32.mrf.mxu0
  %v2436 = vadd.f32 0.0, %v2435
  %2437 = vdwg.mxu0
  %2438 = vmatpush.bf16.msra.mxu0 %v2265
  %2439 = vmatpush.bf16.msra.mxu0 %v2264
  %2440 = vmatpush.bf16.msra.mxu0 %v2263
  %2441 = vmatpush.bf16.msra.mxu0 %v2262
  %2442 = vmatpush.bf16.msra.mxu0 %v2261
  %2443 = vmatpush.bf16.msra.mxu0 %v2260
  %2444 = vmatpush.bf16.msra.mxu0 %v2259
  %2445 = vmatpush.bf16.msra.mxu0 %v2258
  %2446 = vmatmul.bf16.gmra.mxu0 %v1588
  %v2447 = vpop.f32.mrf.mxu0
  %v2448 = vadd.f32 %v2404, %v2447
  %v2449 = vpop.f32.mrf.mxu0
  %v2450 = vadd.f32 %v2406, %v2449
  %2451 = vmatmul.bf16.gmra.mxu0 %v1589
  %v2452 = vpop.f32.mrf.mxu0
  %v2453 = vadd.f32 %v2409, %v2452
  %v2454 = vpop.f32.mrf.mxu0
  %v2455 = vadd.f32 %v2411, %v2454
  %2456 = vmatmul.bf16.gmra.mxu0 %v1590
  %v2457 = vpop.f32.mrf.mxu0
  %v2458 = vadd.f32 %v2414, %v2457
  %v2459 = vpop.f32.mrf.mxu0
  %v2460 = vadd.f32 %v2416, %v2459
  %2461 = vmatmul.bf16.gmra.mxu0 %v1591
  %v2462 = vpop.f32.mrf.mxu0
  %v2463 = vadd.f32 %v2419, %v2462
  %v2464 = vpop.f32.mrf.mxu0
  %v2465 = vadd.f32 %v2421, %v2464
  %2466 = vmatmul.bf16.gmra.mxu0 %v1592
  %v2467 = vpop.f32.mrf.mxu0
  %v2468 = vadd.f32 %v2424, %v2467
  %v2469 = vpop.f32.mrf.mxu0
  %v2470 = vadd.f32 %v2426, %v2469
  %2471 = vmatmul.bf16.gmra.mxu0 %v1593
  %v2472 = vpop.f32.mrf.mxu0
  %v2473 = vadd.f32 %v2429, %v2472
  %v2474 = vpop.f32.mrf.mxu0
  %v2475 = vadd.f32 %v2431, %v2474
  %2476 = vmatmul.bf16.gmra.mxu0 %v1594
  %v2477 = vpop.f32.mrf.mxu0
  %v2478 = vadd.f32 %v2434, %v2477
  %v2479 = vpop.f32.mrf.mxu0
  %v2480 = vadd.f32 %v2436, %v2479
  %2481 = vdwg.mxu0
  %2482 = vmatpush.bf16.msra.mxu0 %v2273
  %2483 = vmatpush.bf16.msra.mxu0 %v2272
  %2484 = vmatpush.bf16.msra.mxu0 %v2271
  %2485 = vmatpush.bf16.msra.mxu0 %v2270
  %2486 = vmatpush.bf16.msra.mxu0 %v2269
  %2487 = vmatpush.bf16.msra.mxu0 %v2268
  %2488 = vmatpush.bf16.msra.mxu0 %v2267
  %2489 = vmatpush.bf16.msra.mxu0 %v2266
  %2490 = vmatmul.bf16.gmra.mxu0 %v1630
  %v2491 = vpop.f32.mrf.mxu0
  %v2492 = vadd.f32 %v2448, %v2491
  %v2493 = vpop.f32.mrf.mxu0
  %v2494 = vadd.f32 %v2450, %v2493
  %2495 = vmatmul.bf16.gmra.mxu0 %v1631
  %v2496 = vpop.f32.mrf.mxu0
  %v2497 = vadd.f32 %v2453, %v2496
  %v2498 = vpop.f32.mrf.mxu0
  %v2499 = vadd.f32 %v2455, %v2498
  %2500 = vmatmul.bf16.gmra.mxu0 %v1632
  %v2501 = vpop.f32.mrf.mxu0
  %v2502 = vadd.f32 %v2458, %v2501
  %v2503 = vpop.f32.mrf.mxu0
  %v2504 = vadd.f32 %v2460, %v2503
  %2505 = vmatmul.bf16.gmra.mxu0 %v1633
  %v2506 = vpop.f32.mrf.mxu0
  %v2507 = vadd.f32 %v2463, %v2506
  %v2508 = vpop.f32.mrf.mxu0
  %v2509 = vadd.f32 %v2465, %v2508
  %2510 = vmatmul.bf16.gmra.mxu0 %v1634
  %v2511 = vpop.f32.mrf.mxu0
  %v2512 = vadd.f32 %v2468, %v2511
  %v2513 = vpop.f32.mrf.mxu0
  %v2514 = vadd.f32 %v2470, %v2513
  %2515 = vmatmul.bf16.gmra.mxu0 %v1635
  %v2516 = vpop.f32.mrf.mxu0
  %v2517 = vadd.f32 %v2473, %v2516
  %v2518 = vpop.f32.mrf.mxu0
  %v2519 = vadd.f32 %v2475, %v2518
  %2520 = vmatmul.bf16.gmra.mxu0 %v1636
  %v2521 = vpop.f32.mrf.mxu0
  %v2522 = vadd.f32 %v2478, %v2521
  %v2523 = vpop.f32.mrf.mxu0
  %v2524 = vadd.f32 %v2480, %v2523
  %2525 = vdwg.mxu0
  %2526 = vmatpush.bf16.msra.mxu0 %v2281
  %2527 = vmatpush.bf16.msra.mxu0 %v2280
  %2528 = vmatpush.bf16.msra.mxu0 %v2279
  %2529 = vmatpush.bf16.msra.mxu0 %v2278
  %2530 = vmatpush.bf16.msra.mxu0 %v2277
  %2531 = vmatpush.bf16.msra.mxu0 %v2276
  %2532 = vmatpush.bf16.msra.mxu0 %v2275
  %2533 = vmatpush.bf16.msra.mxu0 %v2274
  %2534 = vmatmul.bf16.gmra.mxu0 %v1672
  %v2535 = vpop.f32.mrf.mxu0
  %v2536 = vadd.f32 %v2492, %v2535
  %v2537 = vpop.f32.mrf.mxu0
  %v2538 = vadd.f32 %v2494, %v2537
  %2539 = vmatmul.bf16.gmra.mxu0 %v1673
  %v2540 = vpop.f32.mrf.mxu0
  %v2541 = vadd.f32 %v2497, %v2540
  %v2542 = vpop.f32.mrf.mxu0
  %v2543 = vadd.f32 %v2499, %v2542
  %2544 = vmatmul.bf16.gmra.mxu0 %v1674
  %v2545 = vpop.f32.mrf.mxu0
  %v2546 = vadd.f32 %v2502, %v2545
  %v2547 = vpop.f32.mrf.mxu0
  %v2548 = vadd.f32 %v2504, %v2547
  %2549 = vmatmul.bf16.gmra.mxu0 %v1675
  %v2550 = vpop.f32.mrf.mxu0
  %v2551 = vadd.f32 %v2507, %v2550
  %v2552 = vpop.f32.mrf.mxu0
  %v2553 = vadd.f32 %v2509, %v2552
  %2554 = vmatmul.bf16.gmra.mxu0 %v1676
  %v2555 = vpop.f32.mrf.mxu0
  %v2556 = vadd.f32 %v2512, %v2555
  %v2557 = vpop.f32.mrf.mxu0
  %v2558 = vadd.f32 %v2514, %v2557
  %2559 = vmatmul.bf16.gmra.mxu0 %v1677
  %v2560 = vpop.f32.mrf.mxu0
  %v2561 = vadd.f32 %v2517, %v2560
  %v2562 = vpop.f32.mrf.mxu0
  %v2563 = vadd.f32 %v2519, %v2562
  %2564 = vmatmul.bf16.gmra.mxu0 %v1678
  %v2565 = vpop.f32.mrf.mxu0
  %v2566 = vadd.f32 %v2522, %v2565
  %v2567 = vpop.f32.mrf.mxu0
  %v2568 = vadd.f32 %v2524, %v2567
  %2569 = vdwg.mxu0
  %2570 = vmatpush.bf16.msra.mxu0 %v2289
  %2571 = vmatpush.bf16.msra.mxu0 %v2288
  %2572 = vmatpush.bf16.msra.mxu0 %v2287
  %2573 = vmatpush.bf16.msra.mxu0 %v2286
  %2574 = vmatpush.bf16.msra.mxu0 %v2285
  %2575 = vmatpush.bf16.msra.mxu0 %v2284
  %2576 = vmatpush.bf16.msra.mxu0 %v2283
  %2577 = vmatpush.bf16.msra.mxu0 %v2282
  %2578 = vmatmul.bf16.gmra.mxu0 %v1688
  %v2579 = vpop.f32.mrf.mxu0
  %v2580 = vadd.f32 %v2536, %v2579
  %v2581 = vpop.f32.mrf.mxu0
  %v2582 = vadd.f32 %v2538, %v2581
  %2583 = vmatmul.bf16.gmra.mxu0 %v1689
  %v2584 = vpop.f32.mrf.mxu0
  %v2585 = vadd.f32 %v2541, %v2584
  %v2586 = vpop.f32.mrf.mxu0
  %v2587 = vadd.f32 %v2543, %v2586
  %2588 = vmatmul.bf16.gmra.mxu0 %v1690
  %v2589 = vpop.f32.mrf.mxu0
  %v2590 = vadd.f32 %v2546, %v2589
  %v2591 = vpop.f32.mrf.mxu0
  %v2592 = vadd.f32 %v2548, %v2591
  %2593 = vmatmul.bf16.gmra.mxu0 %v1691
  %v2594 = vpop.f32.mrf.mxu0
  %v2595 = vadd.f32 %v2551, %v2594
  %v2596 = vpop.f32.mrf.mxu0
  %v2597 = vadd.f32 %v2553, %v2596
  %2598 = vmatmul.bf16.gmra.mxu0 %v1692
  %v2599 = vpop.f32.mrf.mxu0
  %v2600 = vadd.f32 %v2556, %v2599
  %v2601 = vpop.f32.mrf.mxu0
  %v2602 = vadd.f32 %v2558, %v2601
  %2603 = vmatmul.bf16.gmra.mxu0 %v1693
  %v2604 = vpop.f32.mrf.mxu0
  %v2605 = vadd.f32 %v2561, %v2604
  %v2606 = vpop.f32.mrf.mxu0
  %v2607 = vadd.f32 %v2563, %v2606
  %2608 = vmatmul.bf16.gmra.mxu0 %v1694
  %v2609 = vpop.f32.mrf.mxu0
  %v2610 = vadd.f32 %v2566, %v2609
  %v2611 = vpop.f32.mrf.mxu0
  %v2612 = vadd.f32 %v2568, %v2611
  %2613 = vdwg.mxu0
  %2614 = vmatpush.bf16.msra.mxu0 %v2297
  %2615 = vmatpush.bf16.msra.mxu0 %v2296
  %2616 = vmatpush.bf16.msra.mxu0 %v2295
  %2617 = vmatpush.bf16.msra.mxu0 %v2294
  %2618 = vmatpush.bf16.msra.mxu0 %v2293
  %2619 = vmatpush.bf16.msra.mxu0 %v2292
  %2620 = vmatpush.bf16.msra.mxu0 %v2291
  %2621 = vmatpush.bf16.msra.mxu0 %v2290
  %2622 = vmatmul.bf16.gmra.mxu0 %v1704
  %v2623 = vpop.f32.mrf.mxu0
  %v2624 = vadd.f32 %v2580, %v2623
  %v2625 = vpop.f32.mrf.mxu0
  %v2626 = vadd.f32 %v2582, %v2625
  %2627 = vmatmul.bf16.gmra.mxu0 %v1705
  %v2628 = vpop.f32.mrf.mxu0
  %v2629 = vadd.f32 %v2585, %v2628
  %v2630 = vpop.f32.mrf.mxu0
  %v2631 = vadd.f32 %v2587, %v2630
  %2632 = vmatmul.bf16.gmra.mxu0 %v1706
  %v2633 = vpop.f32.mrf.mxu0
  %v2634 = vadd.f32 %v2590, %v2633
  %v2635 = vpop.f32.mrf.mxu0
  %v2636 = vadd.f32 %v2592, %v2635
  %2637 = vmatmul.bf16.gmra.mxu0 %v1707
  %v2638 = vpop.f32.mrf.mxu0
  %v2639 = vadd.f32 %v2595, %v2638
  %v2640 = vpop.f32.mrf.mxu0
  %v2641 = vadd.f32 %v2597, %v2640
  %2642 = vmatmul.bf16.gmra.mxu0 %v1708
  %v2643 = vpop.f32.mrf.mxu0
  %v2644 = vadd.f32 %v2600, %v2643
  %v2645 = vpop.f32.mrf.mxu0
  %v2646 = vadd.f32 %v2602, %v2645
  %2647 = vmatmul.bf16.gmra.mxu0 %v1709
  %v2648 = vpop.f32.mrf.mxu0
  %v2649 = vadd.f32 %v2605, %v2648
  %v2650 = vpop.f32.mrf.mxu0
  %v2651 = vadd.f32 %v2607, %v2650
  %2652 = vmatmul.bf16.gmra.mxu0 %v1710
  %v2653 = vpop.f32.mrf.mxu0
  %v2654 = vadd.f32 %v2610, %v2653
  %v2655 = vpop.f32.mrf.mxu0
  %v2656 = vadd.f32 %v2612, %v2655
  %2657 = vdwg.mxu0
  %2658 = vmatpush.bf16.msra.mxu0 %v2305
  %2659 = vmatpush.bf16.msra.mxu0 %v2304
  %2660 = vmatpush.bf16.msra.mxu0 %v2303
  %2661 = vmatpush.bf16.msra.mxu0 %v2302
  %2662 = vmatpush.bf16.msra.mxu0 %v2301
  %2663 = vmatpush.bf16.msra.mxu0 %v2300
  %2664 = vmatpush.bf16.msra.mxu0 %v2299
  %2665 = vmatpush.bf16.msra.mxu0 %v2298
  %2666 = vmatmul.bf16.gmra.mxu0 %v1746
  %v2667 = vpop.f32.mrf.mxu0
  %v2668 = vadd.f32 %v2624, %v2667
  %v2669 = vpop.f32.mrf.mxu0
  %v2670 = vadd.f32 %v2626, %v2669
  %2671 = vmatmul.bf16.gmra.mxu0 %v1747
  %v2672 = vpop.f32.mrf.mxu0
  %v2673 = vadd.f32 %v2629, %v2672
  %v2674 = vpop.f32.mrf.mxu0
  %v2675 = vadd.f32 %v2631, %v2674
  %2676 = vmatmul.bf16.gmra.mxu0 %v1748
  %v2677 = vpop.f32.mrf.mxu0
  %v2678 = vadd.f32 %v2634, %v2677
  %v2679 = vpop.f32.mrf.mxu0
  %v2680 = vadd.f32 %v2636, %v2679
  %2681 = vmatmul.bf16.gmra.mxu0 %v1749
  %v2682 = vpop.f32.mrf.mxu0
  %v2683 = vadd.f32 %v2639, %v2682
  %v2684 = vpop.f32.mrf.mxu0
  %v2685 = vadd.f32 %v2641, %v2684
  %2686 = vmatmul.bf16.gmra.mxu0 %v1750
  %v2687 = vpop.f32.mrf.mxu0
  %v2688 = vadd.f32 %v2644, %v2687
  %v2689 = vpop.f32.mrf.mxu0
  %v2690 = vadd.f32 %v2646, %v2689
  %2691 = vmatmul.bf16.gmra.mxu0 %v1751
  %v2692 = vpop.f32.mrf.mxu0
  %v2693 = vadd.f32 %v2649, %v2692
  %v2694 = vpop.f32.mrf.mxu0
  %v2695 = vadd.f32 %v2651, %v2694
  %2696 = vmatmul.bf16.gmra.mxu0 %v1752
  %v2697 = vpop.f32.mrf.mxu0
  %v2698 = vadd.f32 %v2654, %v2697
  %v2699 = vpop.f32.mrf.mxu0
  %v2700 = vadd.f32 %v2656, %v2699
  %2701 = vdwg.mxu0
  %2702 = vmatpush.bf16.msra.mxu0 %v2313
  %2703 = vmatpush.bf16.msra.mxu0 %v2312
  %2704 = vmatpush.bf16.msra.mxu0 %v2311
  %2705 = vmatpush.bf16.msra.mxu0 %v2310
  %2706 = vmatpush.bf16.msra.mxu0 %v2309
  %2707 = vmatpush.bf16.msra.mxu0 %v2308
  %2708 = vmatpush.bf16.msra.mxu0 %v2307
  %2709 = vmatpush.bf16.msra.mxu0 %v2306
  %2710 = vmatmul.bf16.gmra.mxu0 %v1762
  %v2711 = vpop.f32.mrf.mxu0
  %v2712 = vadd.f32 %v2668, %v2711
  %v2713 = vpop.f32.mrf.mxu0
  %v2714 = vadd.f32 %v2670, %v2713
  %2715 = vmatmul.bf16.gmra.mxu0 %v1763
  %v2716 = vpop.f32.mrf.mxu0
  %v2717 = vadd.f32 %v2673, %v2716
  %v2718 = vpop.f32.mrf.mxu0
  %v2719 = vadd.f32 %v2675, %v2718
  %2720 = vmatmul.bf16.gmra.mxu0 %v1764
  %v2721 = vpop.f32.mrf.mxu0
  %v2722 = vadd.f32 %v2678, %v2721
  %v2723 = vpop.f32.mrf.mxu0
  %v2724 = vadd.f32 %v2680, %v2723
  %2725 = vmatmul.bf16.gmra.mxu0 %v1765
  %v2726 = vpop.f32.mrf.mxu0
  %v2727 = vadd.f32 %v2683, %v2726
  %v2728 = vpop.f32.mrf.mxu0
  %v2729 = vadd.f32 %v2685, %v2728
  %2730 = vmatmul.bf16.gmra.mxu0 %v1766
  %v2731 = vpop.f32.mrf.mxu0
  %v2732 = vadd.f32 %v2688, %v2731
  %v2733 = vpop.f32.mrf.mxu0
  %v2734 = vadd.f32 %v2690, %v2733
  %2735 = vmatmul.bf16.gmra.mxu0 %v1767
  %v2736 = vpop.f32.mrf.mxu0
  %v2737 = vadd.f32 %v2693, %v2736
  %v2738 = vpop.f32.mrf.mxu0
  %v2739 = vadd.f32 %v2695, %v2738
  %2740 = vmatmul.bf16.gmra.mxu0 %v1768
  %v2741 = vpop.f32.mrf.mxu0
  %v2742 = vadd.f32 %v2698, %v2741
  %v2743 = vpop.f32.mrf.mxu0
  %v2744 = vadd.f32 %v2700, %v2743
  %2745 = vdwg.mxu0
  %2746 = vmatpush.bf16.msra.mxu0 %v2321
  %2747 = vmatpush.bf16.msra.mxu0 %v2320
  %2748 = vmatpush.bf16.msra.mxu0 %v2319
  %2749 = vmatpush.bf16.msra.mxu0 %v2318
  %2750 = vmatpush.bf16.msra.mxu0 %v2317
  %2751 = vmatpush.bf16.msra.mxu0 %v2316
  %2752 = vmatpush.bf16.msra.mxu0 %v2315
  %2753 = vmatpush.bf16.msra.mxu0 %v2314
  %2754 = vmatmul.bf16.gmra.mxu0 %v1804
  %v2755 = vpop.f32.mrf.mxu0
  %v2756 = vadd.f32 %v2712, %v2755
  %v2757 = vpop.f32.mrf.mxu0
  %v2758 = vadd.f32 %v2714, %v2757
  %2759 = vmatmul.bf16.gmra.mxu0 %v1805
  %v2760 = vpop.f32.mrf.mxu0
  %v2761 = vadd.f32 %v2717, %v2760
  %v2762 = vpop.f32.mrf.mxu0
  %v2763 = vadd.f32 %v2719, %v2762
  %2764 = vmatmul.bf16.gmra.mxu0 %v1806
  %v2765 = vpop.f32.mrf.mxu0
  %v2766 = vadd.f32 %v2722, %v2765
  %v2767 = vpop.f32.mrf.mxu0
  %v2768 = vadd.f32 %v2724, %v2767
  %2769 = vmatmul.bf16.gmra.mxu0 %v1807
  %v2770 = vpop.f32.mrf.mxu0
  %v2771 = vadd.f32 %v2727, %v2770
  %v2772 = vpop.f32.mrf.mxu0
  %v2773 = vadd.f32 %v2729, %v2772
  %2774 = vmatmul.bf16.gmra.mxu0 %v1808
  %v2775 = vpop.f32.mrf.mxu0
  %v2776 = vadd.f32 %v2732, %v2775
  %v2777 = vpop.f32.mrf.mxu0
  %v2778 = vadd.f32 %v2734, %v2777
  %2779 = vmatmul.bf16.gmra.mxu0 %v1809
  %v2780 = vpop.f32.mrf.mxu0
  %v2781 = vadd.f32 %v2737, %v2780
  %v2782 = vpop.f32.mrf.mxu0
  %v2783 = vadd.f32 %v2739, %v2782
  %2784 = vmatmul.bf16.gmra.mxu0 %v1810
  %v2785 = vpop.f32.mrf.mxu0
  %v2786 = vadd.f32 %v2742, %v2785
  %v2787 = vpop.f32.mrf.mxu0
  %v2788 = vadd.f32 %v2744, %v2787
  %2789 = vdwg.mxu0
  %v2790 = vld [vmem:[%s5] sm:$0xff]
  %v2791 = vld [vmem:[%s5 + $0x8] sm:$0xff]
  %v2792 = vld [vmem:[%s5 + $0x10] sm:$0xff]
  %v2793 = vld [vmem:[%s5 + $0x18] sm:$0xff]
  %v2794 = vld [vmem:[%s5 + $0x20] sm:$0xff]
  %v2795 = vld [vmem:[%s5 + $0x28] sm:$0xff]
  %v2796 = vld [vmem:[%s5 + $0x30] sm:$0xff]
  %v2797 = vld [vmem:[%s5 + $0x38] sm:$0xff]
  %v2798 = vld [vmem:[%s5 + $0x40] sm:$0xff]
  %v2799 = vld [vmem:[%s5 + $0x48] sm:$0xff]
  %v2800 = vld [vmem:[%s5 + $0x50] sm:$0xff]
  %v2801 = vld [vmem:[%s5 + $0x58] sm:$0xff]
  %v2802 = vld [vmem:[%s5 + $0x60] sm:$0xff]
  %v2803 = vld [vmem:[%s5 + $0x68] sm:$0xff]
  %2805 = vset.pattern.permute.xlu0 0
  %2806 = vperm.xlu0 %2805, %v2790
  %v2807 = vpop.permute.xlu0 %2806
  %2810 = vset.pattern.permute.xlu0 0
  %2811 = vperm.xlu0 %2810, %v2791
  %v2812 = vpop.permute.xlu0 %2811
  %2815 = vset.pattern.permute.xlu0 0
  %2816 = vperm.xlu0 %2815, %v2792
  %v2817 = vpop.permute.xlu0 %2816
  %2820 = vset.pattern.permute.xlu0 0
  %2821 = vperm.xlu0 %2820, %v2793
  %v2822 = vpop.permute.xlu0 %2821
  %2825 = vset.pattern.permute.xlu0 0
  %2826 = vperm.xlu0 %2825, %v2794
  %v2827 = vpop.permute.xlu0 %2826
  %2830 = vset.pattern.permute.xlu0 0
  %2831 = vperm.xlu0 %2830, %v2795
  %v2832 = vpop.permute.xlu0 %2831
  %2835 = vset.pattern.permute.xlu0 0
  %2836 = vperm.xlu0 %2835, %v2796
  %v2837 = vpop.permute.xlu0 %2836
  %2840 = vset.pattern.permute.xlu0 0
  %2841 = vperm.xlu0 %2840, %v2797
  %v2842 = vpop.permute.xlu0 %2841
  %2845 = vset.pattern.permute.xlu0 0
  %2846 = vperm.xlu0 %2845, %v2798
  %v2847 = vpop.permute.xlu0 %2846
  %2850 = vset.pattern.permute.xlu0 0
  %2851 = vperm.xlu0 %2850, %v2799
  %v2852 = vpop.permute.xlu0 %2851
  %2855 = vset.pattern.permute.xlu0 0
  %2856 = vperm.xlu0 %2855, %v2800
  %v2857 = vpop.permute.xlu0 %2856
  %2860 = vset.pattern.permute.xlu0 0
  %2861 = vperm.xlu0 %2860, %v2801
  %v2862 = vpop.permute.xlu0 %2861
  %2865 = vset.pattern.permute.xlu0 0
  %2866 = vperm.xlu0 %2865, %v2802
  %v2867 = vpop.permute.xlu0 %2866
  %2870 = vset.pattern.permute.xlu0 0
  %2871 = vperm.xlu0 %2870, %v2803
  %v2872 = vpop.permute.xlu0 %2871
  %v2874 = vmul.f32 %v2756, %v2807
  %v2875 = vmul.f32 %v2758, %v2812
  %v2876 = vmul.f32 %v2761, %v2817
  %v2877 = vmul.f32 %v2763, %v2822
  %v2878 = vmul.f32 %v2766, %v2827
  %v2879 = vmul.f32 %v2768, %v2832
  %v2880 = vmul.f32 %v2771, %v2837
  %v2881 = vmul.f32 %v2773, %v2842
  %v2882 = vmul.f32 %v2776, %v2847
  %v2883 = vmul.f32 %v2778, %v2852
  %v2884 = vmul.f32 %v2781, %v2857
  %v2885 = vmul.f32 %v2783, %v2862
  %v2886 = vmul.f32 %v2786, %v2867
  %v2887 = vmul.f32 %v2788, %v2872
  %v2888 = vld [vmem:[%s4 + $0x2] sm:$0x1]
  %v2889 = vld [vmem:[%s4 + $0x3] sm:$0x1]
  %v2890 = vadd.f32 %v2874, %v2875
  %v2891 = vadd.f32 %v2890, %v2876
  %v2892 = vadd.f32 %v2891, %v2877
  %v2893 = vadd.f32 %v2892, %v2878
  %v2894 = vadd.f32 %v2893, %v2879
  %v2895 = vadd.f32 %v2894, %v2880
  %v2896 = vadd.f32 %v2895, %v2881
  %v2897 = vadd.f32 %v2896, %v2882
  %v2898 = vadd.f32 %v2897, %v2883
  %v2899 = vadd.f32 %v2898, %v2884
  %v2900 = vadd.f32 %v2899, %v2885
  %v2901 = vadd.f32 %v2900, %v2886
  %v2902 = vadd.f32 %v2901, %v2887
  %v2903 = vrot.slane %v2902, 4
  %v2904 = vadd.f32 %v2902, %v2903
  %v2905 = vrot.slane %v2904, 2
  %v2906 = vadd.f32 %v2904, %v2905
  %v2907 = vrot.slane %v2906, 1
  %v2908 = vadd.f32 %v2906, %v2907
  %v2909 = vmul.f32 %v2874, %v2874
  %v2910 = vmul.f32 %v2875, %v2875
  %v2911 = vmul.f32 %v2876, %v2876
  %v2912 = vmul.f32 %v2877, %v2877
  %v2913 = vmul.f32 %v2878, %v2878
  %v2914 = vmul.f32 %v2879, %v2879
  %v2915 = vmul.f32 %v2880, %v2880
  %v2916 = vmul.f32 %v2881, %v2881
  %v2917 = vmul.f32 %v2882, %v2882
  %v2918 = vmul.f32 %v2883, %v2883
  %v2919 = vmul.f32 %v2884, %v2884
  %v2920 = vmul.f32 %v2885, %v2885
  %v2921 = vmul.f32 %v2886, %v2886
  %v2922 = vmul.f32 %v2887, %v2887
  %v2923 = vadd.f32 %v2909, %v2910
  %v2924 = vadd.f32 %v2923, %v2911
  %v2925 = vadd.f32 %v2924, %v2912
  %v2926 = vadd.f32 %v2925, %v2913
  %v2927 = vadd.f32 %v2926, %v2914
  %v2928 = vadd.f32 %v2927, %v2915
  %v2929 = vadd.f32 %v2928, %v2916
  %v2930 = vadd.f32 %v2929, %v2917
  %v2931 = vadd.f32 %v2930, %v2918
  %v2932 = vadd.f32 %v2931, %v2919
  %v2933 = vadd.f32 %v2932, %v2920
  %v2934 = vadd.f32 %v2933, %v2921
  %v2935 = vadd.f32 %v2934, %v2922
  %v2936 = vrot.slane %v2935, 4
  %v2937 = vadd.f32 %v2935, %v2936
  %v2938 = vrot.slane %v2937, 2
  %v2939 = vadd.f32 %v2937, %v2938
  %v2940 = vrot.slane %v2939, 1
  %v2941 = vadd.f32 %v2939, %v2940
  %v2942 = vmul.f32 %v2908, 0.02
  %v2943 = vmul.f32 %v2941, 0.02
  %v2944 = vmul.f32 %v2942, %v2942
  %v2945 = vsub.f32 %v2943, %v2944
  %v2946 = vadd.f32 %v2945, 1e-05
  %v2947 = vrsqrt.pop %v2946
  %v2948 = vmul.f32 %v2947, %v2946
  %v2949 = vmul.f32 %v2948, %v2947
  %v2950 = vmul.f32 0.5, %v2949
  %v2951 = vsub.f32 1.5, %v2950
  %v2952 = vmul.f32 %v2947, %v2951
  %vm2953 = vweird.f32 %v2946
  %vm2954 = vweird.f32 %v2947
  %vm2955 = vmor %vm2953, %vm2954
  %v2956 = vsel %vm2955, %v2947, %v2952
  %v2957 = vmul.f32 %v2888, %v2956
  %v2958 = vmul.f32 %v2942, %v2957
  %v2959 = vsub.f32 %v2889, %v2958
  %v2960 = vperm.slane %v2957, 0
  %v2961 = vmul.f32 %v2874, %v2960
  %v2962 = vmul.f32 %v2875, %v2960
  %v2963 = vmul.f32 %v2876, %v2960
  %v2964 = vmul.f32 %v2877, %v2960
  %v2965 = vmul.f32 %v2878, %v2960
  %v2966 = vmul.f32 %v2879, %v2960
  %v2967 = vmul.f32 %v2880, %v2960
  %v2968 = vmul.f32 %v2881, %v2960
  %v2969 = vmul.f32 %v2882, %v2960
  %v2970 = vmul.f32 %v2883, %v2960
  %v2971 = vmul.f32 %v2884, %v2960
  %v2972 = vmul.f32 %v2885, %v2960
  %v2973 = vmul.f32 %v2886, %v2960
  %v2974 = vmul.f32 %v2887, %v2960
  %v2975 = vperm.slane %v2959, 0
  %v2976 = vadd.f32 %v2961, %v2975
  %v2977 = vadd.f32 %v2962, %v2975
  %v2978 = vadd.f32 %v2963, %v2975
  %v2979 = vadd.f32 %v2964, %v2975
  %v2980 = vadd.f32 %v2965, %v2975
  %v2981 = vadd.f32 %v2966, %v2975
  %v2982 = vadd.f32 %v2967, %v2975
  %v2983 = vadd.f32 %v2968, %v2975
  %v2984 = vadd.f32 %v2969, %v2975
  %v2985 = vadd.f32 %v2970, %v2975
  %v2986 = vadd.f32 %v2971, %v2975
  %v2987 = vadd.f32 %v2972, %v2975
  %v2988 = vadd.f32 %v2973, %v2975
  %v2989 = vadd.f32 %v2974, %v2975
  %vm2990 = vcmp.gt.f32.partialorder %v2976, 0.0
  %vm2991 = vcmp.gt.f32.partialorder %v2977, 0.0
  %vm2992 = vcmp.gt.f32.partialorder %v2978, 0.0
  %vm2993 = vcmp.gt.f32.partialorder %v2979, 0.0
  %vm2994 = vcmp.gt.f32.partialorder %v2980, 0.0
  %vm2995 = vcmp.gt.f32.partialorder %v2981, 0.0
  %vm2996 = vcmp.gt.f32.partialorder %v2982, 0.0
  %vm2997 = vcmp.gt.f32.partialorder %v2983, 0.0
  %vm2998 = vcmp.gt.f32.partialorder %v2984, 0.0
  %vm2999 = vcmp.gt.f32.partialorder %v2985, 0.0
  %vm3000 = vcmp.gt.f32.partialorder %v2986, 0.0
  %vm3001 = vcmp.gt.f32.partialorder %v2987, 0.0
  %vm3002 = vcmp.gt.f32.partialorder %v2988, 0.0
  %vm3003 = vcmp.gt.f32.partialorder %v2989, 0.0
  %v3004 = vmul.f32 %v2976, 0.1
  %v3005 = vmul.f32 %v2977, 0.1
  %v3006 = vmul.f32 %v2978, 0.1
  %v3007 = vmul.f32 %v2979, 0.1
  %v3008 = vmul.f32 %v2980, 0.1
  %v3009 = vmul.f32 %v2981, 0.1
  %v3010 = vmul.f32 %v2982, 0.1
  %v3011 = vmul.f32 %v2983, 0.1
  %v3012 = vmul.f32 %v2984, 0.1
  %v3013 = vmul.f32 %v2985, 0.1
  %v3014 = vmul.f32 %v2986, 0.1
  %v3015 = vmul.f32 %v2987, 0.1
  %v3016 = vmul.f32 %v2988, 0.1
  %v3017 = vmul.f32 %v2989, 0.1
  %v3018 = vsel %vm2990, %v2976, %v3004
  %v3019 = vsel %vm2991, %v2977, %v3005
  %v3020 = vsel %vm2992, %v2978, %v3006
  %v3021 = vsel %vm2993, %v2979, %v3007
  %v3022 = vsel %vm2994, %v2980, %v3008
  %v3023 = vsel %vm2995, %v2981, %v3009
  %v3024 = vsel %vm2996, %v2982, %v3010
  %v3025 = vsel %vm2997, %v2983, %v3011
  %v3026 = vsel %vm2998, %v2984, %v3012
  %v3027 = vsel %vm2999, %v2985, %v3013
  %v3028 = vsel %vm3000, %v2986, %v3014
  %v3029 = vsel %vm3001, %v2987, %v3015
  %v3030 = vsel %vm3002, %v2988, %v3016
  %v3031 = vsel %vm3003, %v2989, %v3017
  %3032 = vst [vmem:[#allocation3] sm:$0xff] %v3018
  %3033 = vst [vmem:[#allocation3 + $0x8] sm:$0xff] %v3019
  %3034 = vst [vmem:[#allocation3 + $0x10] sm:$0xff] %v3020
  %3035 = vst [vmem:[#allocation3 + $0x18] sm:$0xff] %v3021
  %3036 = vst [vmem:[#allocation3 + $0x20] sm:$0xff] %v3022
  %3037 = vst [vmem:[#allocation3 + $0x28] sm:$0xff] %v3023
  %3038 = vst [vmem:[#allocation3 + $0x30] sm:$0xff] %v3024
  %3039 = vst [vmem:[#allocation3 + $0x38] sm:$0xff] %v3025
  %3040 = vst [vmem:[#allocation3 + $0x40] sm:$0xff] %v3026
  %3041 = vst [vmem:[#allocation3 + $0x48] sm:$0xff] %v3027
  %3042 = vst [vmem:[#allocation3 + $0x50] sm:$0xff] %v3028
  %3043 = vst [vmem:[#allocation3 + $0x58] sm:$0xff] %v3029
  %3044 = vst [vmem:[#allocation3 + $0x60] sm:$0xff] %v3030
  %3045 = vst [vmem:[#allocation3 + $0x68] sm:$0xff] %v3031
  %v3046 = vld [vmem:[#allocation3] sm:$0xff]
  %v3047 = vld [vmem:[#allocation3 + $0x8] sm:$0xff]
  %v3048 = vld [vmem:[#allocation3 + $0x10] sm:$0xff]
  %v3049 = vld [vmem:[#allocation3 + $0x18] sm:$0xff]
  %v3050 = vld [vmem:[#allocation3 + $0x20] sm:$0xff]
  %v3051 = vld [vmem:[#allocation3 + $0x28] sm:$0xff]
  %v3052 = vld [vmem:[#allocation3 + $0x30] sm:$0xff]
  %v3053 = vld [vmem:[#allocation3 + $0x38] sm:$0xff]
  %v3054 = vld [vmem:[#allocation3 + $0x40] sm:$0xff]
  %v3055 = vld [vmem:[#allocation3 + $0x48] sm:$0xff]
  %v3056 = vld [vmem:[#allocation3 + $0x50] sm:$0xff]
  %v3057 = vld [vmem:[#allocation3 + $0x58] sm:$0xff]
  %v3058 = vld [vmem:[#allocation3 + $0x60] sm:$0xff]
  %v3059 = vld [vmem:[#allocation3 + $0x68] sm:$0xff]
  %v3060 = vpack.c.bf16 %v3046, %v3046
  %v3061 = vpack.c.bf16 %v3047, %v3047
  %v3062 = vpack.c.bf16 %v3048, %v3048
  %v3063 = vpack.c.bf16 %v3049, %v3049
  %v3064 = vpack.c.bf16 %v3050, %v3050
  %v3065 = vpack.c.bf16 %v3051, %v3051
  %v3066 = vpack.c.bf16 %v3052, %v3052
  %v3067 = vpack.c.bf16 %v3053, %v3053
  %v3068 = vpack.c.bf16 %v3054, %v3054
  %v3069 = vpack.c.bf16 %v3055, %v3055
  %v3070 = vpack.c.bf16 %v3056, %v3056
  %v3071 = vpack.c.bf16 %v3057, %v3057
  %v3072 = vpack.c.bf16 %v3058, %v3058
  %v3073 = vpack.c.bf16 %v3059, %v3059
  %v3074 = vld [vmem:[#allocation3 + $0x1] sm:$0xff]
  %v3075 = vld [vmem:[#allocation3 + $0x9] sm:$0xff]
  %v3076 = vld [vmem:[#allocation3 + $0x11] sm:$0xff]
  %v3077 = vld [vmem:[#allocation3 + $0x19] sm:$0xff]
  %v3078 = vld [vmem:[#allocation3 + $0x21] sm:$0xff]
  %v3079 = vld [vmem:[#allocation3 + $0x29] sm:$0xff]
  %v3080 = vld [vmem:[#allocation3 + $0x31] sm:$0xff]
  %v3081 = vld [vmem:[#allocation3 + $0x39] sm:$0xff]
  %v3082 = vld [vmem:[#allocation3 + $0x41] sm:$0xff]
  %v3083 = vld [vmem:[#allocation3 + $0x49] sm:$0xff]
  %v3084 = vld [vmem:[#allocation3 + $0x51] sm:$0xff]
  %v3085 = vld [vmem:[#allocation3 + $0x59] sm:$0xff]
  %v3086 = vld [vmem:[#allocation3 + $0x61] sm:$0xff]
  %v3087 = vld [vmem:[#allocation3 + $0x69] sm:$0xff]
  %v3088 = vpack.c.bf16 %v3074, %v3074
  %v3089 = vpack.c.bf16 %v3075, %v3075
  %v3090 = vpack.c.bf16 %v3076, %v3076
  %v3091 = vpack.c.bf16 %v3077, %v3077
  %v3092 = vpack.c.bf16 %v3078, %v3078
  %v3093 = vpack.c.bf16 %v3079, %v3079
  %v3094 = vpack.c.bf16 %v3080, %v3080
  %v3095 = vpack.c.bf16 %v3081, %v3081
  %v3096 = vpack.c.bf16 %v3082, %v3082
  %v3097 = vpack.c.bf16 %v3083, %v3083
  %v3098 = vpack.c.bf16 %v3084, %v3084
  %v3099 = vpack.c.bf16 %v3085, %v3085
  %v3100 = vpack.c.bf16 %v3086, %v3086
  %v3101 = vpack.c.bf16 %v3087, %v3087
  %v3102 = vld [vmem:[#allocation3 + $0x2] sm:$0xff]
  %v3103 = vld [vmem:[#allocation3 + $0xa] sm:$0xff]
  %v3104 = vld [vmem:[#allocation3 + $0x12] sm:$0xff]
  %v3105 = vld [vmem:[#allocation3 + $0x1a] sm:$0xff]
  %v3106 = vld [vmem:[#allocation3 + $0x22] sm:$0xff]
  %v3107 = vld [vmem:[#allocation3 + $0x2a] sm:$0xff]
  %v3108 = vld [vmem:[#allocation3 + $0x32] sm:$0xff]
  %v3109 = vld [vmem:[#allocation3 + $0x3a] sm:$0xff]
  %v3110 = vld [vmem:[#allocation3 + $0x42] sm:$0xff]
  %v3111 = vld [vmem:[#allocation3 + $0x4a] sm:$0xff]
  %v3112 = vld [vmem:[#allocation3 + $0x52] sm:$0xff]
  %v3113 = vld [vmem:[#allocation3 + $0x5a] sm:$0xff]
  %v3114 = vld [vmem:[#allocation3 + $0x62] sm:$0xff]
  %v3115 = vld [vmem:[#allocation3 + $0x6a] sm:$0xff]
  %v3116 = vpack.c.bf16 %v3102, %v3102
  %v3117 = vpack.c.bf16 %v3103, %v3103
  %v3118 = vpack.c.bf16 %v3104, %v3104
  %v3119 = vpack.c.bf16 %v3105, %v3105
  %v3120 = vpack.c.bf16 %v3106, %v3106
  %v3121 = vpack.c.bf16 %v3107, %v3107
  %v3122 = vpack.c.bf16 %v3108, %v3108
  %v3123 = vpack.c.bf16 %v3109, %v3109
  %v3124 = vpack.c.bf16 %v3110, %v3110
  %v3125 = vpack.c.bf16 %v3111, %v3111
  %v3126 = vpack.c.bf16 %v3112, %v3112
  %v3127 = vpack.c.bf16 %v3113, %v3113
  %v3128 = vpack.c.bf16 %v3114, %v3114
  %v3129 = vpack.c.bf16 %v3115, %v3115
  %v3130 = vld [vmem:[#allocation3 + $0x7] sm:$0xff]
  %v3131 = vld [vmem:[#allocation3 + $0xf] sm:$0xff]
  %v3132 = vld [vmem:[#allocation3 + $0x17] sm:$0xff]
  %v3133 = vld [vmem:[#allocation3 + $0x1f] sm:$0xff]
  %v3134 = vld [vmem:[#allocation3 + $0x27] sm:$0xff]
  %v3135 = vld [vmem:[#allocation3 + $0x2f] sm:$0xff]
  %v3136 = vld [vmem:[#allocation3 + $0x37] sm:$0xff]
  %v3137 = vld [vmem:[#allocation3 + $0x3f] sm:$0xff]
  %v3138 = vld [vmem:[#allocation3 + $0x47] sm:$0xff]
  %v3139 = vld [vmem:[#allocation3 + $0x4f] sm:$0xff]
  %v3140 = vld [vmem:[#allocation3 + $0x57] sm:$0xff]
  %v3141 = vld [vmem:[#allocation3 + $0x5f] sm:$0xff]
  %v3142 = vld [vmem:[#allocation3 + $0x67] sm:$0xff]
  %v3143 = vld [vmem:[#allocation3 + $0x6f] sm:$0xff]
  %v3144 = vpack.c.bf16 %v3130, %v3130
  %v3145 = vpack.c.bf16 %v3131, %v3131
  %v3146 = vpack.c.bf16 %v3132, %v3132
  %v3147 = vpack.c.bf16 %v3133, %v3133
  %v3148 = vpack.c.bf16 %v3134, %v3134
  %v3149 = vpack.c.bf16 %v3135, %v3135
  %v3150 = vpack.c.bf16 %v3136, %v3136
  %v3151 = vpack.c.bf16 %v3137, %v3137
  %v3152 = vpack.c.bf16 %v3138, %v3138
  %v3153 = vpack.c.bf16 %v3139, %v3139
  %v3154 = vpack.c.bf16 %v3140, %v3140
  %v3155 = vpack.c.bf16 %v3141, %v3141
  %v3156 = vpack.c.bf16 %v3142, %v3142
  %v3157 = vpack.c.bf16 %v3143, %v3143
  %v3158 = vld [vmem:[#allocation3 + $0x70] sm:$0xff]
  %v3159 = vpack.c.bf16 %v3158, %v3158
  %v3160 = vld [vmem:[#allocation3 + $0x71] sm:$0xff]
  %v3161 = vpack.c.bf16 %v3160, %v3160
  %v3162 = vld [vmem:[#allocation3 + $0xe] sm:$0xff]
  %v3163 = vld [vmem:[#allocation3 + $0x16] sm:$0xff]
  %v3164 = vld [vmem:[#allocation3 + $0x1e] sm:$0xff]
  %v3165 = vld [vmem:[#allocation3 + $0x26] sm:$0xff]
  %v3166 = vld [vmem:[#allocation3 + $0x2e] sm:$0xff]
  %v3167 = vld [vmem:[#allocation3 + $0x36] sm:$0xff]
  %v3168 = vld [vmem:[#allocation3 + $0x3e] sm:$0xff]
  %v3169 = vld [vmem:[#allocation3 + $0x46] sm:$0xff]
  %v3170 = vld [vmem:[#allocation3 + $0x4e] sm:$0xff]
  %v3171 = vld [vmem:[#allocation3 + $0x56] sm:$0xff]
  %v3172 = vld [vmem:[#allocation3 + $0x5e] sm:$0xff]
  %v3173 = vld [vmem:[#allocation3 + $0x66] sm:$0xff]
  %v3174 = vld [vmem:[#allocation3 + $0x6e] sm:$0xff]
  %v3175 = vld [vmem:[#allocation3 + $0x76] sm:$0xff]
  %v3176 = vpack.c.bf16 %v3162, %v3162
  %v3177 = vpack.c.bf16 %v3163, %v3163
  %v3178 = vpack.c.bf16 %v3164, %v3164
  %v3179 = vpack.c.bf16 %v3165, %v3165
  %v3180 = vpack.c.bf16 %v3166, %v3166
  %v3181 = vpack.c.bf16 %v3167, %v3167
  %v3182 = vpack.c.bf16 %v3168, %v3168
  %v3183 = vpack.c.bf16 %v3169, %v3169
  %v3184 = vpack.c.bf16 %v3170, %v3170
  %v3185 = vpack.c.bf16 %v3171, %v3171
  %v3186 = vpack.c.bf16 %v3172, %v3172
  %v3187 = vpack.c.bf16 %v3173, %v3173
  %v3188 = vpack.c.bf16 %v3174, %v3174
  %v3189 = vpack.c.bf16 %v3175, %v3175
  %v3190 = vld [vmem:[#allocation3 + $0x77] sm:$0xff]
  %v3191 = vpack.c.bf16 %v3190, %v3190
  %v3192 = vld [vmem:[#allocation3 + $0x10] sm:$0xff]
  %v3193 = vld [vmem:[#allocation3 + $0x18] sm:$0xff]
  %v3194 = vld [vmem:[#allocation3 + $0x20] sm:$0xff]
  %v3195 = vld [vmem:[#allocation3 + $0x28] sm:$0xff]
  %v3196 = vld [vmem:[#allocation3 + $0x30] sm:$0xff]
  %v3197 = vld [vmem:[#allocation3 + $0x38] sm:$0xff]
  %v3198 = vld [vmem:[#allocation3 + $0x40] sm:$0xff]
  %v3199 = vld [vmem:[#allocation3 + $0x48] sm:$0xff]
  %v3200 = vld [vmem:[#allocation3 + $0x50] sm:$0xff]
  %v3201 = vld [vmem:[#allocation3 + $0x58] sm:$0xff]
  %v3202 = vld [vmem:[#allocation3 + $0x60] sm:$0xff]
  %v3203 = vld [vmem:[#allocation3 + $0x68] sm:$0xff]
  %v3204 = vld [vmem:[#allocation3 + $0x70] sm:$0xff]
  %v3205 = vld [vmem:[#allocation3 + $0x78] sm:$0xff]
  %v3206 = vpack.c.bf16 %v3192, %v3192
  %v3207 = vpack.c.bf16 %v3193, %v3193
  %v3208 = vpack.c.bf16 %v3194, %v3194
  %v3209 = vpack.c.bf16 %v3195, %v3195
  %v3210 = vpack.c.bf16 %v3196, %v3196
  %v3211 = vpack.c.bf16 %v3197, %v3197
  %v3212 = vpack.c.bf16 %v3198, %v3198
  %v3213 = vpack.c.bf16 %v3199, %v3199
  %v3214 = vpack.c.bf16 %v3200, %v3200
  %v3215 = vpack.c.bf16 %v3201, %v3201
  %v3216 = vpack.c.bf16 %v3202, %v3202
  %v3217 = vpack.c.bf16 %v3203, %v3203
  %v3218 = vpack.c.bf16 %v3204, %v3204
  %v3219 = vpack.c.bf16 %v3205, %v3205
  %v3234 = vunpack.c.l.b16 %v3060
  %v3235 = vunpack.c.l.b16 %v3061
  %v3236 = vunpack.c.l.b16 %v3062
  %v3237 = vunpack.c.l.b16 %v3063
  %v3238 = vunpack.c.l.b16 %v3064
  %v3239 = vunpack.c.l.b16 %v3065
  %v3240 = vunpack.c.l.b16 %v3066
  %v3241 = vunpack.c.l.b16 %v3067
  %v3242 = vunpack.c.l.b16 %v3068
  %v3243 = vunpack.c.l.b16 %v3069
  %v3244 = vunpack.c.l.b16 %v3070
  %v3245 = vunpack.c.l.b16 %v3071
  %v3246 = vunpack.c.l.b16 %v3072
  %v3247 = vunpack.c.l.b16 %v3073
  %v3248 = vpack.c.b16 %v3235, %v3234
  %v3249 = vpack.c.b16 %v3237, %v3236
  %v3250 = vpack.c.b16 %v3239, %v3238
  %v3251 = vpack.c.b16 %v3241, %v3240
  %v3252 = vpack.c.b16 %v3243, %v3242
  %v3253 = vpack.c.b16 %v3245, %v3244
  %v3254 = vpack.c.b16 %v3247, %v3246
  %v3276 = vunpack.c.l.b16 %v3088
  %v3277 = vunpack.c.l.b16 %v3089
  %v3278 = vunpack.c.l.b16 %v3090
  %v3279 = vunpack.c.l.b16 %v3091
  %v3280 = vunpack.c.l.b16 %v3092
  %v3281 = vunpack.c.l.b16 %v3093
  %v3282 = vunpack.c.l.b16 %v3094
  %v3283 = vunpack.c.l.b16 %v3095
  %v3284 = vunpack.c.l.b16 %v3096
  %v3285 = vunpack.c.l.b16 %v3097
  %v3286 = vunpack.c.l.b16 %v3098
  %v3287 = vunpack.c.l.b16 %v3099
  %v3288 = vunpack.c.l.b16 %v3100
  %v3289 = vunpack.c.l.b16 %v3101
  %v3290 = vpack.c.b16 %v3277, %v3276
  %v3291 = vpack.c.b16 %v3279, %v3278
  %v3292 = vpack.c.b16 %v3281, %v3280
  %v3293 = vpack.c.b16 %v3283, %v3282
  %v3294 = vpack.c.b16 %v3285, %v3284
  %v3295 = vpack.c.b16 %v3287, %v3286
  %v3296 = vpack.c.b16 %v3289, %v3288
  %v3318 = vunpack.c.l.b16 %v3116
  %v3319 = vunpack.c.l.b16 %v3117
  %v3320 = vunpack.c.l.b16 %v3118
  %v3321 = vunpack.c.l.b16 %v3119
  %v3322 = vunpack.c.l.b16 %v3120
  %v3323 = vunpack.c.l.b16 %v3121
  %v3324 = vunpack.c.l.b16 %v3122
  %v3325 = vunpack.c.l.b16 %v3123
  %v3326 = vunpack.c.l.b16 %v3124
  %v3327 = vunpack.c.l.b16 %v3125
  %v3328 = vunpack.c.l.b16 %v3126
  %v3329 = vunpack.c.l.b16 %v3127
  %v3330 = vunpack.c.l.b16 %v3128
  %v3331 = vunpack.c.l.b16 %v3129
  %v3332 = vpack.c.b16 %v3319, %v3318
  %v3333 = vpack.c.b16 %v3321, %v3320
  %v3334 = vpack.c.b16 %v3323, %v3322
  %v3335 = vpack.c.b16 %v3325, %v3324
  %v3336 = vpack.c.b16 %v3327, %v3326
  %v3337 = vpack.c.b16 %v3329, %v3328
  %v3338 = vpack.c.b16 %v3331, %v3330
  %v3360 = vunpack.c.l.b16 %v3144
  %v3361 = vunpack.c.l.b16 %v3145
  %v3362 = vunpack.c.l.b16 %v3146
  %v3363 = vunpack.c.l.b16 %v3147
  %v3364 = vunpack.c.l.b16 %v3148
  %v3365 = vunpack.c.l.b16 %v3149
  %v3366 = vunpack.c.l.b16 %v3150
  %v3367 = vunpack.c.l.b16 %v3151
  %v3368 = vunpack.c.l.b16 %v3152
  %v3369 = vunpack.c.l.b16 %v3153
  %v3370 = vunpack.c.l.b16 %v3154
  %v3371 = vunpack.c.l.b16 %v3155
  %v3372 = vunpack.c.l.b16 %v3156
  %v3373 = vunpack.c.l.b16 %v3157
  %v3374 = vpack.c.b16 %v3361, %v3360
  %v3375 = vpack.c.b16 %v3363, %v3362
  %v3376 = vpack.c.b16 %v3365, %v3364
  %v3377 = vpack.c.b16 %v3367, %v3366
  %v3378 = vpack.c.b16 %v3369, %v3368
  %v3379 = vpack.c.b16 %v3371, %v3370
  %v3380 = vpack.c.b16 %v3373, %v3372
  %v3389 = vunpack.c.l.b16 %v3159
  %v3390 = vpack.c.b16 %v3236, %v3235
  %v3391 = vpack.c.b16 %v3238, %v3237
  %v3392 = vpack.c.b16 %v3240, %v3239
  %v3393 = vpack.c.b16 %v3242, %v3241
  %v3394 = vpack.c.b16 %v3244, %v3243
  %v3395 = vpack.c.b16 %v3246, %v3245
  %v3396 = vpack.c.b16 %v3389, %v3247
  %v3405 = vunpack.c.l.b16 %v3161
  %v3406 = vpack.c.b16 %v3278, %v3277
  %v3407 = vpack.c.b16 %v3280, %v3279
  %v3408 = vpack.c.b16 %v3282, %v3281
  %v3409 = vpack.c.b16 %v3284, %v3283
  %v3410 = vpack.c.b16 %v3286, %v3285
  %v3411 = vpack.c.b16 %v3288, %v3287
  %v3412 = vpack.c.b16 %v3405, %v3289
  %v3434 = vunpack.c.l.b16 %v3176
  %v3435 = vunpack.c.l.b16 %v3177
  %v3436 = vunpack.c.l.b16 %v3178
  %v3437 = vunpack.c.l.b16 %v3179
  %v3438 = vunpack.c.l.b16 %v3180
  %v3439 = vunpack.c.l.b16 %v3181
  %v3440 = vunpack.c.l.b16 %v3182
  %v3441 = vunpack.c.l.b16 %v3183
  %v3442 = vunpack.c.l.b16 %v3184
  %v3443 = vunpack.c.l.b16 %v3185
  %v3444 = vunpack.c.l.b16 %v3186
  %v3445 = vunpack.c.l.b16 %v3187
  %v3446 = vunpack.c.l.b16 %v3188
  %v3447 = vunpack.c.l.b16 %v3189
  %v3448 = vpack.c.b16 %v3435, %v3434
  %v3449 = vpack.c.b16 %v3437, %v3436
  %v3450 = vpack.c.b16 %v3439, %v3438
  %v3451 = vpack.c.b16 %v3441, %v3440
  %v3452 = vpack.c.b16 %v3443, %v3442
  %v3453 = vpack.c.b16 %v3445, %v3444
  %v3454 = vpack.c.b16 %v3447, %v3446
  %v3463 = vunpack.c.l.b16 %v3191
  %v3464 = vpack.c.b16 %v3362, %v3361
  %v3465 = vpack.c.b16 %v3364, %v3363
  %v3466 = vpack.c.b16 %v3366, %v3365
  %v3467 = vpack.c.b16 %v3368, %v3367
  %v3468 = vpack.c.b16 %v3370, %v3369
  %v3469 = vpack.c.b16 %v3372, %v3371
  %v3470 = vpack.c.b16 %v3463, %v3373
  %v3492 = vunpack.c.l.b16 %v3206
  %v3493 = vunpack.c.l.b16 %v3207
  %v3494 = vunpack.c.l.b16 %v3208
  %v3495 = vunpack.c.l.b16 %v3209
  %v3496 = vunpack.c.l.b16 %v3210
  %v3497 = vunpack.c.l.b16 %v3211
  %v3498 = vunpack.c.l.b16 %v3212
  %v3499 = vunpack.c.l.b16 %v3213
  %v3500 = vunpack.c.l.b16 %v3214
  %v3501 = vunpack.c.l.b16 %v3215
  %v3502 = vunpack.c.l.b16 %v3216
  %v3503 = vunpack.c.l.b16 %v3217
  %v3504 = vunpack.c.l.b16 %v3218
  %v3505 = vunpack.c.l.b16 %v3219
  %v3506 = vpack.c.b16 %v3493, %v3492
  %v3507 = vpack.c.b16 %v3495, %v3494
  %v3508 = vpack.c.b16 %v3497, %v3496
  %v3509 = vpack.c.b16 %v3499, %v3498
  %v3510 = vpack.c.b16 %v3501, %v3500
  %v3511 = vpack.c.b16 %v3503, %v3502
  %v3512 = vpack.c.b16 %v3505, %v3504
  %v3520 = vld [vmem:[%s3] sm:$0xf]
  %v3521 = vld [vmem:[%s3 + $0x4] sm:$0xf]
  %v3522 = vld [vmem:[%s3 + $0x8] sm:$0xf]
  %v3523 = vld [vmem:[%s3 + $0xc] sm:$0xf]
  %v3524 = vld [vmem:[%s3 + $0x10] sm:$0xf]
  %v3525 = vld [vmem:[%s3 + $0x14] sm:$0xf]
  %v3526 = vld [vmem:[%s3 + $0x18] sm:$0xf]
  %v3527 = vld [vmem:[%s3 + $0x1c] sm:$0xf]
  %v3528 = vld [vmem:[%s3 + $0x20] sm:$0xf]
  %v3529 = vld [vmem:[%s3 + $0x24] sm:$0xf]
  %v3530 = vld [vmem:[%s3 + $0x28] sm:$0xf]
  %v3531 = vld [vmem:[%s3 + $0x2c] sm:$0xf]
  %v3532 = vld [vmem:[%s3 + $0x30] sm:$0xf]
  %v3533 = vld [vmem:[%s3 + $0x34] sm:$0xf]
  %v3534 = vld [vmem:[%s3 + $0x38] sm:$0xf]
  %v3535 = vld [vmem:[%s3 + $0x3c] sm:$0xf]
  %v3536 = vld [vmem:[%s3 + $0x40] sm:$0xf]
  %v3537 = vld [vmem:[%s3 + $0x44] sm:$0xf]
  %v3538 = vld [vmem:[%s3 + $0x48] sm:$0xf]
  %v3539 = vld [vmem:[%s3 + $0x4c] sm:$0xf]
  %v3540 = vld [vmem:[%s3 + $0x50] sm:$0xf]
  %v3541 = vld [vmem:[%s3 + $0x54] sm:$0xf]
  %v3542 = vld [vmem:[%s3 + $0x58] sm:$0xf]
  %v3543 = vld [vmem:[%s3 + $0x5c] sm:$0xf]
  %v3544 = vld [vmem:[%s3 + $0x60] sm:$0xf]
  %v3545 = vld [vmem:[%s3 + $0x64] sm:$0xf]
  %v3546 = vld [vmem:[%s3 + $0x68] sm:$0xf]
  %v3547 = vld [vmem:[%s3 + $0x6c] sm:$0xf]
  %v3548 = vld [vmem:[%s3 + $0x70] sm:$0xf]
  %v3549 = vld [vmem:[%s3 + $0x74] sm:$0xf]
  %v3550 = vld [vmem:[%s3 + $0x78] sm:$0xf]
  %v3551 = vld [vmem:[%s3 + $0x7c] sm:$0xf]
  %v3552 = vld [vmem:[%s3 + $0x80] sm:$0xf]
  %v3553 = vld [vmem:[%s3 + $0x84] sm:$0xf]
  %v3554 = vld [vmem:[%s3 + $0x88] sm:$0xf]
  %v3555 = vld [vmem:[%s3 + $0x8c] sm:$0xf]
  %v3556 = vld [vmem:[%s3 + $0x90] sm:$0xf]
  %v3557 = vld [vmem:[%s3 + $0x94] sm:$0xf]
  %v3558 = vld [vmem:[%s3 + $0x98] sm:$0xf]
  %v3559 = vld [vmem:[%s3 + $0x9c] sm:$0xf]
  %v3560 = vld [vmem:[%s3 + $0xa0] sm:$0xf]
  %v3561 = vld [vmem:[%s3 + $0xa4] sm:$0xf]
  %v3562 = vld [vmem:[%s3 + $0xa8] sm:$0xf]
  %v3563 = vld [vmem:[%s3 + $0xac] sm:$0xf]
  %v3564 = vld [vmem:[%s3 + $0xb0] sm:$0xf]
  %v3565 = vld [vmem:[%s3 + $0xb4] sm:$0xf]
  %v3566 = vld [vmem:[%s3 + $0xb8] sm:$0xf]
  %v3567 = vld [vmem:[%s3 + $0xbc] sm:$0xf]
  %v3568 = vld [vmem:[%s3 + $0xc0] sm:$0xf]
  %v3569 = vld [vmem:[%s3 + $0xc4] sm:$0xf]
  %v3570 = vld [vmem:[%s3 + $0xc8] sm:$0xf]
  %v3571 = vld [vmem:[%s3 + $0xcc] sm:$0xf]
  %v3572 = vld [vmem:[%s3 + $0xd0] sm:$0xf]
  %v3573 = vld [vmem:[%s3 + $0xd4] sm:$0xf]
  %v3574 = vld [vmem:[%s3 + $0xd8] sm:$0xf]
  %v3575 = vld [vmem:[%s3 + $0xdc] sm:$0xf]
  %v3576 = vld [vmem:[%s3 + $0xe0] sm:$0xf]
  %v3577 = vld [vmem:[%s3 + $0xe4] sm:$0xf]
  %v3578 = vld [vmem:[%s3 + $0xe8] sm:$0xf]
  %v3579 = vld [vmem:[%s3 + $0xec] sm:$0xf]
  %v3580 = vld [vmem:[%s3 + $0xf0] sm:$0xf]
  %v3581 = vld [vmem:[%s3 + $0xf4] sm:$0xf]
  %v3582 = vld [vmem:[%s3 + $0xf8] sm:$0xf]
  %v3583 = vld [vmem:[%s3 + $0xfc] sm:$0xf]
  %v3584 = vld [vmem:[%s3 + $0x100] sm:$0xf]
  %v3585 = vld [vmem:[%s3 + $0x104] sm:$0xf]
  %v3586 = vld [vmem:[%s3 + $0x108] sm:$0xf]
  %v3587 = vld [vmem:[%s3 + $0x10c] sm:$0xf]
  %v3588 = vld [vmem:[%s3 + $0x110] sm:$0xf]
  %v3589 = vld [vmem:[%s3 + $0x114] sm:$0xf]
  %v3590 = vld [vmem:[%s3 + $0x118] sm:$0xf]
  %v3591 = vld [vmem:[%s3 + $0x11c] sm:$0xf]
  %v3592 = vld [vmem:[%s3 + $0x120] sm:$0xf]
  %v3593 = vld [vmem:[%s3 + $0x124] sm:$0xf]
  %v3594 = vld [vmem:[%s3 + $0x128] sm:$0xf]
  %v3595 = vld [vmem:[%s3 + $0x12c] sm:$0xf]
  %v3596 = vld [vmem:[%s3 + $0x130] sm:$0xf]
  %v3597 = vld [vmem:[%s3 + $0x134] sm:$0xf]
  %v3598 = vld [vmem:[%s3 + $0x138] sm:$0xf]
  %v3599 = vld [vmem:[%s3 + $0x13c] sm:$0xf]
  %v3600 = vld [vmem:[%s3 + $0x140] sm:$0xf]
  %v3601 = vld [vmem:[%s3 + $0x144] sm:$0xf]
  %v3602 = vld [vmem:[%s3 + $0x148] sm:$0xf]
  %v3603 = vld [vmem:[%s3 + $0x14c] sm:$0xf]
  %v3604 = vld [vmem:[%s3 + $0x150] sm:$0xf]
  %v3605 = vld [vmem:[%s3 + $0x154] sm:$0xf]
  %v3606 = vld [vmem:[%s3 + $0x158] sm:$0xf]
  %v3607 = vld [vmem:[%s3 + $0x15c] sm:$0xf]
  %v3608 = vld [vmem:[%s3 + $0x160] sm:$0xf]
  %v3609 = vld [vmem:[%s3 + $0x164] sm:$0xf]
  %v3610 = vld [vmem:[%s3 + $0x168] sm:$0xf]
  %v3611 = vld [vmem:[%s3 + $0x16c] sm:$0xf]
  %v3612 = vld [vmem:[%s3 + $0x170] sm:$0xf]
  %v3613 = vld [vmem:[%s3 + $0x174] sm:$0xf]
  %v3614 = vld [vmem:[%s3 + $0x178] sm:$0xf]
  %v3615 = vld [vmem:[%s3 + $0x17c] sm:$0xf]
  %v3616 = vld [vmem:[%s3 + $0x180] sm:$0xf]
  %v3617 = vld [vmem:[%s3 + $0x184] sm:$0xf]
  %v3618 = vld [vmem:[%s3 + $0x188] sm:$0xf]
  %v3619 = vld [vmem:[%s3 + $0x18c] sm:$0xf]
  %v3620 = vld [vmem:[%s3 + $0x190] sm:$0xf]
  %v3621 = vld [vmem:[%s3 + $0x194] sm:$0xf]
  %v3622 = vld [vmem:[%s3 + $0x198] sm:$0xf]
  %v3623 = vld [vmem:[%s3 + $0x19c] sm:$0xf]
  %v3624 = vld [vmem:[%s3 + $0x1a0] sm:$0xf]
  %v3625 = vld [vmem:[%s3 + $0x1a4] sm:$0xf]
  %v3626 = vld [vmem:[%s3 + $0x1a8] sm:$0xf]
  %v3627 = vld [vmem:[%s3 + $0x1ac] sm:$0xf]
  %v3628 = vld [vmem:[%s3 + $0x1b0] sm:$0xf]
  %v3629 = vld [vmem:[%s3 + $0x1b4] sm:$0xf]
  %v3630 = vld [vmem:[%s3 + $0x1b8] sm:$0xf]
  %v3631 = vld [vmem:[%s3 + $0x1bc] sm:$0xf]
  %v3632 = vld [vmem:[%s3 + $0x1c0] sm:$0xf]
  %v3633 = vld [vmem:[%s3 + $0x1c4] sm:$0xf]
  %v3634 = vld [vmem:[%s3 + $0x1c8] sm:$0xf]
  %v3635 = vld [vmem:[%s3 + $0x1cc] sm:$0xf]
  %v3636 = vld [vmem:[%s3 + $0x1d0] sm:$0xf]
  %v3637 = vld [vmem:[%s3 + $0x1d4] sm:$0xf]
  %v3638 = vld [vmem:[%s3 + $0x1d8] sm:$0xf]
  %v3639 = vld [vmem:[%s3 + $0x1dc] sm:$0xf]
  %v3640 = vld [vmem:[%s3 + $0x1e0] sm:$0xf]
  %v3641 = vld [vmem:[%s3 + $0x1e4] sm:$0xf]
  %v3642 = vld [vmem:[%s3 + $0x1e8] sm:$0xf]
  %v3643 = vld [vmem:[%s3 + $0x1ec] sm:$0xf]
  %v3644 = vld [vmem:[%s3 + $0x1f0] sm:$0xf]
  %v3645 = vld [vmem:[%s3 + $0x1f4] sm:$0xf]
  %v3646 = vld [vmem:[%s3 + $0x1f8] sm:$0xf]
  %v3647 = vld [vmem:[%s3 + $0x1fc] sm:$0xf]
  %v3648 = vld [vmem:[%s3 + $0x200] sm:$0xf]
  %v3649 = vld [vmem:[%s3 + $0x204] sm:$0xf]
  %v3650 = vld [vmem:[%s3 + $0x208] sm:$0xf]
  %v3651 = vld [vmem:[%s3 + $0x20c] sm:$0xf]
  %v3652 = vld [vmem:[%s3 + $0x210] sm:$0xf]
  %v3653 = vld [vmem:[%s3 + $0x214] sm:$0xf]
  %v3654 = vld [vmem:[%s3 + $0x218] sm:$0xf]
  %v3655 = vld [vmem:[%s3 + $0x21c] sm:$0xf]
  %v3656 = vld [vmem:[%s3 + $0x220] sm:$0xf]
  %v3657 = vld [vmem:[%s3 + $0x224] sm:$0xf]
  %v3658 = vld [vmem:[%s3 + $0x228] sm:$0xf]
  %v3659 = vld [vmem:[%s3 + $0x22c] sm:$0xf]
  %v3660 = vld [vmem:[%s3 + $0x230] sm:$0xf]
  %v3661 = vld [vmem:[%s3 + $0x234] sm:$0xf]
  %v3662 = vld [vmem:[%s3 + $0x238] sm:$0xf]
  %v3663 = vld [vmem:[%s3 + $0x23c] sm:$0xf]
  %v3808 = vunpack.c.l.b16 %v3520
  %v3809 = vunpack.c.l.b16 %v3521
  %v3810 = vunpack.c.l.b16 %v3522
  %v3811 = vunpack.c.l.b16 %v3523
  %v3812 = vunpack.c.l.b16 %v3524
  %v3813 = vunpack.c.l.b16 %v3525
  %v3814 = vunpack.c.l.b16 %v3526
  %v3815 = vunpack.c.l.b16 %v3527
  %v3816 = vunpack.c.l.b16 %v3528
  %v3817 = vunpack.c.l.b16 %v3529
  %v3818 = vunpack.c.l.b16 %v3530
  %v3819 = vunpack.c.l.b16 %v3531
  %v3820 = vunpack.c.l.b16 %v3532
  %v3821 = vunpack.c.l.b16 %v3533
  %v3822 = vunpack.c.l.b16 %v3534
  %v3823 = vunpack.c.l.b16 %v3535
  %v3824 = vunpack.c.l.b16 %v3536
  %v3825 = vunpack.c.l.b16 %v3537
  %v3826 = vunpack.c.l.b16 %v3538
  %v3827 = vunpack.c.l.b16 %v3539
  %v3828 = vunpack.c.l.b16 %v3540
  %v3829 = vunpack.c.l.b16 %v3541
  %v3830 = vunpack.c.l.b16 %v3542
  %v3831 = vunpack.c.l.b16 %v3543
  %v3832 = vunpack.c.l.b16 %v3544
  %v3833 = vunpack.c.l.b16 %v3545
  %v3834 = vunpack.c.l.b16 %v3546
  %v3835 = vunpack.c.l.b16 %v3547
  %v3836 = vunpack.c.l.b16 %v3548
  %v3837 = vunpack.c.l.b16 %v3549
  %v3838 = vunpack.c.l.b16 %v3550
  %v3839 = vunpack.c.l.b16 %v3551
  %v3840 = vunpack.c.l.b16 %v3552
  %v3841 = vunpack.c.l.b16 %v3553
  %v3842 = vunpack.c.l.b16 %v3554
  %v3843 = vunpack.c.l.b16 %v3555
  %v3844 = vunpack.c.l.b16 %v3556
  %v3845 = vunpack.c.l.b16 %v3557
  %v3846 = vunpack.c.l.b16 %v3558
  %v3847 = vunpack.c.l.b16 %v3559
  %v3848 = vunpack.c.l.b16 %v3560
  %v3849 = vunpack.c.l.b16 %v3561
  %v3850 = vunpack.c.l.b16 %v3562
  %v3851 = vunpack.c.l.b16 %v3563
  %v3852 = vunpack.c.l.b16 %v3564
  %v3853 = vunpack.c.l.b16 %v3565
  %v3854 = vunpack.c.l.b16 %v3566
  %v3855 = vunpack.c.l.b16 %v3567
  %v3856 = vunpack.c.l.b16 %v3568
  %v3857 = vunpack.c.l.b16 %v3569
  %v3858 = vunpack.c.l.b16 %v3570
  %v3859 = vunpack.c.l.b16 %v3571
  %v3860 = vunpack.c.l.b16 %v3572
  %v3861 = vunpack.c.l.b16 %v3573
  %v3862 = vunpack.c.l.b16 %v3574
  %v3863 = vunpack.c.l.b16 %v3575
  %v3864 = vunpack.c.l.b16 %v3576
  %v3865 = vunpack.c.l.b16 %v3577
  %v3866 = vunpack.c.l.b16 %v3578
  %v3867 = vunpack.c.l.b16 %v3579
  %v3868 = vunpack.c.l.b16 %v3580
  %v3869 = vunpack.c.l.b16 %v3581
  %v3870 = vunpack.c.l.b16 %v3582
  %v3871 = vunpack.c.l.b16 %v3583
  %v3872 = vunpack.c.l.b16 %v3584
  %v3873 = vunpack.c.l.b16 %v3585
  %v3874 = vunpack.c.l.b16 %v3586
  %v3875 = vunpack.c.l.b16 %v3587
  %v3876 = vunpack.c.l.b16 %v3588
  %v3877 = vunpack.c.l.b16 %v3589
  %v3878 = vunpack.c.l.b16 %v3590
  %v3879 = vunpack.c.l.b16 %v3591
  %v3880 = vunpack.c.l.b16 %v3592
  %v3881 = vunpack.c.l.b16 %v3593
  %v3882 = vunpack.c.l.b16 %v3594
  %v3883 = vunpack.c.l.b16 %v3595
  %v3884 = vunpack.c.l.b16 %v3596
  %v3885 = vunpack.c.l.b16 %v3597
  %v3886 = vunpack.c.l.b16 %v3598
  %v3887 = vunpack.c.l.b16 %v3599
  %v3888 = vunpack.c.l.b16 %v3600
  %v3889 = vunpack.c.l.b16 %v3601
  %v3890 = vunpack.c.l.b16 %v3602
  %v3891 = vunpack.c.l.b16 %v3603
  %v3892 = vunpack.c.l.b16 %v3604
  %v3893 = vunpack.c.l.b16 %v3605
  %v3894 = vunpack.c.l.b16 %v3606
  %v3895 = vunpack.c.l.b16 %v3607
  %v3896 = vunpack.c.l.b16 %v3608
  %v3897 = vunpack.c.l.b16 %v3609
  %v3898 = vunpack.c.l.b16 %v3610
  %v3899 = vunpack.c.l.b16 %v3611
  %v3900 = vunpack.c.l.b16 %v3612
  %v3901 = vunpack.c.l.b16 %v3613
  %v3902 = vunpack.c.l.b16 %v3614
  %v3903 = vunpack.c.l.b16 %v3615
  %v3904 = vunpack.c.l.b16 %v3616
  %v3905 = vunpack.c.l.b16 %v3617
  %v3906 = vunpack.c.l.b16 %v3618
  %v3907 = vunpack.c.l.b16 %v3619
  %v3908 = vunpack.c.l.b16 %v3620
  %v3909 = vunpack.c.l.b16 %v3621
  %v3910 = vunpack.c.l.b16 %v3622
  %v3911 = vunpack.c.l.b16 %v3623
  %v3912 = vunpack.c.l.b16 %v3624
  %v3913 = vunpack.c.l.b16 %v3625
  %v3914 = vunpack.c.l.b16 %v3626
  %v3915 = vunpack.c.l.b16 %v3627
  %v3916 = vunpack.c.l.b16 %v3628
  %v3917 = vunpack.c.l.b16 %v3629
  %v3918 = vunpack.c.l.b16 %v3630
  %v3919 = vunpack.c.l.b16 %v3631
  %v3920 = vunpack.c.l.b16 %v3632
  %v3921 = vunpack.c.l.b16 %v3633
  %v3922 = vunpack.c.l.b16 %v3634
  %v3923 = vunpack.c.l.b16 %v3635
  %v3924 = vunpack.c.l.b16 %v3636
  %v3925 = vunpack.c.l.b16 %v3637
  %v3926 = vunpack.c.l.b16 %v3638
  %v3927 = vunpack.c.l.b16 %v3639
  %v3928 = vunpack.c.l.b16 %v3640
  %v3929 = vunpack.c.l.b16 %v3641
  %v3930 = vunpack.c.l.b16 %v3642
  %v3931 = vunpack.c.l.b16 %v3643
  %v3932 = vunpack.c.l.b16 %v3644
  %v3933 = vunpack.c.l.b16 %v3645
  %v3934 = vunpack.c.l.b16 %v3646
  %v3935 = vunpack.c.l.b16 %v3647
  %v3936 = vunpack.c.l.b16 %v3648
  %v3937 = vunpack.c.l.b16 %v3649
  %v3938 = vunpack.c.l.b16 %v3650
  %v3939 = vunpack.c.l.b16 %v3651
  %v3940 = vunpack.c.l.b16 %v3652
  %v3941 = vunpack.c.l.b16 %v3653
  %v3942 = vunpack.c.l.b16 %v3654
  %v3943 = vunpack.c.l.b16 %v3655
  %v3944 = vunpack.c.l.b16 %v3656
  %v3945 = vunpack.c.l.b16 %v3657
  %v3946 = vunpack.c.l.b16 %v3658
  %v3947 = vunpack.c.l.b16 %v3659
  %v3948 = vunpack.c.l.b16 %v3660
  %v3949 = vunpack.c.l.b16 %v3661
  %v3950 = vunpack.c.l.b16 %v3662
  %v3951 = vunpack.c.l.b16 %v3663
  %v3952 = vpack.c.b16 %v3809, %v3808
  %v3953 = vpack.c.b16 %v3811, %v3810
  %v3954 = vpack.c.b16 %v3813, %v3812
  %v3955 = vpack.c.b16 %v3815, %v3814
  %v3956 = vpack.c.b16 %v3817, %v3816
  %v3957 = vpack.c.b16 %v3819, %v3818
  %v3958 = vpack.c.b16 %v3821, %v3820
  %v3959 = vpack.c.b16 %v3823, %v3822
  %v3960 = vpack.c.b16 %v3825, %v3824
  %v3961 = vpack.c.b16 %v3827, %v3826
  %v3962 = vpack.c.b16 %v3829, %v3828
  %v3963 = vpack.c.b16 %v3831, %v3830
  %v3964 = vpack.c.b16 %v3833, %v3832
  %v3965 = vpack.c.b16 %v3835, %v3834
  %v3966 = vpack.c.b16 %v3837, %v3836
  %v3967 = vpack.c.b16 %v3839, %v3838
  %v3968 = vpack.c.b16 %v3841, %v3840
  %v3969 = vpack.c.b16 %v3843, %v3842
  %v3970 = vpack.c.b16 %v3845, %v3844
  %v3971 = vpack.c.b16 %v3847, %v3846
  %v3972 = vpack.c.b16 %v3849, %v3848
  %v3973 = vpack.c.b16 %v3851, %v3850
  %v3974 = vpack.c.b16 %v3853, %v3852
  %v3975 = vpack.c.b16 %v3855, %v3854
  %v3976 = vpack.c.b16 %v3857, %v3856
  %v3977 = vpack.c.b16 %v3859, %v3858
  %v3978 = vpack.c.b16 %v3861, %v3860
  %v3979 = vpack.c.b16 %v3863, %v3862
  %v3980 = vpack.c.b16 %v3865, %v3864
  %v3981 = vpack.c.b16 %v3867, %v3866
  %v3982 = vpack.c.b16 %v3869, %v3868
  %v3983 = vpack.c.b16 %v3871, %v3870
  %v3984 = vpack.c.b16 %v3873, %v3872
  %v3985 = vpack.c.b16 %v3875, %v3874
  %v3986 = vpack.c.b16 %v3877, %v3876
  %v3987 = vpack.c.b16 %v3879, %v3878
  %v3988 = vpack.c.b16 %v3881, %v3880
  %v3989 = vpack.c.b16 %v3883, %v3882
  %v3990 = vpack.c.b16 %v3885, %v3884
  %v3991 = vpack.c.b16 %v3887, %v3886
  %v3992 = vpack.c.b16 %v3889, %v3888
  %v3993 = vpack.c.b16 %v3891, %v3890
  %v3994 = vpack.c.b16 %v3893, %v3892
  %v3995 = vpack.c.b16 %v3895, %v3894
  %v3996 = vpack.c.b16 %v3897, %v3896
  %v3997 = vpack.c.b16 %v3899, %v3898
  %v3998 = vpack.c.b16 %v3901, %v3900
  %v3999 = vpack.c.b16 %v3903, %v3902
  %v4000 = vpack.c.b16 %v3905, %v3904
  %v4001 = vpack.c.b16 %v3907, %v3906
  %v4002 = vpack.c.b16 %v3909, %v3908
  %v4003 = vpack.c.b16 %v3911, %v3910
  %v4004 = vpack.c.b16 %v3913, %v3912
  %v4005 = vpack.c.b16 %v3915, %v3914
  %v4006 = vpack.c.b16 %v3917, %v3916
  %v4007 = vpack.c.b16 %v3919, %v3918
  %v4008 = vpack.c.b16 %v3921, %v3920
  %v4009 = vpack.c.b16 %v3923, %v3922
  %v4010 = vpack.c.b16 %v3925, %v3924
  %v4011 = vpack.c.b16 %v3927, %v3926
  %v4012 = vpack.c.b16 %v3929, %v3928
  %v4013 = vpack.c.b16 %v3931, %v3930
  %v4014 = vpack.c.b16 %v3933, %v3932
  %v4015 = vpack.c.b16 %v3935, %v3934
  %v4016 = vpack.c.b16 %v3937, %v3936
  %v4017 = vpack.c.b16 %v3939, %v3938
  %v4018 = vpack.c.b16 %v3941, %v3940
  %v4019 = vpack.c.b16 %v3943, %v3942
  %v4020 = vpack.c.b16 %v3945, %v3944
  %v4021 = vpack.c.b16 %v3947, %v3946
  %v4022 = vpack.c.b16 %v3949, %v3948
  %v4023 = vpack.c.b16 %v3951, %v3950
  %4096 = vmatpush.bf16.msra.mxu0 %v3959
  %4097 = vmatpush.bf16.msra.mxu0 %v3958
  %4098 = vmatpush.bf16.msra.mxu0 %v3957
  %4099 = vmatpush.bf16.msra.mxu0 %v3956
  %4100 = vmatpush.bf16.msra.mxu0 %v3955
  %4101 = vmatpush.bf16.msra.mxu0 %v3954
  %4102 = vmatpush.bf16.msra.mxu0 %v3953
  %4103 = vmatpush.bf16.msra.mxu0 %v3952
  %4104 = vmatmul.bf16.gmra.mxu0 %v3248
  %v4105 = vpop.f32.mrf.mxu0
  %v4106 = vadd.f32 0.0, %v4105
  %v4107 = vpop.f32.mrf.mxu0
  %v4108 = vadd.f32 0.0, %v4107
  %4109 = vmatmul.bf16.gmra.mxu0 %v3249
  %v4110 = vpop.f32.mrf.mxu0
  %v4111 = vadd.f32 0.0, %v4110
  %v4112 = vpop.f32.mrf.mxu0
  %v4113 = vadd.f32 0.0, %v4112
  %4114 = vmatmul.bf16.gmra.mxu0 %v3250
  %v4115 = vpop.f32.mrf.mxu0
  %v4116 = vadd.f32 0.0, %v4115
  %v4117 = vpop.f32.mrf.mxu0
  %v4118 = vadd.f32 0.0, %v4117
  %4119 = vmatmul.bf16.gmra.mxu0 %v3251
  %v4120 = vpop.f32.mrf.mxu0
  %v4121 = vadd.f32 0.0, %v4120
  %v4122 = vpop.f32.mrf.mxu0
  %v4123 = vadd.f32 0.0, %v4122
  %4124 = vmatmul.bf16.gmra.mxu0 %v3252
  %v4125 = vpop.f32.mrf.mxu0
  %v4126 = vadd.f32 0.0, %v4125
  %v4127 = vpop.f32.mrf.mxu0
  %v4128 = vadd.f32 0.0, %v4127
  %4129 = vmatmul.bf16.gmra.mxu0 %v3253
  %v4130 = vpop.f32.mrf.mxu0
  %v4131 = vadd.f32 0.0, %v4130
  %v4132 = vpop.f32.mrf.mxu0
  %v4133 = vadd.f32 0.0, %v4132
  %4134 = vmatmul.bf16.gmra.mxu0 %v3254
  %v4135 = vpop.f32.mrf.mxu0
  %v4136 = vadd.f32 0.0, %v4135
  %v4137 = vpop.f32.mrf.mxu0
  %v4138 = vadd.f32 0.0, %v4137
  %4139 = vdwg.mxu0
  %4140 = vmatpush.bf16.msra.mxu0 %v3967
  %4141 = vmatpush.bf16.msra.mxu0 %v3966
  %4142 = vmatpush.bf16.msra.mxu0 %v3965
  %4143 = vmatpush.bf16.msra.mxu0 %v3964
  %4144 = vmatpush.bf16.msra.mxu0 %v3963
  %4145 = vmatpush.bf16.msra.mxu0 %v3962
  %4146 = vmatpush.bf16.msra.mxu0 %v3961
  %4147 = vmatpush.bf16.msra.mxu0 %v3960
  %4148 = vmatmul.bf16.gmra.mxu0 %v3290
  %v4149 = vpop.f32.mrf.mxu0
  %v4150 = vadd.f32 %v4106, %v4149
  %v4151 = vpop.f32.mrf.mxu0
  %v4152 = vadd.f32 %v4108, %v4151
  %4153 = vmatmul.bf16.gmra.mxu0 %v3291
  %v4154 = vpop.f32.mrf.mxu0
  %v4155 = vadd.f32 %v4111, %v4154
  %v4156 = vpop.f32.mrf.mxu0
  %v4157 = vadd.f32 %v4113, %v4156
  %4158 = vmatmul.bf16.gmra.mxu0 %v3292
  %v4159 = vpop.f32.mrf.mxu0
  %v4160 = vadd.f32 %v4116, %v4159
  %v4161 = vpop.f32.mrf.mxu0
  %v4162 = vadd.f32 %v4118, %v4161
  %4163 = vmatmul.bf16.gmra.mxu0 %v3293
  %v4164 = vpop.f32.mrf.mxu0
  %v4165 = vadd.f32 %v4121, %v4164
  %v4166 = vpop.f32.mrf.mxu0
  %v4167 = vadd.f32 %v4123, %v4166
  %4168 = vmatmul.bf16.gmra.mxu0 %v3294
  %v4169 = vpop.f32.mrf.mxu0
  %v4170 = vadd.f32 %v4126, %v4169
  %v4171 = vpop.f32.mrf.mxu0
  %v4172 = vadd.f32 %v4128, %v4171
  %4173 = vmatmul.bf16.gmra.mxu0 %v3295
  %v4174 = vpop.f32.mrf.mxu0
  %v4175 = vadd.f32 %v4131, %v4174
  %v4176 = vpop.f32.mrf.mxu0
  %v4177 = vadd.f32 %v4133, %v4176
  %4178 = vmatmul.bf16.gmra.mxu0 %v3296
  %v4179 = vpop.f32.mrf.mxu0
  %v4180 = vadd.f32 %v4136, %v4179
  %v4181 = vpop.f32.mrf.mxu0
  %v4182 = vadd.f32 %v4138, %v4181
  %4183 = vdwg.mxu0
  %4184 = vmatpush.bf16.msra.mxu0 %v3975
  %4185 = vmatpush.bf16.msra.mxu0 %v3974
  %4186 = vmatpush.bf16.msra.mxu0 %v3973
  %4187 = vmatpush.bf16.msra.mxu0 %v3972
  %4188 = vmatpush.bf16.msra.mxu0 %v3971
  %4189 = vmatpush.bf16.msra.mxu0 %v3970
  %4190 = vmatpush.bf16.msra.mxu0 %v3969
  %4191 = vmatpush.bf16.msra.mxu0 %v3968
  %4192 = vmatmul.bf16.gmra.mxu0 %v3332
  %v4193 = vpop.f32.mrf.mxu0
  %v4194 = vadd.f32 %v4150, %v4193
  %v4195 = vpop.f32.mrf.mxu0
  %v4196 = vadd.f32 %v4152, %v4195
  %4197 = vmatmul.bf16.gmra.mxu0 %v3333
  %v4198 = vpop.f32.mrf.mxu0
  %v4199 = vadd.f32 %v4155, %v4198
  %v4200 = vpop.f32.mrf.mxu0
  %v4201 = vadd.f32 %v4157, %v4200
  %4202 = vmatmul.bf16.gmra.mxu0 %v3334
  %v4203 = vpop.f32.mrf.mxu0
  %v4204 = vadd.f32 %v4160, %v4203
  %v4205 = vpop.f32.mrf.mxu0
  %v4206 = vadd.f32 %v4162, %v4205
  %4207 = vmatmul.bf16.gmra.mxu0 %v3335
  %v4208 = vpop.f32.mrf.mxu0
  %v4209 = vadd.f32 %v4165, %v4208
  %v4210 = vpop.f32.mrf.mxu0
  %v4211 = vadd.f32 %v4167, %v4210
  %4212 = vmatmul.bf16.gmra.mxu0 %v3336
  %v4213 = vpop.f32.mrf.mxu0
  %v4214 = vadd.f32 %v4170, %v4213
  %v4215 = vpop.f32.mrf.mxu0
  %v4216 = vadd.f32 %v4172, %v4215
  %4217 = vmatmul.bf16.gmra.mxu0 %v3337
  %v4218 = vpop.f32.mrf.mxu0
  %v4219 = vadd.f32 %v4175, %v4218
  %v4220 = vpop.f32.mrf.mxu0
  %v4221 = vadd.f32 %v4177, %v4220
  %4222 = vmatmul.bf16.gmra.mxu0 %v3338
  %v4223 = vpop.f32.mrf.mxu0
  %v4224 = vadd.f32 %v4180, %v4223
  %v4225 = vpop.f32.mrf.mxu0
  %v4226 = vadd.f32 %v4182, %v4225
  %4227 = vdwg.mxu0
  %4228 = vmatpush.bf16.msra.mxu0 %v3983
  %4229 = vmatpush.bf16.msra.mxu0 %v3982
  %4230 = vmatpush.bf16.msra.mxu0 %v3981
  %4231 = vmatpush.bf16.msra.mxu0 %v3980
  %4232 = vmatpush.bf16.msra.mxu0 %v3979
  %4233 = vmatpush.bf16.msra.mxu0 %v3978
  %4234 = vmatpush.bf16.msra.mxu0 %v3977
  %4235 = vmatpush.bf16.msra.mxu0 %v3976
  %4236 = vmatmul.bf16.gmra.mxu0 %v3374
  %v4237 = vpop.f32.mrf.mxu0
  %v4238 = vadd.f32 %v4194, %v4237
  %v4239 = vpop.f32.mrf.mxu0
  %v4240 = vadd.f32 %v4196, %v4239
  %4241 = vmatmul.bf16.gmra.mxu0 %v3375
  %v4242 = vpop.f32.mrf.mxu0
  %v4243 = vadd.f32 %v4199, %v4242
  %v4244 = vpop.f32.mrf.mxu0
  %v4245 = vadd.f32 %v4201, %v4244
  %4246 = vmatmul.bf16.gmra.mxu0 %v3376
  %v4247 = vpop.f32.mrf.mxu0
  %v4248 = vadd.f32 %v4204, %v4247
  %v4249 = vpop.f32.mrf.mxu0
  %v4250 = vadd.f32 %v4206, %v4249
  %4251 = vmatmul.bf16.gmra.mxu0 %v3377
  %v4252 = vpop.f32.mrf.mxu0
  %v4253 = vadd.f32 %v4209, %v4252
  %v4254 = vpop.f32.mrf.mxu0
  %v4255 = vadd.f32 %v4211, %v4254
  %4256 = vmatmul.bf16.gmra.mxu0 %v3378
  %v4257 = vpop.f32.mrf.mxu0
  %v4258 = vadd.f32 %v4214, %v4257
  %v4259 = vpop.f32.mrf.mxu0
  %v4260 = vadd.f32 %v4216, %v4259
  %4261 = vmatmul.bf16.gmra.mxu0 %v3379
  %v4262 = vpop.f32.mrf.mxu0
  %v4263 = vadd.f32 %v4219, %v4262
  %v4264 = vpop.f32.mrf.mxu0
  %v4265 = vadd.f32 %v4221, %v4264
  %4266 = vmatmul.bf16.gmra.mxu0 %v3380
  %v4267 = vpop.f32.mrf.mxu0
  %v4268 = vadd.f32 %v4224, %v4267
  %v4269 = vpop.f32.mrf.mxu0
  %v4270 = vadd.f32 %v4226, %v4269
  %4271 = vdwg.mxu0
  %4272 = vmatpush.bf16.msra.mxu0 %v3991
  %4273 = vmatpush.bf16.msra.mxu0 %v3990
  %4274 = vmatpush.bf16.msra.mxu0 %v3989
  %4275 = vmatpush.bf16.msra.mxu0 %v3988
  %4276 = vmatpush.bf16.msra.mxu0 %v3987
  %4277 = vmatpush.bf16.msra.mxu0 %v3986
  %4278 = vmatpush.bf16.msra.mxu0 %v3985
  %4279 = vmatpush.bf16.msra.mxu0 %v3984
  %4280 = vmatmul.bf16.gmra.mxu0 %v3390
  %v4281 = vpop.f32.mrf.mxu0
  %v4282 = vadd.f32 %v4238, %v4281
  %v4283 = vpop.f32.mrf.mxu0
  %v4284 = vadd.f32 %v4240, %v4283
  %4285 = vmatmul.bf16.gmra.mxu0 %v3391
  %v4286 = vpop.f32.mrf.mxu0
  %v4287 = vadd.f32 %v4243, %v4286
  %v4288 = vpop.f32.mrf.mxu0
  %v4289 = vadd.f32 %v4245, %v4288
  %4290 = vmatmul.bf16.gmra.mxu0 %v3392
  %v4291 = vpop.f32.mrf.mxu0
  %v4292 = vadd.f32 %v4248, %v4291
  %v4293 = vpop.f32.mrf.mxu0
  %v4294 = vadd.f32 %v4250, %v4293
  %4295 = vmatmul.bf16.gmra.mxu0 %v3393
  %v4296 = vpop.f32.mrf.mxu0
  %v4297 = vadd.f32 %v4253, %v4296
  %v4298 = vpop.f32.mrf.mxu0
  %v4299 = vadd.f32 %v4255, %v4298
  %4300 = vmatmul.bf16.gmra.mxu0 %v3394
  %v4301 = vpop.f32.mrf.mxu0
  %v4302 = vadd.f32 %v4258, %v4301
  %v4303 = vpop.f32.mrf.mxu0
  %v4304 = vadd.f32 %v4260, %v4303
  %4305 = vmatmul.bf16.gmra.mxu0 %v3395
  %v4306 = vpop.f32.mrf.mxu0
  %v4307 = vadd.f32 %v4263, %v4306
  %v4308 = vpop.f32.mrf.mxu0
  %v4309 = vadd.f32 %v4265, %v4308
  %4310 = vmatmul.bf16.gmra.mxu0 %v3396
  %v4311 = vpop.f32.mrf.mxu0
  %v4312 = vadd.f32 %v4268, %v4311
  %v4313 = vpop.f32.mrf.mxu0
  %v4314 = vadd.f32 %v4270, %v4313
  %4315 = vdwg.mxu0
  %4316 = vmatpush.bf16.msra.mxu0 %v3999
  %4317 = vmatpush.bf16.msra.mxu0 %v3998
  %4318 = vmatpush.bf16.msra.mxu0 %v3997
  %4319 = vmatpush.bf16.msra.mxu0 %v3996
  %4320 = vmatpush.bf16.msra.mxu0 %v3995
  %4321 = vmatpush.bf16.msra.mxu0 %v3994
  %4322 = vmatpush.bf16.msra.mxu0 %v3993
  %4323 = vmatpush.bf16.msra.mxu0 %v3992
  %4324 = vmatmul.bf16.gmra.mxu0 %v3406
  %v4325 = vpop.f32.mrf.mxu0
  %v4326 = vadd.f32 %v4282, %v4325
  %v4327 = vpop.f32.mrf.mxu0
  %v4328 = vadd.f32 %v4284, %v4327
  %4329 = vmatmul.bf16.gmra.mxu0 %v3407
  %v4330 = vpop.f32.mrf.mxu0
  %v4331 = vadd.f32 %v4287, %v4330
  %v4332 = vpop.f32.mrf.mxu0
  %v4333 = vadd.f32 %v4289, %v4332
  %4334 = vmatmul.bf16.gmra.mxu0 %v3408
  %v4335 = vpop.f32.mrf.mxu0
  %v4336 = vadd.f32 %v4292, %v4335
  %v4337 = vpop.f32.mrf.mxu0
  %v4338 = vadd.f32 %v4294, %v4337
  %4339 = vmatmul.bf16.gmra.mxu0 %v3409
  %v4340 = vpop.f32.mrf.mxu0
  %v4341 = vadd.f32 %v4297, %v4340
  %v4342 = vpop.f32.mrf.mxu0
  %v4343 = vadd.f32 %v4299, %v4342
  %4344 = vmatmul.bf16.gmra.mxu0 %v3410
  %v4345 = vpop.f32.mrf.mxu0
  %v4346 = vadd.f32 %v4302, %v4345
  %v4347 = vpop.f32.mrf.mxu0
  %v4348 = vadd.f32 %v4304, %v4347
  %4349 = vmatmul.bf16.gmra.mxu0 %v3411
  %v4350 = vpop.f32.mrf.mxu0
  %v4351 = vadd.f32 %v4307, %v4350
  %v4352 = vpop.f32.mrf.mxu0
  %v4353 = vadd.f32 %v4309, %v4352
  %4354 = vmatmul.bf16.gmra.mxu0 %v3412
  %v4355 = vpop.f32.mrf.mxu0
  %v4356 = vadd.f32 %v4312, %v4355
  %v4357 = vpop.f32.mrf.mxu0
  %v4358 = vadd.f32 %v4314, %v4357
  %4359 = vdwg.mxu0
  %4360 = vmatpush.bf16.msra.mxu0 %v4007
  %4361 = vmatpush.bf16.msra.mxu0 %v4006
  %4362 = vmatpush.bf16.msra.mxu0 %v4005
  %4363 = vmatpush.bf16.msra.mxu0 %v4004
  %4364 = vmatpush.bf16.msra.mxu0 %v4003
  %4365 = vmatpush.bf16.msra.mxu0 %v4002
  %4366 = vmatpush.bf16.msra.mxu0 %v4001
  %4367 = vmatpush.bf16.msra.mxu0 %v4000
  %4368 = vmatmul.bf16.gmra.mxu0 %v3448
  %v4369 = vpop.f32.mrf.mxu0
  %v4370 = vadd.f32 %v4326, %v4369
  %v4371 = vpop.f32.mrf.mxu0
  %v4372 = vadd.f32 %v4328, %v4371
  %4373 = vmatmul.bf16.gmra.mxu0 %v3449
  %v4374 = vpop.f32.mrf.mxu0
  %v4375 = vadd.f32 %v4331, %v4374
  %v4376 = vpop.f32.mrf.mxu0
  %v4377 = vadd.f32 %v4333, %v4376
  %4378 = vmatmul.bf16.gmra.mxu0 %v3450
  %v4379 = vpop.f32.mrf.mxu0
  %v4380 = vadd.f32 %v4336, %v4379
  %v4381 = vpop.f32.mrf.mxu0
  %v4382 = vadd.f32 %v4338, %v4381
  %4383 = vmatmul.bf16.gmra.mxu0 %v3451
  %v4384 = vpop.f32.mrf.mxu0
  %v4385 = vadd.f32 %v4341, %v4384
  %v4386 = vpop.f32.mrf.mxu0
  %v4387 = vadd.f32 %v4343, %v4386
  %4388 = vmatmul.bf16.gmra.mxu0 %v3452
  %v4389 = vpop.f32.mrf.mxu0
  %v4390 = vadd.f32 %v4346, %v4389
  %v4391 = vpop.f32.mrf.mxu0
  %v4392 = vadd.f32 %v4348, %v4391
  %4393 = vmatmul.bf16.gmra.mxu0 %v3453
  %v4394 = vpop.f32.mrf.mxu0
  %v4395 = vadd.f32 %v4351, %v4394
  %v4396 = vpop.f32.mrf.mxu0
  %v4397 = vadd.f32 %v4353, %v4396
  %4398 = vmatmul.bf16.gmra.mxu0 %v3454
  %v4399 = vpop.f32.mrf.mxu0
  %v4400 = vadd.f32 %v4356, %v4399
  %v4401 = vpop.f32.mrf.mxu0
  %v4402 = vadd.f32 %v4358, %v4401
  %4403 = vdwg.mxu0
  %4404 = vmatpush.bf16.msra.mxu0 %v4015
  %4405 = vmatpush.bf16.msra.mxu0 %v4014
  %4406 = vmatpush.bf16.msra.mxu0 %v4013
  %4407 = vmatpush.bf16.msra.mxu0 %v4012
  %4408 = vmatpush.bf16.msra.mxu0 %v4011
  %4409 = vmatpush.bf16.msra.mxu0 %v4010
  %4410 = vmatpush.bf16.msra.mxu0 %v4009
  %4411 = vmatpush.bf16.msra.mxu0 %v4008
  %4412 = vmatmul.bf16.gmra.mxu0 %v3464
  %v4413 = vpop.f32.mrf.mxu0
  %v4414 = vadd.f32 %v4370, %v4413
  %v4415 = vpop.f32.mrf.mxu0
  %v4416 = vadd.f32 %v4372, %v4415
  %4417 = vmatmul.bf16.gmra.mxu0 %v3465
  %v4418 = vpop.f32.mrf.mxu0
  %v4419 = vadd.f32 %v4375, %v4418
  %v4420 = vpop.f32.mrf.mxu0
  %v4421 = vadd.f32 %v4377, %v4420
  %4422 = vmatmul.bf16.gmra.mxu0 %v3466
  %v4423 = vpop.f32.mrf.mxu0
  %v4424 = vadd.f32 %v4380, %v4423
  %v4425 = vpop.f32.mrf.mxu0
  %v4426 = vadd.f32 %v4382, %v4425
  %4427 = vmatmul.bf16.gmra.mxu0 %v3467
  %v4428 = vpop.f32.mrf.mxu0
  %v4429 = vadd.f32 %v4385, %v4428
  %v4430 = vpop.f32.mrf.mxu0
  %v4431 = vadd.f32 %v4387, %v4430
  %4432 = vmatmul.bf16.gmra.mxu0 %v3468
  %v4433 = vpop.f32.mrf.mxu0
  %v4434 = vadd.f32 %v4390, %v4433
  %v4435 = vpop.f32.mrf.mxu0
  %v4436 = vadd.f32 %v4392, %v4435
  %4437 = vmatmul.bf16.gmra.mxu0 %v3469
  %v4438 = vpop.f32.mrf.mxu0
  %v4439 = vadd.f32 %v4395, %v4438
  %v4440 = vpop.f32.mrf.mxu0
  %v4441 = vadd.f32 %v4397, %v4440
  %4442 = vmatmul.bf16.gmra.mxu0 %v3470
  %v4443 = vpop.f32.mrf.mxu0
  %v4444 = vadd.f32 %v4400, %v4443
  %v4445 = vpop.f32.mrf.mxu0
  %v4446 = vadd.f32 %v4402, %v4445
  %4447 = vdwg.mxu0
  %4448 = vmatpush.bf16.msra.mxu0 %v4023
  %4449 = vmatpush.bf16.msra.mxu0 %v4022
  %4450 = vmatpush.bf16.msra.mxu0 %v4021
  %4451 = vmatpush.bf16.msra.mxu0 %v4020
  %4452 = vmatpush.bf16.msra.mxu0 %v4019
  %4453 = vmatpush.bf16.msra.mxu0 %v4018
  %4454 = vmatpush.bf16.msra.mxu0 %v4017
  %4455 = vmatpush.bf16.msra.mxu0 %v4016
  %4456 = vmatmul.bf16.gmra.mxu0 %v3506
  %v4457 = vpop.f32.mrf.mxu0
  %v4458 = vadd.f32 %v4414, %v4457
  %v4459 = vpop.f32.mrf.mxu0
  %v4460 = vadd.f32 %v4416, %v4459
  %4461 = vmatmul.bf16.gmra.mxu0 %v3507
  %v4462 = vpop.f32.mrf.mxu0
  %v4463 = vadd.f32 %v4419, %v4462
  %v4464 = vpop.f32.mrf.mxu0
  %v4465 = vadd.f32 %v4421, %v4464
  %4466 = vmatmul.bf16.gmra.mxu0 %v3508
  %v4467 = vpop.f32.mrf.mxu0
  %v4468 = vadd.f32 %v4424, %v4467
  %v4469 = vpop.f32.mrf.mxu0
  %v4470 = vadd.f32 %v4426, %v4469
  %4471 = vmatmul.bf16.gmra.mxu0 %v3509
  %v4472 = vpop.f32.mrf.mxu0
  %v4473 = vadd.f32 %v4429, %v4472
  %v4474 = vpop.f32.mrf.mxu0
  %v4475 = vadd.f32 %v4431, %v4474
  %4476 = vmatmul.bf16.gmra.mxu0 %v3510
  %v4477 = vpop.f32.mrf.mxu0
  %v4478 = vadd.f32 %v4434, %v4477
  %v4479 = vpop.f32.mrf.mxu0
  %v4480 = vadd.f32 %v4436, %v4479
  %4481 = vmatmul.bf16.gmra.mxu0 %v3511
  %v4482 = vpop.f32.mrf.mxu0
  %v4483 = vadd.f32 %v4439, %v4482
  %v4484 = vpop.f32.mrf.mxu0
  %v4485 = vadd.f32 %v4441, %v4484
  %4486 = vmatmul.bf16.gmra.mxu0 %v3512
  %v4487 = vpop.f32.mrf.mxu0
  %v4488 = vadd.f32 %v4444, %v4487
  %v4489 = vpop.f32.mrf.mxu0
  %v4490 = vadd.f32 %v4446, %v4489
  %4491 = vdwg.mxu0
  %v4492 = vld [vmem:[%s5] sm:$0xff]
  %v4493 = vld [vmem:[%s5 + $0x8] sm:$0xff]
  %v4494 = vld [vmem:[%s5 + $0x10] sm:$0xff]
  %v4495 = vld [vmem:[%s5 + $0x18] sm:$0xff]
  %v4496 = vld [vmem:[%s5 + $0x20] sm:$0xff]
  %v4497 = vld [vmem:[%s5 + $0x28] sm:$0xff]
  %v4498 = vld [vmem:[%s5 + $0x30] sm:$0xff]
  %v4499 = vld [vmem:[%s5 + $0x38] sm:$0xff]
  %v4500 = vld [vmem:[%s5 + $0x40] sm:$0xff]
  %v4501 = vld [vmem:[%s5 + $0x48] sm:$0xff]
  %v4502 = vld [vmem:[%s5 + $0x50] sm:$0xff]
  %v4503 = vld [vmem:[%s5 + $0x58] sm:$0xff]
  %v4504 = vld [vmem:[%s5 + $0x60] sm:$0xff]
  %v4505 = vld [vmem:[%s5 + $0x68] sm:$0xff]
  %4507 = vset.pattern.permute.xlu0 1
  %4508 = vperm.xlu0 %4507, %v4492
  %v4509 = vpop.permute.xlu0 %4508
  %4512 = vset.pattern.permute.xlu0 1
  %4513 = vperm.xlu0 %4512, %v4493
  %v4514 = vpop.permute.xlu0 %4513
  %4517 = vset.pattern.permute.xlu0 1
  %4518 = vperm.xlu0 %4517, %v4494
  %v4519 = vpop.permute.xlu0 %4518
  %4522 = vset.pattern.permute.xlu0 1
  %4523 = vperm.xlu0 %4522, %v4495
  %v4524 = vpop.permute.xlu0 %4523
  %4527 = vset.pattern.permute.xlu0 1
  %4528 = vperm.xlu0 %4527, %v4496
  %v4529 = vpop.permute.xlu0 %4528
  %4532 = vset.pattern.permute.xlu0 1
  %4533 = vperm.xlu0 %4532, %v4497
  %v4534 = vpop.permute.xlu0 %4533
  %4537 = vset.pattern.permute.xlu0 1
  %4538 = vperm.xlu0 %4537, %v4498
  %v4539 = vpop.permute.xlu0 %4538
  %4542 = vset.pattern.permute.xlu0 1
  %4543 = vperm.xlu0 %4542, %v4499
  %v4544 = vpop.permute.xlu0 %4543
  %4547 = vset.pattern.permute.xlu0 1
  %4548 = vperm.xlu0 %4547, %v4500
  %v4549 = vpop.permute.xlu0 %4548
  %4552 = vset.pattern.permute.xlu0 1
  %4553 = vperm.xlu0 %4552, %v4501
  %v4554 = vpop.permute.xlu0 %4553
  %4557 = vset.pattern.permute.xlu0 1
  %4558 = vperm.xlu0 %4557, %v4502
  %v4559 = vpop.permute.xlu0 %4558
  %4562 = vset.pattern.permute.xlu0 1
  %4563 = vperm.xlu0 %4562, %v4503
  %v4564 = vpop.permute.xlu0 %4563
  %4567 = vset.pattern.permute.xlu0 1
  %4568 = vperm.xlu0 %4567, %v4504
  %v4569 = vpop.permute.xlu0 %4568
  %4572 = vset.pattern.permute.xlu0 1
  %4573 = vperm.xlu0 %4572, %v4505
  %v4574 = vpop.permute.xlu0 %4573
  %v4576 = vmul.f32 %v4458, %v4509
  %v4577 = vmul.f32 %v4460, %v4514
  %v4578 = vmul.f32 %v4463, %v4519
  %v4579 = vmul.f32 %v4465, %v4524
  %v4580 = vmul.f32 %v4468, %v4529
  %v4581 = vmul.f32 %v4470, %v4534
  %v4582 = vmul.f32 %v4473, %v4539
  %v4583 = vmul.f32 %v4475, %v4544
  %v4584 = vmul.f32 %v4478, %v4549
  %v4585 = vmul.f32 %v4480, %v4554
  %v4586 = vmul.f32 %v4483, %v4559
  %v4587 = vmul.f32 %v4485, %v4564
  %v4588 = vmul.f32 %v4488, %v4569
  %v4589 = vmul.f32 %v4490, %v4574
  %v4590 = vld [vmem:[%s4 + $0x4] sm:$0x1]
  %v4591 = vld [vmem:[%s4 + $0x5] sm:$0x1]
  %v4592 = vadd.f32 %v4576, %v4577
  %v4593 = vadd.f32 %v4592, %v4578
  %v4594 = vadd.f32 %v4593, %v4579
  %v4595 = vadd.f32 %v4594, %v4580
  %v4596 = vadd.f32 %v4595, %v4581
  %v4597 = vadd.f32 %v4596, %v4582
  %v4598 = vadd.f32 %v4597, %v4583
  %v4599 = vadd.f32 %v4598, %v4584
  %v4600 = vadd.f32 %v4599, %v4585
  %v4601 = vadd.f32 %v4600, %v4586
  %v4602 = vadd.f32 %v4601, %v4587
  %v4603 = vadd.f32 %v4602, %v4588
  %v4604 = vadd.f32 %v4603, %v4589
  %v4605 = vrot.slane %v4604, 4
  %v4606 = vadd.f32 %v4604, %v4605
  %v4607 = vrot.slane %v4606, 2
  %v4608 = vadd.f32 %v4606, %v4607
  %v4609 = vrot.slane %v4608, 1
  %v4610 = vadd.f32 %v4608, %v4609
  %v4611 = vmul.f32 %v4576, %v4576
  %v4612 = vmul.f32 %v4577, %v4577
  %v4613 = vmul.f32 %v4578, %v4578
  %v4614 = vmul.f32 %v4579, %v4579
  %v4615 = vmul.f32 %v4580, %v4580
  %v4616 = vmul.f32 %v4581, %v4581
  %v4617 = vmul.f32 %v4582, %v4582
  %v4618 = vmul.f32 %v4583, %v4583
  %v4619 = vmul.f32 %v4584, %v4584
  %v4620 = vmul.f32 %v4585, %v4585
  %v4621 = vmul.f32 %v4586, %v4586
  %v4622 = vmul.f32 %v4587, %v4587
  %v4623 = vmul.f32 %v4588, %v4588
  %v4624 = vmul.f32 %v4589, %v4589
  %v4625 = vadd.f32 %v4611, %v4612
  %v4626 = vadd.f32 %v4625, %v4613
  %v4627 = vadd.f32 %v4626, %v4614
  %v4628 = vadd.f32 %v4627, %v4615
  %v4629 = vadd.f32 %v4628, %v4616
  %v4630 = vadd.f32 %v4629, %v4617
  %v4631 = vadd.f32 %v4630, %v4618
  %v4632 = vadd.f32 %v4631, %v4619
  %v4633 = vadd.f32 %v4632, %v4620
  %v4634 = vadd.f32 %v4633, %v4621
  %v4635 = vadd.f32 %v4634, %v4622
  %v4636 = vadd.f32 %v4635, %v4623
  %v4637 = vadd.f32 %v4636, %v4624
  %v4638 = vrot.slane %v4637, 4
  %v4639 = vadd.f32 %v4637, %v4638
  %v4640 = vrot.slane %v4639, 2
  %v4641 = vadd.f32 %v4639, %v4640
  %v4642 = vrot.slane %v4641, 1
  %v4643 = vadd.f32 %v4641, %v4642
  %v4644 = vmul.f32 %v4610, 0.055555556
  %v4645 = vmul.f32 %v4643, 0.055555556
  %v4646 = vmul.f32 %v4644, %v4644
  %v4647 = vsub.f32 %v4645, %v4646
  %v4648 = vadd.f32 %v4647, 1e-05
  %v4649 = vrsqrt.pop %v4648
  %v4650 = vmul.f32 %v4649, %v4648
  %v4651 = vmul.f32 %v4650, %v4649
  %v4652 = vmul.f32 0.5, %v4651
  %v4653 = vsub.f32 1.5, %v4652
  %v4654 = vmul.f32 %v4649, %v4653
  %vm4655 = vweird.f32 %v4648
  %vm4656 = vweird.f32 %v4649
  %vm4657 = vmor %vm4655, %vm4656
  %v4658 = vsel %vm4657, %v4649, %v4654
  %v4659 = vmul.f32 %v4590, %v4658
  %v4660 = vmul.f32 %v4644, %v4659
  %v4661 = vsub.f32 %v4591, %v4660
  %v4662 = vperm.slane %v4659, 0
  %v4663 = vmul.f32 %v4576, %v4662
  %v4664 = vmul.f32 %v4577, %v4662
  %v4665 = vmul.f32 %v4578, %v4662
  %v4666 = vmul.f32 %v4579, %v4662
  %v4667 = vmul.f32 %v4580, %v4662
  %v4668 = vmul.f32 %v4581, %v4662
  %v4669 = vmul.f32 %v4582, %v4662
  %v4670 = vmul.f32 %v4583, %v4662
  %v4671 = vmul.f32 %v4584, %v4662
  %v4672 = vmul.f32 %v4585, %v4662
  %v4673 = vmul.f32 %v4586, %v4662
  %v4674 = vmul.f32 %v4587, %v4662
  %v4675 = vmul.f32 %v4588, %v4662
  %v4676 = vmul.f32 %v4589, %v4662
  %v4677 = vperm.slane %v4661, 0
  %v4678 = vadd.f32 %v4663, %v4677
  %v4679 = vadd.f32 %v4664, %v4677
  %v4680 = vadd.f32 %v4665, %v4677
  %v4681 = vadd.f32 %v4666, %v4677
  %v4682 = vadd.f32 %v4667, %v4677
  %v4683 = vadd.f32 %v4668, %v4677
  %v4684 = vadd.f32 %v4669, %v4677
  %v4685 = vadd.f32 %v4670, %v4677
  %v4686 = vadd.f32 %v4671, %v4677
  %v4687 = vadd.f32 %v4672, %v4677
  %v4688 = vadd.f32 %v4673, %v4677
  %v4689 = vadd.f32 %v4674, %v4677
  %v4690 = vadd.f32 %v4675, %v4677
  %v4691 = vadd.f32 %v4676, %v4677
  %vm4692 = vcmp.gt.f32.partialorder %v4678, 0.0
  %vm4693 = vcmp.gt.f32.partialorder %v4679, 0.0
  %vm4694 = vcmp.gt.f32.partialorder %v4680, 0.0
  %vm4695 = vcmp.gt.f32.partialorder %v4681, 0.0
  %vm4696 = vcmp.gt.f32.partialorder %v4682, 0.0
  %vm4697 = vcmp.gt.f32.partialorder %v4683, 0.0
  %vm4698 = vcmp.gt.f32.partialorder %v4684, 0.0
  %vm4699 = vcmp.gt.f32.partialorder %v4685, 0.0
  %vm4700 = vcmp.gt.f32.partialorder %v4686, 0.0
  %vm4701 = vcmp.gt.f32.partialorder %v4687, 0.0
  %vm4702 = vcmp.gt.f32.partialorder %v4688, 0.0
  %vm4703 = vcmp.gt.f32.partialorder %v4689, 0.0
  %vm4704 = vcmp.gt.f32.partialorder %v4690, 0.0
  %vm4705 = vcmp.gt.f32.partialorder %v4691, 0.0
  %v4706 = vmul.f32 %v4678, 0.1
  %v4707 = vmul.f32 %v4679, 0.1
  %v4708 = vmul.f32 %v4680, 0.1
  %v4709 = vmul.f32 %v4681, 0.1
  %v4710 = vmul.f32 %v4682, 0.1
  %v4711 = vmul.f32 %v4683, 0.1
  %v4712 = vmul.f32 %v4684, 0.1
  %v4713 = vmul.f32 %v4685, 0.1
  %v4714 = vmul.f32 %v4686, 0.1
  %v4715 = vmul.f32 %v4687, 0.1
  %v4716 = vmul.f32 %v4688, 0.1
  %v4717 = vmul.f32 %v4689, 0.1
  %v4718 = vmul.f32 %v4690, 0.1
  %v4719 = vmul.f32 %v4691, 0.1
  %v4720 = vsel %vm4692, %v4678, %v4706
  %v4721 = vsel %vm4693, %v4679, %v4707
  %v4722 = vsel %vm4694, %v4680, %v4708
  %v4723 = vsel %vm4695, %v4681, %v4709
  %v4724 = vsel %vm4696, %v4682, %v4710
  %v4725 = vsel %vm4697, %v4683, %v4711
  %v4726 = vsel %vm4698, %v4684, %v4712
  %v4727 = vsel %vm4699, %v4685, %v4713
  %v4728 = vsel %vm4700, %v4686, %v4714
  %v4729 = vsel %vm4701, %v4687, %v4715
  %v4730 = vsel %vm4702, %v4688, %v4716
  %v4731 = vsel %vm4703, %v4689, %v4717
  %v4732 = vsel %vm4704, %v4690, %v4718
  %v4733 = vsel %vm4705, %v4691, %v4719
  %v4734 = vld [vmem:[%s4 + $0x6] sm:$0x1]
  %v4735 = vld [vmem:[%s4 + $0x7] sm:$0x1]
  %v4736 = vperm.slane %v4734, 0
  %v4737 = vmul.f32 %v4720, %v4736
  %v4738 = vmul.f32 %v4721, %v4736
  %v4739 = vmul.f32 %v4722, %v4736
  %v4740 = vmul.f32 %v4723, %v4736
  %v4741 = vmul.f32 %v4724, %v4736
  %v4742 = vmul.f32 %v4725, %v4736
  %v4743 = vmul.f32 %v4726, %v4736
  %v4744 = vmul.f32 %v4727, %v4736
  %v4745 = vmul.f32 %v4728, %v4736
  %v4746 = vmul.f32 %v4729, %v4736
  %v4747 = vmul.f32 %v4730, %v4736
  %v4748 = vmul.f32 %v4731, %v4736
  %v4749 = vmul.f32 %v4732, %v4736
  %v4750 = vmul.f32 %v4733, %v4736
  %4751 = vadd.xlane.f32.xlu0 %v4737
  %v4752 = vpop.xlane.xlu0 %4751
  %4753 = vadd.xlane.f32.xlu0 %v4738
  %v4754 = vpop.xlane.xlu0 %4753
  %4755 = vadd.xlane.f32.xlu0 %v4739
  %v4756 = vpop.xlane.xlu0 %4755
  %4757 = vadd.xlane.f32.xlu0 %v4740
  %v4758 = vpop.xlane.xlu0 %4757
  %4759 = vadd.xlane.f32.xlu0 %v4741
  %v4760 = vpop.xlane.xlu0 %4759
  %4761 = vadd.xlane.f32.xlu0 %v4742
  %v4762 = vpop.xlane.xlu0 %4761
  %4763 = vadd.xlane.f32.xlu0 %v4743
  %v4764 = vpop.xlane.xlu0 %4763
  %4765 = vadd.xlane.f32.xlu0 %v4744
  %v4766 = vpop.xlane.xlu0 %4765
  %4767 = vadd.xlane.f32.xlu0 %v4745
  %v4768 = vpop.xlane.xlu0 %4767
  %4769 = vadd.xlane.f32.xlu0 %v4746
  %v4770 = vpop.xlane.xlu0 %4769
  %4771 = vadd.xlane.f32.xlu0 %v4747
  %v4772 = vpop.xlane.xlu0 %4771
  %4773 = vadd.xlane.f32.xlu0 %v4748
  %v4774 = vpop.xlane.xlu0 %4773
  %4775 = vadd.xlane.f32.xlu0 %v4749
  %v4776 = vpop.xlane.xlu0 %4775
  %4777 = vadd.xlane.f32.xlu0 %v4750
  %v4778 = vpop.xlane.xlu0 %4777
  %v4779 = vperm.slane %v4735, 0
  %v4780 = vadd.f32 %v4752, %v4779
  %v4781 = vadd.f32 %v4754, %v4779
  %v4782 = vadd.f32 %v4756, %v4779
  %v4783 = vadd.f32 %v4758, %v4779
  %v4784 = vadd.f32 %v4760, %v4779
  %v4785 = vadd.f32 %v4762, %v4779
  %v4786 = vadd.f32 %v4764, %v4779
  %v4787 = vadd.f32 %v4766, %v4779
  %v4788 = vadd.f32 %v4768, %v4779
  %v4789 = vadd.f32 %v4770, %v4779
  %v4790 = vadd.f32 %v4772, %v4779
  %v4791 = vadd.f32 %v4774, %v4779
  %v4792 = vadd.f32 %v4776, %v4779
  %v4793 = vadd.f32 %v4778, %v4779
  %vm4794 = vcmask 7168
  %4795 = vst.msk [vmem:[%s6] sm:$0xff] %vm4794, %v4780
  %4796 = vst.msk [vmem:[%s6 + $0x8] sm:$0xff] %vm4794, %v4781
  %4797 = vst.msk [vmem:[%s6 + $0x10] sm:$0xff] %vm4794, %v4782
  %4798 = vst.msk [vmem:[%s6 + $0x18] sm:$0xff] %vm4794, %v4783
  %4799 = vst.msk [vmem:[%s6 + $0x20] sm:$0xff] %vm4794, %v4784
  %4800 = vst.msk [vmem:[%s6 + $0x28] sm:$0xff] %vm4794, %v4785
  %4801 = vst.msk [vmem:[%s6 + $0x30] sm:$0xff] %vm4794, %v4786
  %4802 = vst.msk [vmem:[%s6 + $0x38] sm:$0xff] %vm4794, %v4787
  %4803 = vst.msk [vmem:[%s6 + $0x40] sm:$0xff] %vm4794, %v4788
  %4804 = vst.msk [vmem:[%s6 + $0x48] sm:$0xff] %vm4794, %v4789
  %4805 = vst.msk [vmem:[%s6 + $0x50] sm:$0xff] %vm4794, %v4790
  %4806 = vst.msk [vmem:[%s6 + $0x58] sm:$0xff] %vm4794, %v4791
  %4807 = vst.msk [vmem:[%s6 + $0x60] sm:$0xff] %vm4794, %v4792
  %4808 = vst.msk [vmem:[%s6 + $0x68] sm:$0xff] %vm4794, %v4793
  // Predicated region
  $region26: #{tcr_net_forward.1} parent=0 // pred_check
    _
  $region27: #{tcr_net_forward.1} parent=0 // pred_check_branch
    %4810 = sbr.rel (0) target = $region29
  $region28: #{tcr_net_forward.1} parent=0 // pred_region
    _
  $region29: #{tcr_net_forward.1} parent=0 // pred_fallthru
    _
  // Predicated region
  $region30: #{tcr_net_forward.1} parent=0 // pred_check
    _
  $region31: #{tcr_net_forward.1} parent=0 // pred_check_branch
    %4812 = sbr.rel (0) target = $region33
  $region32: #{tcr_net_forward.1} parent=0 // pred_region
    _
  $region33: #{tcr_net_forward.1} parent=0 // pred_fallthru
    _

</llo_original>
